<compile_context>
chip_gen: v6e
topology: v6e:2x2x1
jax: 0.10.0
libtpu: 0.0.40
codegen_flags: <defaults>
</compile_context>

<pallas_src>
import jax
import jax.numpy as jnp
import numpy as np
from jax.experimental import pallas as pl
from jax.experimental.pallas import tpu as pltpu

EPS = 1e-5


def bn_conv_bn_kernel(x_ref, w_ref, g1_ref, b1_ref, g2_ref, b2_ref, o_ref):
    # x_ref : (C_in, L)      w_ref : (C_out, C_in)
    # g1/b1 : (C_in, 1)      g2/b2 : (C_out, 1)
    # o_ref : (C_out, L)
    x = x_ref[...]
    inv_l = 1.0 / x.shape[1]  # static: 1/L, L = N*H*W

    # --- BN1 (training-mode batch stats over L), single-pass, folded to scale/shift ---
    m1 = jnp.sum(x, axis=1, keepdims=True) * inv_l              # (C_in, 1) mean
    e1 = jnp.sum(x * x, axis=1, keepdims=True) * inv_l          # (C_in, 1) E[x^2]
    var1 = e1 - m1 * m1
    scale1 = g1_ref[...] * jax.lax.rsqrt(var1 + EPS)            # (C_in, 1)
    shift1 = b1_ref[...] - m1 * scale1                          # (C_in, 1)
    xs = x * scale1 + shift1                                    # one fused VPU pass

    # --- 1x1 conv == matmul on the MXU, output kept transposed: (C_out, L) ---
    y = jnp.dot(w_ref[...], xs, preferred_element_type=jnp.float32)

    # --- BN2 (training-mode batch stats over L), single-pass ---
    m2 = jnp.sum(y, axis=1, keepdims=True) * inv_l              # (C_out, 1)
    e2 = jnp.sum(y * y, axis=1, keepdims=True) * inv_l
    var2 = e2 - m2 * m2
    scale2 = g2_ref[...] * jax.lax.rsqrt(var2 + EPS)
    shift2 = b2_ref[...] - m2 * scale2
    o_ref[...] = y * scale2 + shift2


def bn_conv_bn(x_nchw, w, g1, b1, g2, b2):
    N, C_in, H, W = x_nchw.shape
    C_out = w.shape[0]
    L = N * H * W

    # For N == 1 (the module's case) the NCHW tensor reshapes for free to (C_in, L);
    # no wrapper-side transpose / extra HBM pass.
    if N == 1:
        x2d = x_nchw.reshape(C_in, L)
    else:
        x2d = jnp.transpose(x_nchw, (1, 0, 2, 3)).reshape(C_in, L)

    w2d = w.reshape(C_out, C_in)           # OIHW 1x1 kernel -> (C_out, C_in), free reshape

    g1c = g1.reshape(C_in, 1)
    b1c = b1.reshape(C_in, 1)
    g2c = g2.reshape(C_out, 1)
    b2c = b2.reshape(C_out, 1)

    out2d = pl.pallas_call(
        bn_conv_bn_kernel,
        out_shape=jax.ShapeDtypeStruct((C_out, L), jnp.float32),
        grid=(1,),
        in_specs=[
            pl.BlockSpec((C_in, L), lambda i: (0, 0)),
            pl.BlockSpec((C_out, C_in), lambda i: (0, 0)),
            pl.BlockSpec((C_in, 1), lambda i: (0, 0)),
            pl.BlockSpec((C_in, 1), lambda i: (0, 0)),
            pl.BlockSpec((C_out, 1), lambda i: (0, 0)),
            pl.BlockSpec((C_out, 1), lambda i: (0, 0)),
        ],
        out_specs=pl.BlockSpec((C_out, L), lambda i: (0, 0)),
        compiler_params=pltpu.CompilerParams(
            dimension_semantics=("arbitrary",)),
    )(x2d, w2d, g1c, b1c, g2c, b2c)

    # (C_out, L) reshapes directly to NCHW for N == 1: no slice, no transpose.
    if N == 1:
        return out2d.reshape(N, C_out, H, W)
    return jnp.transpose(out2d.reshape(C_out, N, H, W), (1, 0, 2, 3))


def reference(x_nchw, w, g1, b1, g2, b2):
    # Pure-JAX reference (training-mode BN, biased variance).
    def bn(x, g, b):
        mean = jnp.mean(x, axis=(0, 2, 3), keepdims=True)
        var = jnp.mean((x - mean) ** 2, axis=(0, 2, 3), keepdims=True)
        xn = (x - mean) * jax.lax.rsqrt(var + EPS)
        return xn * g.reshape(1, -1, 1, 1) + b.reshape(1, -1, 1, 1)

    x = bn(x_nchw, g1, b1)
    y = jax.lax.conv_general_dilated(
        x, w, window_strides=(1, 1), padding="VALID",
        dimension_numbers=("NCHW", "OIHW", "NCHW"))
    return bn(y, g2, b2)


if __name__ == "__main__":
    C_IN, C_OUT = 136, 816          # fixed by the module definition
    N, H, W = 1, 14, 14             # matches the module's example input [1, 136, 14, 14]

    key = jax.random.PRNGKey(0)
    kx, kw, k1, k2, k3, k4 = jax.random.split(key, 6)

    x = jax.random.normal(kx, (N, C_IN, H, W), dtype=jnp.float32)
    conv_w = jax.random.normal(kw, (C_OUT, C_IN, 1, 1), dtype=jnp.float32) * 0.05
    bn1_gamma = 1.0 + 0.1 * jax.random.normal(k1, (C_IN,), dtype=jnp.float32)
    bn1_beta = 0.1 * jax.random.normal(k2, (C_IN,), dtype=jnp.float32)
    bn2_gamma = 1.0 + 0.1 * jax.random.normal(k3, (C_OUT,), dtype=jnp.float32)
    bn2_beta = 0.1 * jax.random.normal(k4, (C_OUT,), dtype=jnp.float32)

    out = bn_conv_bn(x, conv_w, bn1_gamma, bn1_beta, bn2_gamma, bn2_beta)
    out = jax.block_until_ready(out)

    ref = jax.block_until_ready(
        reference(x, conv_w, bn1_gamma, bn1_beta, bn2_gamma, bn2_beta))
    assert out.shape == (N, C_OUT, H, W)
    np.testing.assert_allclose(np.asarray(out), np.asarray(ref), atol=1e-3, rtol=1e-3)

    print("KERNEL_OK")
</pallas_src>

<mosaic_0001>
module attributes {stable_mosaic.version = 11 : i64} {
  func.func @bn_conv_bn_kernel(%arg0: i32, %arg1: memref<136x196xf32, #tpu.memory_space<vmem>>, %arg2: memref<816x136xf32, #tpu.memory_space<vmem>>, %arg3: memref<136x1xf32, #tpu.memory_space<vmem>>, %arg4: memref<136x1xf32, #tpu.memory_space<vmem>>, %arg5: memref<816x1xf32, #tpu.memory_space<vmem>>, %arg6: memref<816x1xf32, #tpu.memory_space<vmem>>, %arg7: memref<816x196xf32, #tpu.memory_space<vmem>>) attributes {dimension_semantics = [#tpu.dimension_semantics<arbitrary>], iteration_bounds = array<i64: 1>, scalar_prefetch = 0 : i64, scratch_operands = 0 : i64, tpu.core_type = #tpu.core_type<tc>, window_params = [{pipeline_mode = #tpu.pipeline_mode<synchronous>, transform_indices = @transform_0, window_bounds = array<i64: 136, 196>}, {pipeline_mode = #tpu.pipeline_mode<synchronous>, transform_indices = @transform_1, window_bounds = array<i64: 816, 136>}, {pipeline_mode = #tpu.pipeline_mode<synchronous>, transform_indices = @transform_2, window_bounds = array<i64: 136, 1>}, {pipeline_mode = #tpu.pipeline_mode<synchronous>, transform_indices = @transform_3, window_bounds = array<i64: 136, 1>}, {pipeline_mode = #tpu.pipeline_mode<synchronous>, transform_indices = @transform_4, window_bounds = array<i64: 816, 1>}, {pipeline_mode = #tpu.pipeline_mode<synchronous>, transform_indices = @transform_5, window_bounds = array<i64: 816, 1>}, {pipeline_mode = #tpu.pipeline_mode<synchronous>, transform_indices = @transform_6, window_bounds = array<i64: 816, 196>}]} {
    %c0 = arith.constant 0 : index
    %c0_0 = arith.constant 0 : index
    %0 = vector.load %arg1[%c0, %c0_0] : memref<136x196xf32, #tpu.memory_space<vmem>>, vector<136x196xf32>
    %cst = arith.constant dense<0.000000e+00> : vector<136xf32>
    %1 = vector.multi_reduction <add>, %0, %cst [1] : vector<136x196xf32> to vector<136xf32>
    %2 = vector.shape_cast %1 : vector<136xf32> to vector<136x1xf32>
    %cst_1 = arith.constant 0.00510204071 : f32
    %3 = vector.broadcast %cst_1 : f32 to vector<136x1xf32>
    %4 = arith.mulf %2, %3 : vector<136x1xf32>
    %5 = arith.mulf %0, %0 : vector<136x196xf32>
    %cst_2 = arith.constant dense<0.000000e+00> : vector<136xf32>
    %6 = vector.multi_reduction <add>, %5, %cst_2 [1] : vector<136x196xf32> to vector<136xf32>
    %7 = vector.shape_cast %6 : vector<136xf32> to vector<136x1xf32>
    %cst_3 = arith.constant 0.00510204071 : f32
    %8 = vector.broadcast %cst_3 : f32 to vector<136x1xf32>
    %9 = arith.mulf %7, %8 : vector<136x1xf32>
    %10 = arith.mulf %4, %4 : vector<136x1xf32>
    %11 = arith.subf %9, %10 : vector<136x1xf32>
    %c0_4 = arith.constant 0 : index
    %c0_5 = arith.constant 0 : index
    %12 = vector.load %arg3[%c0_4, %c0_5] : memref<136x1xf32, #tpu.memory_space<vmem>>, vector<136x1xf32>
    %cst_6 = arith.constant 9.99999974E-6 : f32
    %13 = vector.broadcast %cst_6 : f32 to vector<136x1xf32>
    %14 = arith.addf %11, %13 : vector<136x1xf32>
    %15 = math.rsqrt %14 : vector<136x1xf32>
    %16 = arith.mulf %12, %15 : vector<136x1xf32>
    %c0_7 = arith.constant 0 : index
    %c0_8 = arith.constant 0 : index
    %17 = vector.load %arg4[%c0_7, %c0_8] : memref<136x1xf32, #tpu.memory_space<vmem>>, vector<136x1xf32>
    %18 = arith.mulf %4, %16 : vector<136x1xf32>
    %19 = arith.subf %17, %18 : vector<136x1xf32>
    %20 = vector.broadcast %16 : vector<136x1xf32> to vector<136x196xf32>
    %21 = arith.mulf %0, %20 : vector<136x196xf32>
    %22 = vector.broadcast %19 : vector<136x1xf32> to vector<136x196xf32>
    %23 = arith.addf %21, %22 : vector<136x196xf32>
    %c0_9 = arith.constant 0 : index
    %c0_10 = arith.constant 0 : index
    %24 = vector.load %arg2[%c0_9, %c0_10] : memref<816x136xf32, #tpu.memory_space<vmem>>, vector<816x136xf32>
    %cst_11 = arith.constant dense<0.000000e+00> : vector<816x196xf32>
    %25 = tpu.matmul %24, %23, %cst_11 {dimension_numbers = #tpu.dot_dimension_numbers<[1], [0], [0], [1], [0, 0, 1, 1], [], []>} : vector<816x136xf32>, vector<136x196xf32>, vector<816x196xf32> -> vector<816x196xf32>
    %cst_12 = arith.constant dense<0.000000e+00> : vector<816xf32>
    %26 = vector.multi_reduction <add>, %25, %cst_12 [1] : vector<816x196xf32> to vector<816xf32>
    %27 = vector.shape_cast %26 : vector<816xf32> to vector<816x1xf32>
    %cst_13 = arith.constant 0.00510204071 : f32
    %28 = vector.broadcast %cst_13 : f32 to vector<816x1xf32>
    %29 = arith.mulf %27, %28 : vector<816x1xf32>
    %30 = arith.mulf %25, %25 : vector<816x196xf32>
    %cst_14 = arith.constant dense<0.000000e+00> : vector<816xf32>
    %31 = vector.multi_reduction <add>, %30, %cst_14 [1] : vector<816x196xf32> to vector<816xf32>
    %32 = vector.shape_cast %31 : vector<816xf32> to vector<816x1xf32>
    %cst_15 = arith.constant 0.00510204071 : f32
    %33 = vector.broadcast %cst_15 : f32 to vector<816x1xf32>
    %34 = arith.mulf %32, %33 : vector<816x1xf32>
    %35 = arith.mulf %29, %29 : vector<816x1xf32>
    %36 = arith.subf %34, %35 : vector<816x1xf32>
    %c0_16 = arith.constant 0 : index
    %c0_17 = arith.constant 0 : index
    %37 = vector.load %arg5[%c0_16, %c0_17] : memref<816x1xf32, #tpu.memory_space<vmem>>, vector<816x1xf32>
    %cst_18 = arith.constant 9.99999974E-6 : f32
    %38 = vector.broadcast %cst_18 : f32 to vector<816x1xf32>
    %39 = arith.addf %36, %38 : vector<816x1xf32>
    %40 = math.rsqrt %39 : vector<816x1xf32>
    %41 = arith.mulf %37, %40 : vector<816x1xf32>
    %c0_19 = arith.constant 0 : index
    %c0_20 = arith.constant 0 : index
    %42 = vector.load %arg6[%c0_19, %c0_20] : memref<816x1xf32, #tpu.memory_space<vmem>>, vector<816x1xf32>
    %43 = arith.mulf %29, %41 : vector<816x1xf32>
    %44 = arith.subf %42, %43 : vector<816x1xf32>
    %45 = vector.broadcast %41 : vector<816x1xf32> to vector<816x196xf32>
    %46 = arith.mulf %25, %45 : vector<816x196xf32>
    %47 = vector.broadcast %44 : vector<816x1xf32> to vector<816x196xf32>
    %48 = arith.addf %46, %47 : vector<816x196xf32>
    %c0_21 = arith.constant 0 : index
    %c0_22 = arith.constant 0 : index
    %49 = vector.load %arg7[%c0_21, %c0_22] : memref<816x196xf32, #tpu.memory_space<vmem>>, vector<816x196xf32>
    tpu.vector_store %arg7[%c0_21, %c0_22], %48 {strides = array<i32>} : memref<816x196xf32, #tpu.memory_space<vmem>>, vector<816x196xf32>,
    return
  }
  func.func @transform_0(%arg0: i32) -> (i32, i32) {
    %c0_i32 = arith.constant 0 : i32
    %c0_i32_0 = arith.constant 0 : i32
    %c0_i32_1 = arith.constant 0 : i32
    return %c0_i32, %c0_i32_0 : i32, i32
  }
  func.func @transform_1(%arg0: i32) -> (i32, i32) {
    %c0_i32 = arith.constant 0 : i32
    %c0_i32_0 = arith.constant 0 : i32
    %c0_i32_1 = arith.constant 0 : i32
    return %c0_i32, %c0_i32_0 : i32, i32
  }
  func.func @transform_2(%arg0: i32) -> (i32, i32) {
    %c0_i32 = arith.constant 0 : i32
    %c0_i32_0 = arith.constant 0 : i32
    %c0_i32_1 = arith.constant 0 : i32
    return %c0_i32, %c0_i32_0 : i32, i32
  }
  func.func @transform_3(%arg0: i32) -> (i32, i32) {
    %c0_i32 = arith.constant 0 : i32
    %c0_i32_0 = arith.constant 0 : i32
    %c0_i32_1 = arith.constant 0 : i32
    return %c0_i32, %c0_i32_0 : i32, i32
  }
  func.func @transform_4(%arg0: i32) -> (i32, i32) {
    %c0_i32 = arith.constant 0 : i32
    %c0_i32_0 = arith.constant 0 : i32
    %c0_i32_1 = arith.constant 0 : i32
    return %c0_i32, %c0_i32_0 : i32, i32
  }
  func.func @transform_5(%arg0: i32) -> (i32, i32) {
    %c0_i32 = arith.constant 0 : i32
    %c0_i32_0 = arith.constant 0 : i32
    %c0_i32_1 = arith.constant 0 : i32
    return %c0_i32, %c0_i32_0 : i32, i32
  }
  func.func @transform_6(%arg0: i32) -> (i32, i32) {
    %c0_i32 = arith.constant 0 : i32
    %c0_i32_0 = arith.constant 0 : i32
    %c0_i32_1 = arith.constant 0 : i32
    return %c0_i32, %c0_i32_0 : i32, i32
  }
}

</mosaic_0001>

<llo_original>
// kernel: tpu_custom_call.1
$region0: #{tpu_custom_call.1}
  #allocation0 [shape = 'u32[]', space=smem, size = 0x4, offset = 0x4, fixed_abs, tag = 'smem constant byte address 0x4 - core index']
  #allocation1 [shape = 'u32[144,128]{1,0:T(1,128)}', space=vmem, size = 0x12000, scoped, tag = 'internal scratch']
  %s0 = inlined_call_operand.vmem [shape: f32[136,196], index: 0, kind: input, shape index: {}]
  %s1 = inlined_call_operand.vmem [shape: f32[816,136], index: 1, kind: input, shape index: {}]
  %s2 = inlined_call_operand.vmem [shape: f32[136,1], index: 2, kind: input, shape index: {}]
  %s3 = inlined_call_operand.vmem [shape: f32[136,1], index: 3, kind: input, shape index: {}]
  %s4 = inlined_call_operand.vmem [shape: f32[816,1], index: 4, kind: input, shape index: {}]
  %s5 = inlined_call_operand.vmem [shape: f32[816,1], index: 5, kind: input, shape index: {}]
  %s6 = inlined_call_operand.vmem [shape: f32[816,196], index: 6, kind: output, shape index: {}]
  %s7 = sld [smem:[#allocation0]]
  $region34: #{tpu_custom_call.1} parent=0
    _
  %s9 = ssub.s32 1, %s7
  %s10 = scalar_select 0, %s9, %s7
  // Predicated region
  $region2: #{tpu_custom_call.1} parent=0 // pred_check
    _
  $region3: #{tpu_custom_call.1} parent=0 // pred_check_branch
    %12 = sbr.rel (0) target = $region5
  $region4: #{tpu_custom_call.1} parent=0 // pred_region
    _
  $region5: #{tpu_custom_call.1} parent=0 // pred_fallthru
    _
  // Predicated region
  $region6: #{tpu_custom_call.1} parent=0 // pred_check
    _
  $region7: #{tpu_custom_call.1} parent=0 // pred_check_branch
    %14 = sbr.rel (0) target = $region9
  $region8: #{tpu_custom_call.1} parent=0 // pred_region
    _
  $region9: #{tpu_custom_call.1} parent=0 // pred_fallthru
    _
  // Predicated region
  $region10: #{tpu_custom_call.1} parent=0 // pred_check
    _
  $region11: #{tpu_custom_call.1} parent=0 // pred_check_branch
    %16 = sbr.rel (0) target = $region13
  $region12: #{tpu_custom_call.1} parent=0 // pred_region
    _
  $region13: #{tpu_custom_call.1} parent=0 // pred_fallthru
    _
  // Predicated region
  $region14: #{tpu_custom_call.1} parent=0 // pred_check
    _
  $region15: #{tpu_custom_call.1} parent=0 // pred_check_branch
    %18 = sbr.rel (0) target = $region17
  $region16: #{tpu_custom_call.1} parent=0 // pred_region
    _
  $region17: #{tpu_custom_call.1} parent=0 // pred_fallthru
    _
  // Predicated region
  $region18: #{tpu_custom_call.1} parent=0 // pred_check
    _
  $region19: #{tpu_custom_call.1} parent=0 // pred_check_branch
    %20 = sbr.rel (0) target = $region21
  $region20: #{tpu_custom_call.1} parent=0 // pred_region
    _
  $region21: #{tpu_custom_call.1} parent=0 // pred_fallthru
    _
  // Predicated region
  $region22: #{tpu_custom_call.1} parent=0 // pred_check
    _
  $region23: #{tpu_custom_call.1} parent=0 // pred_check_branch
    %22 = sbr.rel (0) target = $region25
  $region24: #{tpu_custom_call.1} parent=0 // pred_region
    _
  $region25: #{tpu_custom_call.1} parent=0 // pred_fallthru
    _
  %v23 = vld [vmem:[%s0] sm:$0xff]
  %v24 = vld [vmem:[%s0 + $0x8] sm:$0xff]
  %v25 = vld [vmem:[%s0 + $0x10] sm:$0xff]
  %v26 = vld [vmem:[%s0 + $0x18] sm:$0xff]
  %v27 = vld [vmem:[%s0 + $0x20] sm:$0xff]
  %v28 = vld [vmem:[%s0 + $0x28] sm:$0xff]
  %v29 = vld [vmem:[%s0 + $0x30] sm:$0xff]
  %v30 = vld [vmem:[%s0 + $0x38] sm:$0xff]
  %v31 = vld [vmem:[%s0 + $0x40] sm:$0xff]
  %v32 = vld [vmem:[%s0 + $0x48] sm:$0xff]
  %v33 = vld [vmem:[%s0 + $0x50] sm:$0xff]
  %v34 = vld [vmem:[%s0 + $0x58] sm:$0xff]
  %v35 = vld [vmem:[%s0 + $0x60] sm:$0xff]
  %v36 = vld [vmem:[%s0 + $0x68] sm:$0xff]
  %v37 = vld [vmem:[%s0 + $0x70] sm:$0xff]
  %v38 = vld [vmem:[%s0 + $0x78] sm:$0xff]
  %v39 = vld [vmem:[%s0 + $0x80] sm:$0xff]
  %v40 = vld [vmem:[%s0 + $0x88] sm:$0xff]
  %v41 = vld [vmem:[%s0 + $0x90] sm:$0xff]
  %v42 = vld [vmem:[%s0 + $0x98] sm:$0xff]
  %v43 = vld [vmem:[%s0 + $0xa0] sm:$0xff]
  %v44 = vld [vmem:[%s0 + $0xa8] sm:$0xff]
  %v45 = vld [vmem:[%s0 + $0xb0] sm:$0xff]
  %v46 = vld [vmem:[%s0 + $0xb8] sm:$0xff]
  %v47 = vld [vmem:[%s0 + $0xc0] sm:$0xff]
  %v48 = vld [vmem:[%s0 + $0xc8] sm:$0xff]
  %v49 = vld [vmem:[%s0 + $0xd0] sm:$0xff]
  %v50 = vld [vmem:[%s0 + $0xd8] sm:$0xff]
  %v51 = vld [vmem:[%s0 + $0xe0] sm:$0xff]
  %v52 = vld [vmem:[%s0 + $0xe8] sm:$0xff]
  %v53 = vld [vmem:[%s0 + $0xf0] sm:$0xff]
  %v54 = vld [vmem:[%s0 + $0xf8] sm:$0xff]
  %v55 = vld [vmem:[%s0 + $0x100] sm:$0xff]
  %v56 = vld [vmem:[%s0 + $0x108] sm:$0xff]
  %vm57 = vcmask 556032
  %v58 = vsel %vm57, %v24, 0.0
  %v59 = vadd.f32 %v23, %v58
  %60 = vadd.xlane.f32.xlu0 %v59
  %v61 = vpop.xlane.xlu0 %60
  %v62 = vsel %vm57, %v26, 0.0
  %v63 = vadd.f32 %v25, %v62
  %64 = vadd.xlane.f32.xlu0 %v63
  %v65 = vpop.xlane.xlu0 %64
  %v66 = vsel %vm57, %v28, 0.0
  %v67 = vadd.f32 %v27, %v66
  %68 = vadd.xlane.f32.xlu0 %v67
  %v69 = vpop.xlane.xlu0 %68
  %v70 = vsel %vm57, %v30, 0.0
  %v71 = vadd.f32 %v29, %v70
  %72 = vadd.xlane.f32.xlu0 %v71
  %v73 = vpop.xlane.xlu0 %72
  %v74 = vsel %vm57, %v32, 0.0
  %v75 = vadd.f32 %v31, %v74
  %76 = vadd.xlane.f32.xlu0 %v75
  %v77 = vpop.xlane.xlu0 %76
  %v78 = vsel %vm57, %v34, 0.0
  %v79 = vadd.f32 %v33, %v78
  %80 = vadd.xlane.f32.xlu0 %v79
  %v81 = vpop.xlane.xlu0 %80
  %v82 = vsel %vm57, %v36, 0.0
  %v83 = vadd.f32 %v35, %v82
  %84 = vadd.xlane.f32.xlu0 %v83
  %v85 = vpop.xlane.xlu0 %84
  %v86 = vsel %vm57, %v38, 0.0
  %v87 = vadd.f32 %v37, %v86
  %88 = vadd.xlane.f32.xlu0 %v87
  %v89 = vpop.xlane.xlu0 %88
  %v90 = vsel %vm57, %v40, 0.0
  %v91 = vadd.f32 %v39, %v90
  %92 = vadd.xlane.f32.xlu0 %v91
  %v93 = vpop.xlane.xlu0 %92
  %v94 = vsel %vm57, %v42, 0.0
  %v95 = vadd.f32 %v41, %v94
  %96 = vadd.xlane.f32.xlu0 %v95
  %v97 = vpop.xlane.xlu0 %96
  %v98 = vsel %vm57, %v44, 0.0
  %v99 = vadd.f32 %v43, %v98
  %100 = vadd.xlane.f32.xlu0 %v99
  %v101 = vpop.xlane.xlu0 %100
  %v102 = vsel %vm57, %v46, 0.0
  %v103 = vadd.f32 %v45, %v102
  %104 = vadd.xlane.f32.xlu0 %v103
  %v105 = vpop.xlane.xlu0 %104
  %v106 = vsel %vm57, %v48, 0.0
  %v107 = vadd.f32 %v47, %v106
  %108 = vadd.xlane.f32.xlu0 %v107
  %v109 = vpop.xlane.xlu0 %108
  %v110 = vsel %vm57, %v50, 0.0
  %v111 = vadd.f32 %v49, %v110
  %112 = vadd.xlane.f32.xlu0 %v111
  %v113 = vpop.xlane.xlu0 %112
  %v114 = vsel %vm57, %v52, 0.0
  %v115 = vadd.f32 %v51, %v114
  %116 = vadd.xlane.f32.xlu0 %v115
  %v117 = vpop.xlane.xlu0 %116
  %v118 = vsel %vm57, %v54, 0.0
  %v119 = vadd.f32 %v53, %v118
  %120 = vadd.xlane.f32.xlu0 %v119
  %v121 = vpop.xlane.xlu0 %120
  %v122 = vsel %vm57, %v56, 0.0
  %v123 = vadd.f32 %v55, %v122
  %124 = vadd.xlane.f32.xlu0 %v123
  %v125 = vpop.xlane.xlu0 %124
  %v126 = vmul.f32 %v61, 0.0051020407
  %v127 = vmul.f32 %v65, 0.0051020407
  %v128 = vmul.f32 %v69, 0.0051020407
  %v129 = vmul.f32 %v73, 0.0051020407
  %v130 = vmul.f32 %v77, 0.0051020407
  %v131 = vmul.f32 %v81, 0.0051020407
  %v132 = vmul.f32 %v85, 0.0051020407
  %v133 = vmul.f32 %v89, 0.0051020407
  %v134 = vmul.f32 %v93, 0.0051020407
  %v135 = vmul.f32 %v97, 0.0051020407
  %v136 = vmul.f32 %v101, 0.0051020407
  %v137 = vmul.f32 %v105, 0.0051020407
  %v138 = vmul.f32 %v109, 0.0051020407
  %v139 = vmul.f32 %v113, 0.0051020407
  %v140 = vmul.f32 %v117, 0.0051020407
  %v141 = vmul.f32 %v121, 0.0051020407
  %v142 = vmul.f32 %v125, 0.0051020407
  %v143 = vmul.f32 %v23, %v23
  %v144 = vmul.f32 %v24, %v24
  %v145 = vmul.f32 %v25, %v25
  %v146 = vmul.f32 %v26, %v26
  %v147 = vmul.f32 %v27, %v27
  %v148 = vmul.f32 %v28, %v28
  %v149 = vmul.f32 %v29, %v29
  %v150 = vmul.f32 %v30, %v30
  %v151 = vmul.f32 %v31, %v31
  %v152 = vmul.f32 %v32, %v32
  %v153 = vmul.f32 %v33, %v33
  %v154 = vmul.f32 %v34, %v34
  %v155 = vmul.f32 %v35, %v35
  %v156 = vmul.f32 %v36, %v36
  %v157 = vmul.f32 %v37, %v37
  %v158 = vmul.f32 %v38, %v38
  %v159 = vmul.f32 %v39, %v39
  %v160 = vmul.f32 %v40, %v40
  %v161 = vmul.f32 %v41, %v41
  %v162 = vmul.f32 %v42, %v42
  %v163 = vmul.f32 %v43, %v43
  %v164 = vmul.f32 %v44, %v44
  %v165 = vmul.f32 %v45, %v45
  %v166 = vmul.f32 %v46, %v46
  %v167 = vmul.f32 %v47, %v47
  %v168 = vmul.f32 %v48, %v48
  %v169 = vmul.f32 %v49, %v49
  %v170 = vmul.f32 %v50, %v50
  %v171 = vmul.f32 %v51, %v51
  %v172 = vmul.f32 %v52, %v52
  %v173 = vmul.f32 %v53, %v53
  %v174 = vmul.f32 %v54, %v54
  %v175 = vmul.f32 %v55, %v55
  %v176 = vmul.f32 %v56, %v56
  %v177 = vsel %vm57, %v144, 0.0
  %v178 = vadd.f32 %v143, %v177
  %179 = vadd.xlane.f32.xlu0 %v178
  %v180 = vpop.xlane.xlu0 %179
  %v181 = vsel %vm57, %v146, 0.0
  %v182 = vadd.f32 %v145, %v181
  %183 = vadd.xlane.f32.xlu0 %v182
  %v184 = vpop.xlane.xlu0 %183
  %v185 = vsel %vm57, %v148, 0.0
  %v186 = vadd.f32 %v147, %v185
  %187 = vadd.xlane.f32.xlu0 %v186
  %v188 = vpop.xlane.xlu0 %187
  %v189 = vsel %vm57, %v150, 0.0
  %v190 = vadd.f32 %v149, %v189
  %191 = vadd.xlane.f32.xlu0 %v190
  %v192 = vpop.xlane.xlu0 %191
  %v193 = vsel %vm57, %v152, 0.0
  %v194 = vadd.f32 %v151, %v193
  %195 = vadd.xlane.f32.xlu0 %v194
  %v196 = vpop.xlane.xlu0 %195
  %v197 = vsel %vm57, %v154, 0.0
  %v198 = vadd.f32 %v153, %v197
  %199 = vadd.xlane.f32.xlu0 %v198
  %v200 = vpop.xlane.xlu0 %199
  %v201 = vsel %vm57, %v156, 0.0
  %v202 = vadd.f32 %v155, %v201
  %203 = vadd.xlane.f32.xlu0 %v202
  %v204 = vpop.xlane.xlu0 %203
  %v205 = vsel %vm57, %v158, 0.0
  %v206 = vadd.f32 %v157, %v205
  %207 = vadd.xlane.f32.xlu0 %v206
  %v208 = vpop.xlane.xlu0 %207
  %v209 = vsel %vm57, %v160, 0.0
  %v210 = vadd.f32 %v159, %v209
  %211 = vadd.xlane.f32.xlu0 %v210
  %v212 = vpop.xlane.xlu0 %211
  %v213 = vsel %vm57, %v162, 0.0
  %v214 = vadd.f32 %v161, %v213
  %215 = vadd.xlane.f32.xlu0 %v214
  %v216 = vpop.xlane.xlu0 %215
  %v217 = vsel %vm57, %v164, 0.0
  %v218 = vadd.f32 %v163, %v217
  %219 = vadd.xlane.f32.xlu0 %v218
  %v220 = vpop.xlane.xlu0 %219
  %v221 = vsel %vm57, %v166, 0.0
  %v222 = vadd.f32 %v165, %v221
  %223 = vadd.xlane.f32.xlu0 %v222
  %v224 = vpop.xlane.xlu0 %223
  %v225 = vsel %vm57, %v168, 0.0
  %v226 = vadd.f32 %v167, %v225
  %227 = vadd.xlane.f32.xlu0 %v226
  %v228 = vpop.xlane.xlu0 %227
  %v229 = vsel %vm57, %v170, 0.0
  %v230 = vadd.f32 %v169, %v229
  %231 = vadd.xlane.f32.xlu0 %v230
  %v232 = vpop.xlane.xlu0 %231
  %v233 = vsel %vm57, %v172, 0.0
  %v234 = vadd.f32 %v171, %v233
  %235 = vadd.xlane.f32.xlu0 %v234
  %v236 = vpop.xlane.xlu0 %235
  %v237 = vsel %vm57, %v174, 0.0
  %v238 = vadd.f32 %v173, %v237
  %239 = vadd.xlane.f32.xlu0 %v238
  %v240 = vpop.xlane.xlu0 %239
  %v241 = vsel %vm57, %v176, 0.0
  %v242 = vadd.f32 %v175, %v241
  %243 = vadd.xlane.f32.xlu0 %v242
  %v244 = vpop.xlane.xlu0 %243
  %v245 = vmul.f32 %v180, 0.0051020407
  %v246 = vmul.f32 %v184, 0.0051020407
  %v247 = vmul.f32 %v188, 0.0051020407
  %v248 = vmul.f32 %v192, 0.0051020407
  %v249 = vmul.f32 %v196, 0.0051020407
  %v250 = vmul.f32 %v200, 0.0051020407
  %v251 = vmul.f32 %v204, 0.0051020407
  %v252 = vmul.f32 %v208, 0.0051020407
  %v253 = vmul.f32 %v212, 0.0051020407
  %v254 = vmul.f32 %v216, 0.0051020407
  %v255 = vmul.f32 %v220, 0.0051020407
  %v256 = vmul.f32 %v224, 0.0051020407
  %v257 = vmul.f32 %v228, 0.0051020407
  %v258 = vmul.f32 %v232, 0.0051020407
  %v259 = vmul.f32 %v236, 0.0051020407
  %v260 = vmul.f32 %v240, 0.0051020407
  %v261 = vmul.f32 %v244, 0.0051020407
  %v262 = vmul.f32 %v126, %v126
  %v263 = vmul.f32 %v127, %v127
  %v264 = vmul.f32 %v128, %v128
  %v265 = vmul.f32 %v129, %v129
  %v266 = vmul.f32 %v130, %v130
  %v267 = vmul.f32 %v131, %v131
  %v268 = vmul.f32 %v132, %v132
  %v269 = vmul.f32 %v133, %v133
  %v270 = vmul.f32 %v134, %v134
  %v271 = vmul.f32 %v135, %v135
  %v272 = vmul.f32 %v136, %v136
  %v273 = vmul.f32 %v137, %v137
  %v274 = vmul.f32 %v138, %v138
  %v275 = vmul.f32 %v139, %v139
  %v276 = vmul.f32 %v140, %v140
  %v277 = vmul.f32 %v141, %v141
  %v278 = vmul.f32 %v142, %v142
  %v279 = vsub.f32 %v245, %v262
  %v280 = vsub.f32 %v246, %v263
  %v281 = vsub.f32 %v247, %v264
  %v282 = vsub.f32 %v248, %v265
  %v283 = vsub.f32 %v249, %v266
  %v284 = vsub.f32 %v250, %v267
  %v285 = vsub.f32 %v251, %v268
  %v286 = vsub.f32 %v252, %v269
  %v287 = vsub.f32 %v253, %v270
  %v288 = vsub.f32 %v254, %v271
  %v289 = vsub.f32 %v255, %v272
  %v290 = vsub.f32 %v256, %v273
  %v291 = vsub.f32 %v257, %v274
  %v292 = vsub.f32 %v258, %v275
  %v293 = vsub.f32 %v259, %v276
  %v294 = vsub.f32 %v260, %v277
  %v295 = vsub.f32 %v261, %v278
  %v296 = vld [vmem:[%s2] sm:$0xff]
  %v297 = vld [vmem:[%s2 + $0x8] sm:$0xff]
  %v298 = vld [vmem:[%s2 + $0x10] sm:$0xff]
  %v299 = vld [vmem:[%s2 + $0x18] sm:$0xff]
  %v300 = vld [vmem:[%s2 + $0x20] sm:$0xff]
  %v301 = vld [vmem:[%s2 + $0x28] sm:$0xff]
  %v302 = vld [vmem:[%s2 + $0x30] sm:$0xff]
  %v303 = vld [vmem:[%s2 + $0x38] sm:$0xff]
  %v304 = vld [vmem:[%s2 + $0x40] sm:$0xff]
  %v305 = vld [vmem:[%s2 + $0x48] sm:$0xff]
  %v306 = vld [vmem:[%s2 + $0x50] sm:$0xff]
  %v307 = vld [vmem:[%s2 + $0x58] sm:$0xff]
  %v308 = vld [vmem:[%s2 + $0x60] sm:$0xff]
  %v309 = vld [vmem:[%s2 + $0x68] sm:$0xff]
  %v310 = vld [vmem:[%s2 + $0x70] sm:$0xff]
  %v311 = vld [vmem:[%s2 + $0x78] sm:$0xff]
  %v312 = vld [vmem:[%s2 + $0x80] sm:$0xff]
  %v313 = vadd.f32 %v279, 1e-05
  %v314 = vadd.f32 %v280, 1e-05
  %v315 = vadd.f32 %v281, 1e-05
  %v316 = vadd.f32 %v282, 1e-05
  %v317 = vadd.f32 %v283, 1e-05
  %v318 = vadd.f32 %v284, 1e-05
  %v319 = vadd.f32 %v285, 1e-05
  %v320 = vadd.f32 %v286, 1e-05
  %v321 = vadd.f32 %v287, 1e-05
  %v322 = vadd.f32 %v288, 1e-05
  %v323 = vadd.f32 %v289, 1e-05
  %v324 = vadd.f32 %v290, 1e-05
  %v325 = vadd.f32 %v291, 1e-05
  %v326 = vadd.f32 %v292, 1e-05
  %v327 = vadd.f32 %v293, 1e-05
  %v328 = vadd.f32 %v294, 1e-05
  %v329 = vadd.f32 %v295, 1e-05
  %v330 = vrsqrt.pop %v313
  %v331 = vrsqrt.pop %v314
  %v332 = vrsqrt.pop %v315
  %v333 = vrsqrt.pop %v316
  %v334 = vrsqrt.pop %v317
  %v335 = vrsqrt.pop %v318
  %v336 = vrsqrt.pop %v319
  %v337 = vrsqrt.pop %v320
  %v338 = vrsqrt.pop %v321
  %v339 = vrsqrt.pop %v322
  %v340 = vrsqrt.pop %v323
  %v341 = vrsqrt.pop %v324
  %v342 = vrsqrt.pop %v325
  %v343 = vrsqrt.pop %v326
  %v344 = vrsqrt.pop %v327
  %v345 = vrsqrt.pop %v328
  %v346 = vrsqrt.pop %v329
  %v347 = vmul.f32 %v296, %v330
  %v348 = vmul.f32 %v297, %v331
  %v349 = vmul.f32 %v298, %v332
  %v350 = vmul.f32 %v299, %v333
  %v351 = vmul.f32 %v300, %v334
  %v352 = vmul.f32 %v301, %v335
  %v353 = vmul.f32 %v302, %v336
  %v354 = vmul.f32 %v303, %v337
  %v355 = vmul.f32 %v304, %v338
  %v356 = vmul.f32 %v305, %v339
  %v357 = vmul.f32 %v306, %v340
  %v358 = vmul.f32 %v307, %v341
  %v359 = vmul.f32 %v308, %v342
  %v360 = vmul.f32 %v309, %v343
  %v361 = vmul.f32 %v310, %v344
  %v362 = vmul.f32 %v311, %v345
  %v363 = vmul.f32 %v312, %v346
  %v364 = vld [vmem:[%s3] sm:$0xff]
  %v365 = vld [vmem:[%s3 + $0x8] sm:$0xff]
  %v366 = vld [vmem:[%s3 + $0x10] sm:$0xff]
  %v367 = vld [vmem:[%s3 + $0x18] sm:$0xff]
  %v368 = vld [vmem:[%s3 + $0x20] sm:$0xff]
  %v369 = vld [vmem:[%s3 + $0x28] sm:$0xff]
  %v370 = vld [vmem:[%s3 + $0x30] sm:$0xff]
  %v371 = vld [vmem:[%s3 + $0x38] sm:$0xff]
  %v372 = vld [vmem:[%s3 + $0x40] sm:$0xff]
  %v373 = vld [vmem:[%s3 + $0x48] sm:$0xff]
  %v374 = vld [vmem:[%s3 + $0x50] sm:$0xff]
  %v375 = vld [vmem:[%s3 + $0x58] sm:$0xff]
  %v376 = vld [vmem:[%s3 + $0x60] sm:$0xff]
  %v377 = vld [vmem:[%s3 + $0x68] sm:$0xff]
  %v378 = vld [vmem:[%s3 + $0x70] sm:$0xff]
  %v379 = vld [vmem:[%s3 + $0x78] sm:$0xff]
  %v380 = vld [vmem:[%s3 + $0x80] sm:$0xff]
  %v381 = vmul.f32 %v126, %v347
  %v382 = vmul.f32 %v127, %v348
  %v383 = vmul.f32 %v128, %v349
  %v384 = vmul.f32 %v129, %v350
  %v385 = vmul.f32 %v130, %v351
  %v386 = vmul.f32 %v131, %v352
  %v387 = vmul.f32 %v132, %v353
  %v388 = vmul.f32 %v133, %v354
  %v389 = vmul.f32 %v134, %v355
  %v390 = vmul.f32 %v135, %v356
  %v391 = vmul.f32 %v136, %v357
  %v392 = vmul.f32 %v137, %v358
  %v393 = vmul.f32 %v138, %v359
  %v394 = vmul.f32 %v139, %v360
  %v395 = vmul.f32 %v140, %v361
  %v396 = vmul.f32 %v141, %v362
  %v397 = vmul.f32 %v142, %v363
  %v398 = vsub.f32 %v364, %v381
  %v399 = vsub.f32 %v365, %v382
  %v400 = vsub.f32 %v366, %v383
  %v401 = vsub.f32 %v367, %v384
  %v402 = vsub.f32 %v368, %v385
  %v403 = vsub.f32 %v369, %v386
  %v404 = vsub.f32 %v370, %v387
  %v405 = vsub.f32 %v371, %v388
  %v406 = vsub.f32 %v372, %v389
  %v407 = vsub.f32 %v373, %v390
  %v408 = vsub.f32 %v374, %v391
  %v409 = vsub.f32 %v375, %v392
  %v410 = vsub.f32 %v376, %v393
  %v411 = vsub.f32 %v377, %v394
  %v412 = vsub.f32 %v378, %v395
  %v413 = vsub.f32 %v379, %v396
  %v414 = vsub.f32 %v380, %v397
  %416 = vset.pattern.permute.xlu0 0
  %417 = vperm.xlu0 %416, %v347
  %v418 = vpop.permute.xlu0 %417
  %421 = vset.pattern.permute.xlu0 0
  %422 = vperm.xlu0 %421, %v348
  %v423 = vpop.permute.xlu0 %422
  %426 = vset.pattern.permute.xlu0 0
  %427 = vperm.xlu0 %426, %v349
  %v428 = vpop.permute.xlu0 %427
  %431 = vset.pattern.permute.xlu0 0
  %432 = vperm.xlu0 %431, %v350
  %v433 = vpop.permute.xlu0 %432
  %436 = vset.pattern.permute.xlu0 0
  %437 = vperm.xlu0 %436, %v351
  %v438 = vpop.permute.xlu0 %437
  %441 = vset.pattern.permute.xlu0 0
  %442 = vperm.xlu0 %441, %v352
  %v443 = vpop.permute.xlu0 %442
  %446 = vset.pattern.permute.xlu0 0
  %447 = vperm.xlu0 %446, %v353
  %v448 = vpop.permute.xlu0 %447
  %451 = vset.pattern.permute.xlu0 0
  %452 = vperm.xlu0 %451, %v354
  %v453 = vpop.permute.xlu0 %452
  %456 = vset.pattern.permute.xlu0 0
  %457 = vperm.xlu0 %456, %v355
  %v458 = vpop.permute.xlu0 %457
  %461 = vset.pattern.permute.xlu0 0
  %462 = vperm.xlu0 %461, %v356
  %v463 = vpop.permute.xlu0 %462
  %466 = vset.pattern.permute.xlu0 0
  %467 = vperm.xlu0 %466, %v357
  %v468 = vpop.permute.xlu0 %467
  %471 = vset.pattern.permute.xlu0 0
  %472 = vperm.xlu0 %471, %v358
  %v473 = vpop.permute.xlu0 %472
  %476 = vset.pattern.permute.xlu0 0
  %477 = vperm.xlu0 %476, %v359
  %v478 = vpop.permute.xlu0 %477
  %481 = vset.pattern.permute.xlu0 0
  %482 = vperm.xlu0 %481, %v360
  %v483 = vpop.permute.xlu0 %482
  %486 = vset.pattern.permute.xlu0 0
  %487 = vperm.xlu0 %486, %v361
  %v488 = vpop.permute.xlu0 %487
  %491 = vset.pattern.permute.xlu0 0
  %492 = vperm.xlu0 %491, %v362
  %v493 = vpop.permute.xlu0 %492
  %496 = vset.pattern.permute.xlu0 0
  %497 = vperm.xlu0 %496, %v363
  %v498 = vpop.permute.xlu0 %497
  %v500 = vmul.f32 %v23, %v418
  %v501 = vmul.f32 %v24, %v418
  %v502 = vmul.f32 %v25, %v423
  %v503 = vmul.f32 %v26, %v423
  %v504 = vmul.f32 %v27, %v428
  %v505 = vmul.f32 %v28, %v428
  %v506 = vmul.f32 %v29, %v433
  %v507 = vmul.f32 %v30, %v433
  %v508 = vmul.f32 %v31, %v438
  %v509 = vmul.f32 %v32, %v438
  %v510 = vmul.f32 %v33, %v443
  %v511 = vmul.f32 %v34, %v443
  %v512 = vmul.f32 %v35, %v448
  %v513 = vmul.f32 %v36, %v448
  %v514 = vmul.f32 %v37, %v453
  %v515 = vmul.f32 %v38, %v453
  %v516 = vmul.f32 %v39, %v458
  %v517 = vmul.f32 %v40, %v458
  %v518 = vmul.f32 %v41, %v463
  %v519 = vmul.f32 %v42, %v463
  %v520 = vmul.f32 %v43, %v468
  %v521 = vmul.f32 %v44, %v468
  %v522 = vmul.f32 %v45, %v473
  %v523 = vmul.f32 %v46, %v473
  %v524 = vmul.f32 %v47, %v478
  %v525 = vmul.f32 %v48, %v478
  %v526 = vmul.f32 %v49, %v483
  %v527 = vmul.f32 %v50, %v483
  %v528 = vmul.f32 %v51, %v488
  %v529 = vmul.f32 %v52, %v488
  %v530 = vmul.f32 %v53, %v493
  %v531 = vmul.f32 %v54, %v493
  %v532 = vmul.f32 %v55, %v498
  %v533 = vmul.f32 %v56, %v498
  %535 = vset.pattern.permute.xlu0 0
  %536 = vperm.xlu0 %535, %v398
  %v537 = vpop.permute.xlu0 %536
  %540 = vset.pattern.permute.xlu0 0
  %541 = vperm.xlu0 %540, %v399
  %v542 = vpop.permute.xlu0 %541
  %545 = vset.pattern.permute.xlu0 0
  %546 = vperm.xlu0 %545, %v400
  %v547 = vpop.permute.xlu0 %546
  %550 = vset.pattern.permute.xlu0 0
  %551 = vperm.xlu0 %550, %v401
  %v552 = vpop.permute.xlu0 %551
  %555 = vset.pattern.permute.xlu0 0
  %556 = vperm.xlu0 %555, %v402
  %v557 = vpop.permute.xlu0 %556
  %560 = vset.pattern.permute.xlu0 0
  %561 = vperm.xlu0 %560, %v403
  %v562 = vpop.permute.xlu0 %561
  %565 = vset.pattern.permute.xlu0 0
  %566 = vperm.xlu0 %565, %v404
  %v567 = vpop.permute.xlu0 %566
  %570 = vset.pattern.permute.xlu0 0
  %571 = vperm.xlu0 %570, %v405
  %v572 = vpop.permute.xlu0 %571
  %575 = vset.pattern.permute.xlu0 0
  %576 = vperm.xlu0 %575, %v406
  %v577 = vpop.permute.xlu0 %576
  %580 = vset.pattern.permute.xlu0 0
  %581 = vperm.xlu0 %580, %v407
  %v582 = vpop.permute.xlu0 %581
  %585 = vset.pattern.permute.xlu0 0
  %586 = vperm.xlu0 %585, %v408
  %v587 = vpop.permute.xlu0 %586
  %590 = vset.pattern.permute.xlu0 0
  %591 = vperm.xlu0 %590, %v409
  %v592 = vpop.permute.xlu0 %591
  %595 = vset.pattern.permute.xlu0 0
  %596 = vperm.xlu0 %595, %v410
  %v597 = vpop.permute.xlu0 %596
  %600 = vset.pattern.permute.xlu0 0
  %601 = vperm.xlu0 %600, %v411
  %v602 = vpop.permute.xlu0 %601
  %605 = vset.pattern.permute.xlu0 0
  %606 = vperm.xlu0 %605, %v412
  %v607 = vpop.permute.xlu0 %606
  %610 = vset.pattern.permute.xlu0 0
  %611 = vperm.xlu0 %610, %v413
  %v612 = vpop.permute.xlu0 %611
  %615 = vset.pattern.permute.xlu0 0
  %616 = vperm.xlu0 %615, %v414
  %v617 = vpop.permute.xlu0 %616
  %v619 = vadd.f32 %v500, %v537
  %v620 = vadd.f32 %v501, %v537
  %v621 = vadd.f32 %v502, %v542
  %v622 = vadd.f32 %v503, %v542
  %v623 = vadd.f32 %v504, %v547
  %v624 = vadd.f32 %v505, %v547
  %v625 = vadd.f32 %v506, %v552
  %v626 = vadd.f32 %v507, %v552
  %v627 = vadd.f32 %v508, %v557
  %v628 = vadd.f32 %v509, %v557
  %v629 = vadd.f32 %v510, %v562
  %v630 = vadd.f32 %v511, %v562
  %v631 = vadd.f32 %v512, %v567
  %v632 = vadd.f32 %v513, %v567
  %v633 = vadd.f32 %v514, %v572
  %v634 = vadd.f32 %v515, %v572
  %v635 = vadd.f32 %v516, %v577
  %v636 = vadd.f32 %v517, %v577
  %v637 = vadd.f32 %v518, %v582
  %v638 = vadd.f32 %v519, %v582
  %v639 = vadd.f32 %v520, %v587
  %v640 = vadd.f32 %v521, %v587
  %v641 = vadd.f32 %v522, %v592
  %v642 = vadd.f32 %v523, %v592
  %v643 = vadd.f32 %v524, %v597
  %v644 = vadd.f32 %v525, %v597
  %v645 = vadd.f32 %v526, %v602
  %v646 = vadd.f32 %v527, %v602
  %v647 = vadd.f32 %v528, %v607
  %v648 = vadd.f32 %v529, %v607
  %v649 = vadd.f32 %v530, %v612
  %v650 = vadd.f32 %v531, %v612
  %v651 = vadd.f32 %v532, %v617
  %v652 = vadd.f32 %v533, %v617
  %v653 = vld [vmem:[%s1] sm:$0xff]
  %v654 = vld [vmem:[%s1 + $0x8] sm:$0xff]
  %v655 = vld [vmem:[%s1 + $0x10] sm:$0xff]
  %v656 = vld [vmem:[%s1 + $0x18] sm:$0xff]
  %v657 = vld [vmem:[%s1 + $0x20] sm:$0xff]
  %v658 = vld [vmem:[%s1 + $0x28] sm:$0xff]
  %v659 = vld [vmem:[%s1 + $0x30] sm:$0xff]
  %v660 = vld [vmem:[%s1 + $0x38] sm:$0xff]
  %v661 = vld [vmem:[%s1 + $0x40] sm:$0xff]
  %v662 = vld [vmem:[%s1 + $0x48] sm:$0xff]
  %v663 = vld [vmem:[%s1 + $0x50] sm:$0xff]
  %v664 = vld [vmem:[%s1 + $0x58] sm:$0xff]
  %v665 = vld [vmem:[%s1 + $0x60] sm:$0xff]
  %v666 = vld [vmem:[%s1 + $0x68] sm:$0xff]
  %v667 = vld [vmem:[%s1 + $0x70] sm:$0xff]
  %v668 = vld [vmem:[%s1 + $0x78] sm:$0xff]
  %v669 = vld [vmem:[%s1 + $0x80] sm:$0xff]
  %v670 = vld [vmem:[%s1 + $0x88] sm:$0xff]
  %v671 = vld [vmem:[%s1 + $0x90] sm:$0xff]
  %v672 = vld [vmem:[%s1 + $0x98] sm:$0xff]
  %v673 = vld [vmem:[%s1 + $0xa0] sm:$0xff]
  %v674 = vld [vmem:[%s1 + $0xa8] sm:$0xff]
  %v675 = vld [vmem:[%s1 + $0xb0] sm:$0xff]
  %v676 = vld [vmem:[%s1 + $0xb8] sm:$0xff]
  %v677 = vld [vmem:[%s1 + $0xc0] sm:$0xff]
  %v678 = vld [vmem:[%s1 + $0xc8] sm:$0xff]
  %v679 = vld [vmem:[%s1 + $0xd0] sm:$0xff]
  %v680 = vld [vmem:[%s1 + $0xd8] sm:$0xff]
  %v681 = vld [vmem:[%s1 + $0xe0] sm:$0xff]
  %v682 = vld [vmem:[%s1 + $0xe8] sm:$0xff]
  %v683 = vld [vmem:[%s1 + $0xf0] sm:$0xff]
  %v684 = vld [vmem:[%s1 + $0xf8] sm:$0xff]
  %v685 = vld [vmem:[%s1 + $0x100] sm:$0xff]
  %v686 = vld [vmem:[%s1 + $0x108] sm:$0xff]
  %v687 = vld [vmem:[%s1 + $0x110] sm:$0xff]
  %v688 = vld [vmem:[%s1 + $0x118] sm:$0xff]
  %v689 = vld [vmem:[%s1 + $0x120] sm:$0xff]
  %v690 = vld [vmem:[%s1 + $0x128] sm:$0xff]
  %v691 = vld [vmem:[%s1 + $0x130] sm:$0xff]
  %v692 = vld [vmem:[%s1 + $0x138] sm:$0xff]
  %v693 = vld [vmem:[%s1 + $0x140] sm:$0xff]
  %v694 = vld [vmem:[%s1 + $0x148] sm:$0xff]
  %v695 = vld [vmem:[%s1 + $0x150] sm:$0xff]
  %v696 = vld [vmem:[%s1 + $0x158] sm:$0xff]
  %v697 = vld [vmem:[%s1 + $0x160] sm:$0xff]
  %v698 = vld [vmem:[%s1 + $0x168] sm:$0xff]
  %v699 = vld [vmem:[%s1 + $0x170] sm:$0xff]
  %v700 = vld [vmem:[%s1 + $0x178] sm:$0xff]
  %v701 = vld [vmem:[%s1 + $0x180] sm:$0xff]
  %v702 = vld [vmem:[%s1 + $0x188] sm:$0xff]
  %v703 = vld [vmem:[%s1 + $0x190] sm:$0xff]
  %v704 = vld [vmem:[%s1 + $0x198] sm:$0xff]
  %v705 = vld [vmem:[%s1 + $0x1a0] sm:$0xff]
  %v706 = vld [vmem:[%s1 + $0x1a8] sm:$0xff]
  %v707 = vld [vmem:[%s1 + $0x1b0] sm:$0xff]
  %v708 = vld [vmem:[%s1 + $0x1b8] sm:$0xff]
  %v709 = vld [vmem:[%s1 + $0x1c0] sm:$0xff]
  %v710 = vld [vmem:[%s1 + $0x1c8] sm:$0xff]
  %v711 = vld [vmem:[%s1 + $0x1d0] sm:$0xff]
  %v712 = vld [vmem:[%s1 + $0x1d8] sm:$0xff]
  %v713 = vld [vmem:[%s1 + $0x1e0] sm:$0xff]
  %v714 = vld [vmem:[%s1 + $0x1e8] sm:$0xff]
  %v715 = vld [vmem:[%s1 + $0x1f0] sm:$0xff]
  %v716 = vld [vmem:[%s1 + $0x1f8] sm:$0xff]
  %v717 = vld [vmem:[%s1 + $0x200] sm:$0xff]
  %v718 = vld [vmem:[%s1 + $0x208] sm:$0xff]
  %v719 = vld [vmem:[%s1 + $0x210] sm:$0xff]
  %v720 = vld [vmem:[%s1 + $0x218] sm:$0xff]
  %v721 = vld [vmem:[%s1 + $0x220] sm:$0xff]
  %v722 = vld [vmem:[%s1 + $0x228] sm:$0xff]
  %v723 = vld [vmem:[%s1 + $0x230] sm:$0xff]
  %v724 = vld [vmem:[%s1 + $0x238] sm:$0xff]
  %v725 = vld [vmem:[%s1 + $0x240] sm:$0xff]
  %v726 = vld [vmem:[%s1 + $0x248] sm:$0xff]
  %v727 = vld [vmem:[%s1 + $0x250] sm:$0xff]
  %v728 = vld [vmem:[%s1 + $0x258] sm:$0xff]
  %v729 = vld [vmem:[%s1 + $0x260] sm:$0xff]
  %v730 = vld [vmem:[%s1 + $0x268] sm:$0xff]
  %v731 = vld [vmem:[%s1 + $0x270] sm:$0xff]
  %v732 = vld [vmem:[%s1 + $0x278] sm:$0xff]
  %v733 = vld [vmem:[%s1 + $0x280] sm:$0xff]
  %v734 = vld [vmem:[%s1 + $0x288] sm:$0xff]
  %v735 = vld [vmem:[%s1 + $0x290] sm:$0xff]
  %v736 = vld [vmem:[%s1 + $0x298] sm:$0xff]
  %v737 = vld [vmem:[%s1 + $0x2a0] sm:$0xff]
  %v738 = vld [vmem:[%s1 + $0x2a8] sm:$0xff]
  %v739 = vld [vmem:[%s1 + $0x2b0] sm:$0xff]
  %v740 = vld [vmem:[%s1 + $0x2b8] sm:$0xff]
  %v741 = vld [vmem:[%s1 + $0x2c0] sm:$0xff]
  %v742 = vld [vmem:[%s1 + $0x2c8] sm:$0xff]
  %v743 = vld [vmem:[%s1 + $0x2d0] sm:$0xff]
  %v744 = vld [vmem:[%s1 + $0x2d8] sm:$0xff]
  %v745 = vld [vmem:[%s1 + $0x2e0] sm:$0xff]
  %v746 = vld [vmem:[%s1 + $0x2e8] sm:$0xff]
  %v747 = vld [vmem:[%s1 + $0x2f0] sm:$0xff]
  %v748 = vld [vmem:[%s1 + $0x2f8] sm:$0xff]
  %v749 = vld [vmem:[%s1 + $0x300] sm:$0xff]
  %v750 = vld [vmem:[%s1 + $0x308] sm:$0xff]
  %v751 = vld [vmem:[%s1 + $0x310] sm:$0xff]
  %v752 = vld [vmem:[%s1 + $0x318] sm:$0xff]
  %v753 = vld [vmem:[%s1 + $0x320] sm:$0xff]
  %v754 = vld [vmem:[%s1 + $0x328] sm:$0xff]
  %v755 = vld [vmem:[%s1 + $0x330] sm:$0xff]
  %v756 = vld [vmem:[%s1 + $0x338] sm:$0xff]
  %v757 = vld [vmem:[%s1 + $0x340] sm:$0xff]
  %v758 = vld [vmem:[%s1 + $0x348] sm:$0xff]
  %v759 = vld [vmem:[%s1 + $0x350] sm:$0xff]
  %v760 = vld [vmem:[%s1 + $0x358] sm:$0xff]
  %v761 = vld [vmem:[%s1 + $0x360] sm:$0xff]
  %v762 = vld [vmem:[%s1 + $0x368] sm:$0xff]
  %v763 = vld [vmem:[%s1 + $0x370] sm:$0xff]
  %v764 = vld [vmem:[%s1 + $0x378] sm:$0xff]
  %v765 = vld [vmem:[%s1 + $0x380] sm:$0xff]
  %v766 = vld [vmem:[%s1 + $0x388] sm:$0xff]
  %v767 = vld [vmem:[%s1 + $0x390] sm:$0xff]
  %v768 = vld [vmem:[%s1 + $0x398] sm:$0xff]
  %v769 = vld [vmem:[%s1 + $0x3a0] sm:$0xff]
  %v770 = vld [vmem:[%s1 + $0x3a8] sm:$0xff]
  %v771 = vld [vmem:[%s1 + $0x3b0] sm:$0xff]
  %v772 = vld [vmem:[%s1 + $0x3b8] sm:$0xff]
  %v773 = vld [vmem:[%s1 + $0x3c0] sm:$0xff]
  %v774 = vld [vmem:[%s1 + $0x3c8] sm:$0xff]
  %v775 = vld [vmem:[%s1 + $0x3d0] sm:$0xff]
  %v776 = vld [vmem:[%s1 + $0x3d8] sm:$0xff]
  %v777 = vld [vmem:[%s1 + $0x3e0] sm:$0xff]
  %v778 = vld [vmem:[%s1 + $0x3e8] sm:$0xff]
  %v779 = vld [vmem:[%s1 + $0x3f0] sm:$0xff]
  %v780 = vld [vmem:[%s1 + $0x3f8] sm:$0xff]
  %v781 = vld [vmem:[%s1 + $0x400] sm:$0xff]
  %v782 = vld [vmem:[%s1 + $0x408] sm:$0xff]
  %v783 = vld [vmem:[%s1 + $0x410] sm:$0xff]
  %v784 = vld [vmem:[%s1 + $0x418] sm:$0xff]
  %v785 = vld [vmem:[%s1 + $0x420] sm:$0xff]
  %v786 = vld [vmem:[%s1 + $0x428] sm:$0xff]
  %v787 = vld [vmem:[%s1 + $0x430] sm:$0xff]
  %v788 = vld [vmem:[%s1 + $0x438] sm:$0xff]
  %v789 = vld [vmem:[%s1 + $0x440] sm:$0xff]
  %v790 = vld [vmem:[%s1 + $0x448] sm:$0xff]
  %v791 = vld [vmem:[%s1 + $0x450] sm:$0xff]
  %v792 = vld [vmem:[%s1 + $0x458] sm:$0xff]
  %v793 = vld [vmem:[%s1 + $0x460] sm:$0xff]
  %v794 = vld [vmem:[%s1 + $0x468] sm:$0xff]
  %v795 = vld [vmem:[%s1 + $0x470] sm:$0xff]
  %v796 = vld [vmem:[%s1 + $0x478] sm:$0xff]
  %v797 = vld [vmem:[%s1 + $0x480] sm:$0xff]
  %v798 = vld [vmem:[%s1 + $0x488] sm:$0xff]
  %v799 = vld [vmem:[%s1 + $0x490] sm:$0xff]
  %v800 = vld [vmem:[%s1 + $0x498] sm:$0xff]
  %v801 = vld [vmem:[%s1 + $0x4a0] sm:$0xff]
  %v802 = vld [vmem:[%s1 + $0x4a8] sm:$0xff]
  %v803 = vld [vmem:[%s1 + $0x4b0] sm:$0xff]
  %v804 = vld [vmem:[%s1 + $0x4b8] sm:$0xff]
  %v805 = vld [vmem:[%s1 + $0x4c0] sm:$0xff]
  %v806 = vld [vmem:[%s1 + $0x4c8] sm:$0xff]
  %v807 = vld [vmem:[%s1 + $0x4d0] sm:$0xff]
  %v808 = vld [vmem:[%s1 + $0x4d8] sm:$0xff]
  %v809 = vld [vmem:[%s1 + $0x4e0] sm:$0xff]
  %v810 = vld [vmem:[%s1 + $0x4e8] sm:$0xff]
  %v811 = vld [vmem:[%s1 + $0x4f0] sm:$0xff]
  %v812 = vld [vmem:[%s1 + $0x4f8] sm:$0xff]
  %v813 = vld [vmem:[%s1 + $0x500] sm:$0xff]
  %v814 = vld [vmem:[%s1 + $0x508] sm:$0xff]
  %v815 = vld [vmem:[%s1 + $0x510] sm:$0xff]
  %v816 = vld [vmem:[%s1 + $0x518] sm:$0xff]
  %v817 = vld [vmem:[%s1 + $0x520] sm:$0xff]
  %v818 = vld [vmem:[%s1 + $0x528] sm:$0xff]
  %v819 = vld [vmem:[%s1 + $0x530] sm:$0xff]
  %v820 = vld [vmem:[%s1 + $0x538] sm:$0xff]
  %v821 = vld [vmem:[%s1 + $0x540] sm:$0xff]
  %v822 = vld [vmem:[%s1 + $0x548] sm:$0xff]
  %v823 = vld [vmem:[%s1 + $0x550] sm:$0xff]
  %v824 = vld [vmem:[%s1 + $0x558] sm:$0xff]
  %v825 = vld [vmem:[%s1 + $0x560] sm:$0xff]
  %v826 = vld [vmem:[%s1 + $0x568] sm:$0xff]
  %v827 = vld [vmem:[%s1 + $0x570] sm:$0xff]
  %v828 = vld [vmem:[%s1 + $0x578] sm:$0xff]
  %v829 = vld [vmem:[%s1 + $0x580] sm:$0xff]
  %v830 = vld [vmem:[%s1 + $0x588] sm:$0xff]
  %v831 = vld [vmem:[%s1 + $0x590] sm:$0xff]
  %v832 = vld [vmem:[%s1 + $0x598] sm:$0xff]
  %v833 = vld [vmem:[%s1 + $0x5a0] sm:$0xff]
  %v834 = vld [vmem:[%s1 + $0x5a8] sm:$0xff]
  %v835 = vld [vmem:[%s1 + $0x5b0] sm:$0xff]
  %v836 = vld [vmem:[%s1 + $0x5b8] sm:$0xff]
  %v837 = vld [vmem:[%s1 + $0x5c0] sm:$0xff]
  %v838 = vld [vmem:[%s1 + $0x5c8] sm:$0xff]
  %v839 = vld [vmem:[%s1 + $0x5d0] sm:$0xff]
  %v840 = vld [vmem:[%s1 + $0x5d8] sm:$0xff]
  %v841 = vld [vmem:[%s1 + $0x5e0] sm:$0xff]
  %v842 = vld [vmem:[%s1 + $0x5e8] sm:$0xff]
  %v843 = vld [vmem:[%s1 + $0x5f0] sm:$0xff]
  %v844 = vld [vmem:[%s1 + $0x5f8] sm:$0xff]
  %v845 = vld [vmem:[%s1 + $0x600] sm:$0xff]
  %v846 = vld [vmem:[%s1 + $0x608] sm:$0xff]
  %v847 = vld [vmem:[%s1 + $0x610] sm:$0xff]
  %v848 = vld [vmem:[%s1 + $0x618] sm:$0xff]
  %v849 = vld [vmem:[%s1 + $0x620] sm:$0xff]
  %v850 = vld [vmem:[%s1 + $0x628] sm:$0xff]
  %v851 = vld [vmem:[%s1 + $0x630] sm:$0xff]
  %v852 = vld [vmem:[%s1 + $0x638] sm:$0xff]
  %v853 = vld [vmem:[%s1 + $0x640] sm:$0xff]
  %v854 = vld [vmem:[%s1 + $0x648] sm:$0xff]
  %v855 = vld [vmem:[%s1 + $0x650] sm:$0xff]
  %v856 = vld [vmem:[%s1 + $0x658] sm:$0xff]
  %vm857 = vcmask 64512
  %v859 = vsel %vm857, %v654, 0
  %v862 = vsel %vm857, %v656, 0
  %v865 = vsel %vm857, %v658, 0
  %v868 = vsel %vm857, %v660, 0
  %v871 = vsel %vm857, %v662, 0
  %v874 = vsel %vm857, %v664, 0
  %v877 = vsel %vm857, %v666, 0
  %v880 = vsel %vm857, %v668, 0
  %v883 = vsel %vm857, %v670, 0
  %v886 = vsel %vm857, %v672, 0
  %v889 = vsel %vm857, %v674, 0
  %v892 = vsel %vm857, %v676, 0
  %v895 = vsel %vm857, %v678, 0
  %v898 = vsel %vm857, %v680, 0
  %v901 = vsel %vm857, %v682, 0
  %v904 = vsel %vm857, %v684, 0
  %v907 = vsel %vm857, %v686, 0
  %v910 = vsel %vm857, %v688, 0
  %v913 = vsel %vm857, %v690, 0
  %v916 = vsel %vm857, %v692, 0
  %v919 = vsel %vm857, %v694, 0
  %v922 = vsel %vm857, %v696, 0
  %v925 = vsel %vm857, %v698, 0
  %v928 = vsel %vm857, %v700, 0
  %v931 = vsel %vm857, %v702, 0
  %v934 = vsel %vm857, %v704, 0
  %v937 = vsel %vm857, %v706, 0
  %v940 = vsel %vm857, %v708, 0
  %v943 = vsel %vm857, %v710, 0
  %v946 = vsel %vm857, %v712, 0
  %v949 = vsel %vm857, %v714, 0
  %v952 = vsel %vm857, %v716, 0
  %v955 = vsel %vm857, %v718, 0
  %v958 = vsel %vm857, %v720, 0
  %v961 = vsel %vm857, %v722, 0
  %v964 = vsel %vm857, %v724, 0
  %v967 = vsel %vm857, %v726, 0
  %v970 = vsel %vm857, %v728, 0
  %v973 = vsel %vm857, %v730, 0
  %v976 = vsel %vm857, %v732, 0
  %v979 = vsel %vm857, %v734, 0
  %v982 = vsel %vm857, %v736, 0
  %v985 = vsel %vm857, %v738, 0
  %v988 = vsel %vm857, %v740, 0
  %v991 = vsel %vm857, %v742, 0
  %v994 = vsel %vm857, %v744, 0
  %v997 = vsel %vm857, %v746, 0
  %v1000 = vsel %vm857, %v748, 0
  %v1003 = vsel %vm857, %v750, 0
  %v1006 = vsel %vm857, %v752, 0
  %v1009 = vsel %vm857, %v754, 0
  %v1012 = vsel %vm857, %v756, 0
  %v1015 = vsel %vm857, %v758, 0
  %v1018 = vsel %vm857, %v760, 0
  %v1021 = vsel %vm857, %v762, 0
  %v1024 = vsel %vm857, %v764, 0
  %v1027 = vsel %vm857, %v766, 0
  %v1030 = vsel %vm857, %v768, 0
  %v1033 = vsel %vm857, %v770, 0
  %v1036 = vsel %vm857, %v772, 0
  %v1039 = vsel %vm857, %v774, 0
  %v1042 = vsel %vm857, %v776, 0
  %v1045 = vsel %vm857, %v778, 0
  %v1048 = vsel %vm857, %v780, 0
  %v1051 = vsel %vm857, %v782, 0
  %v1054 = vsel %vm857, %v784, 0
  %v1057 = vsel %vm857, %v786, 0
  %v1060 = vsel %vm857, %v788, 0
  %v1063 = vsel %vm857, %v790, 0
  %v1066 = vsel %vm857, %v792, 0
  %v1069 = vsel %vm857, %v794, 0
  %v1072 = vsel %vm857, %v796, 0
  %v1075 = vsel %vm857, %v798, 0
  %v1078 = vsel %vm857, %v800, 0
  %v1081 = vsel %vm857, %v802, 0
  %v1084 = vsel %vm857, %v804, 0
  %v1087 = vsel %vm857, %v806, 0
  %v1090 = vsel %vm857, %v808, 0
  %v1093 = vsel %vm857, %v810, 0
  %v1096 = vsel %vm857, %v812, 0
  %v1099 = vsel %vm857, %v814, 0
  %v1102 = vsel %vm857, %v816, 0
  %v1105 = vsel %vm857, %v818, 0
  %v1108 = vsel %vm857, %v820, 0
  %v1111 = vsel %vm857, %v822, 0
  %v1114 = vsel %vm857, %v824, 0
  %v1117 = vsel %vm857, %v826, 0
  %v1120 = vsel %vm857, %v828, 0
  %v1123 = vsel %vm857, %v830, 0
  %v1126 = vsel %vm857, %v832, 0
  %v1129 = vsel %vm857, %v834, 0
  %v1132 = vsel %vm857, %v836, 0
  %v1135 = vsel %vm857, %v838, 0
  %v1138 = vsel %vm857, %v840, 0
  %v1141 = vsel %vm857, %v842, 0
  %v1144 = vsel %vm857, %v844, 0
  %v1147 = vsel %vm857, %v846, 0
  %v1150 = vsel %vm857, %v848, 0
  %v1153 = vsel %vm857, %v850, 0
  %v1156 = vsel %vm857, %v852, 0
  %v1159 = vsel %vm857, %v854, 0
  %v1162 = vsel %vm857, %v856, 0
  %1164 = vmatprep.subr.mxu0 %v650
  %1165 = vmatpush1.msra.mxu0 %v649
  %1166 = vmatprep.subr.mxu0 %v648
  %1167 = vmatpush1.msra.mxu0 %v647
  %1168 = vmatprep.subr.mxu0 %v646
  %1169 = vmatpush1.msra.mxu0 %v645
  %1170 = vmatprep.subr.mxu0 %v644
  %1171 = vmatpush1.msra.mxu0 %v643
  %1172 = vmatprep.subr.mxu0 %v642
  %1173 = vmatpush1.msra.mxu0 %v641
  %1174 = vmatprep.subr.mxu0 %v640
  %1175 = vmatpush1.msra.mxu0 %v639
  %1176 = vmatprep.subr.mxu0 %v638
  %1177 = vmatpush1.msra.mxu0 %v637
  %1178 = vmatprep.subr.mxu0 %v636
  %1179 = vmatpush1.msra.mxu0 %v635
  %1180 = vmatprep.subr.mxu0 %v634
  %1181 = vmatpush1.msra.mxu0 %v633
  %1182 = vmatprep.subr.mxu0 %v632
  %1183 = vmatpush1.msra.mxu0 %v631
  %1184 = vmatprep.subr.mxu0 %v630
  %1185 = vmatpush1.msra.mxu0 %v629
  %1186 = vmatprep.subr.mxu0 %v628
  %1187 = vmatpush1.msra.mxu0 %v627
  %1188 = vmatprep.subr.mxu0 %v626
  %1189 = vmatpush1.msra.mxu0 %v625
  %1190 = vmatprep.subr.mxu0 %v624
  %1191 = vmatpush1.msra.mxu0 %v623
  %1192 = vmatprep.subr.mxu0 %v622
  %1193 = vmatpush1.msra.mxu0 %v621
  %1194 = vmatprep.subr.mxu0 %v620
  %1195 = vmatpush1.msra.mxu0 %v619
  %1196 = vmatprep.subr.mxu0 0.0
  %1197 = vmatpush2.msra.mxu0 0.0
  %1198 = vmatprep.subr.mxu0 0.0
  %1199 = vmatpush2.msra.mxu0 0.0
  %1200 = vmatprep.subr.mxu0 0.0
  %1201 = vmatpush2.msra.mxu0 0.0
  %1202 = vmatprep.subr.mxu0 0.0
  %1203 = vmatpush2.msra.mxu0 0.0
  %1204 = vmatprep.subr.mxu0 0.0
  %1205 = vmatpush2.msra.mxu0 0.0
  %1206 = vmatprep.subr.mxu0 0.0
  %1207 = vmatpush2.msra.mxu0 0.0
  %1208 = vmatprep.subr.mxu0 0.0
  %1209 = vmatpush2.msra.mxu0 0.0
  %1210 = vmatprep.subr.mxu0 0.0
  %1211 = vmatpush2.msra.mxu0 0.0
  %1212 = vmatprep.subr.mxu0 0.0
  %1213 = vmatpush2.msra.mxu0 0.0
  %1214 = vmatprep.subr.mxu0 0.0
  %1215 = vmatpush2.msra.mxu0 0.0
  %1216 = vmatprep.subr.mxu0 0.0
  %1217 = vmatpush2.msra.mxu0 0.0
  %1218 = vmatprep.subr.mxu0 0.0
  %1219 = vmatpush2.msra.mxu0 0.0
  %1220 = vmatprep.subr.mxu0 0.0
  %1221 = vmatpush2.msra.mxu0 0.0
  %1222 = vmatprep.subr.mxu0 0.0
  %1223 = vmatpush2.msra.mxu0 0.0
  %1224 = vmatprep.subr.mxu0 0.0
  %1225 = vmatpush2.msra.mxu0 0.0
  %1226 = vmatprep.subr.mxu0 %v652
  %1227 = vmatpush2.msra.mxu0 %v651
  %1228 = vmatprep.mubr.f32.mxu0 %v859
  %1229 = vmatmul.mubr.f32.gmra.mxu0 %v653
  %v1230 = vpop.f32.mrf.mxu0
  %v1231 = vadd.f32 0.0, %v1230
  %v1232 = vpop.f32.mrf.mxu0
  %v1233 = vadd.f32 0.0, %v1232
  %1234 = vmatprep.mubr.f32.mxu0 %v862
  %1235 = vmatmul.mubr.f32.gmra.mxu0 %v655
  %v1236 = vpop.f32.mrf.mxu0
  %v1237 = vadd.f32 0.0, %v1236
  %v1238 = vpop.f32.mrf.mxu0
  %v1239 = vadd.f32 0.0, %v1238
  %1240 = vmatprep.mubr.f32.mxu0 %v865
  %1241 = vmatmul.mubr.f32.gmra.mxu0 %v657
  %v1242 = vpop.f32.mrf.mxu0
  %v1243 = vadd.f32 0.0, %v1242
  %v1244 = vpop.f32.mrf.mxu0
  %v1245 = vadd.f32 0.0, %v1244
  %1246 = vmatprep.mubr.f32.mxu0 %v868
  %1247 = vmatmul.mubr.f32.gmra.mxu0 %v659
  %v1248 = vpop.f32.mrf.mxu0
  %v1249 = vadd.f32 0.0, %v1248
  %v1250 = vpop.f32.mrf.mxu0
  %v1251 = vadd.f32 0.0, %v1250
  %1252 = vmatprep.mubr.f32.mxu0 %v871
  %1253 = vmatmul.mubr.f32.gmra.mxu0 %v661
  %v1254 = vpop.f32.mrf.mxu0
  %v1255 = vadd.f32 0.0, %v1254
  %v1256 = vpop.f32.mrf.mxu0
  %v1257 = vadd.f32 0.0, %v1256
  %1258 = vmatprep.mubr.f32.mxu0 %v874
  %1259 = vmatmul.mubr.f32.gmra.mxu0 %v663
  %v1260 = vpop.f32.mrf.mxu0
  %v1261 = vadd.f32 0.0, %v1260
  %v1262 = vpop.f32.mrf.mxu0
  %v1263 = vadd.f32 0.0, %v1262
  %1264 = vmatprep.mubr.f32.mxu0 %v877
  %1265 = vmatmul.mubr.f32.gmra.mxu0 %v665
  %v1266 = vpop.f32.mrf.mxu0
  %v1267 = vadd.f32 0.0, %v1266
  %v1268 = vpop.f32.mrf.mxu0
  %v1269 = vadd.f32 0.0, %v1268
  %1270 = vmatprep.mubr.f32.mxu0 %v880
  %1271 = vmatmul.mubr.f32.gmra.mxu0 %v667
  %v1272 = vpop.f32.mrf.mxu0
  %v1273 = vadd.f32 0.0, %v1272
  %v1274 = vpop.f32.mrf.mxu0
  %v1275 = vadd.f32 0.0, %v1274
  %1276 = vmatprep.mubr.f32.mxu0 %v883
  %1277 = vmatmul.mubr.f32.gmra.mxu0 %v669
  %v1278 = vpop.f32.mrf.mxu0
  %v1279 = vadd.f32 0.0, %v1278
  %v1280 = vpop.f32.mrf.mxu0
  %v1281 = vadd.f32 0.0, %v1280
  %1282 = vmatprep.mubr.f32.mxu0 %v886
  %1283 = vmatmul.mubr.f32.gmra.mxu0 %v671
  %v1284 = vpop.f32.mrf.mxu0
  %v1285 = vadd.f32 0.0, %v1284
  %v1286 = vpop.f32.mrf.mxu0
  %v1287 = vadd.f32 0.0, %v1286
  %1288 = vmatprep.mubr.f32.mxu0 %v889
  %1289 = vmatmul.mubr.f32.gmra.mxu0 %v673
  %v1290 = vpop.f32.mrf.mxu0
  %v1291 = vadd.f32 0.0, %v1290
  %v1292 = vpop.f32.mrf.mxu0
  %v1293 = vadd.f32 0.0, %v1292
  %1294 = vmatprep.mubr.f32.mxu0 %v892
  %1295 = vmatmul.mubr.f32.gmra.mxu0 %v675
  %v1296 = vpop.f32.mrf.mxu0
  %v1297 = vadd.f32 0.0, %v1296
  %v1298 = vpop.f32.mrf.mxu0
  %v1299 = vadd.f32 0.0, %v1298
  %1300 = vmatprep.mubr.f32.mxu0 %v895
  %1301 = vmatmul.mubr.f32.gmra.mxu0 %v677
  %v1302 = vpop.f32.mrf.mxu0
  %v1303 = vadd.f32 0.0, %v1302
  %v1304 = vpop.f32.mrf.mxu0
  %v1305 = vadd.f32 0.0, %v1304
  %1306 = vmatprep.mubr.f32.mxu0 %v898
  %1307 = vmatmul.mubr.f32.gmra.mxu0 %v679
  %v1308 = vpop.f32.mrf.mxu0
  %v1309 = vadd.f32 0.0, %v1308
  %v1310 = vpop.f32.mrf.mxu0
  %v1311 = vadd.f32 0.0, %v1310
  %1312 = vmatprep.mubr.f32.mxu0 %v901
  %1313 = vmatmul.mubr.f32.gmra.mxu0 %v681
  %v1314 = vpop.f32.mrf.mxu0
  %v1315 = vadd.f32 0.0, %v1314
  %v1316 = vpop.f32.mrf.mxu0
  %v1317 = vadd.f32 0.0, %v1316
  %1318 = vmatprep.mubr.f32.mxu0 %v904
  %1319 = vmatmul.mubr.f32.gmra.mxu0 %v683
  %v1320 = vpop.f32.mrf.mxu0
  %v1321 = vadd.f32 0.0, %v1320
  %v1322 = vpop.f32.mrf.mxu0
  %v1323 = vadd.f32 0.0, %v1322
  %1324 = vmatprep.mubr.f32.mxu0 %v907
  %1325 = vmatmul.mubr.f32.gmra.mxu0 %v685
  %v1326 = vpop.f32.mrf.mxu0
  %v1327 = vadd.f32 0.0, %v1326
  %v1328 = vpop.f32.mrf.mxu0
  %v1329 = vadd.f32 0.0, %v1328
  %1330 = vmatprep.mubr.f32.mxu0 %v910
  %1331 = vmatmul.mubr.f32.gmra.mxu0 %v687
  %v1332 = vpop.f32.mrf.mxu0
  %v1333 = vadd.f32 0.0, %v1332
  %v1334 = vpop.f32.mrf.mxu0
  %v1335 = vadd.f32 0.0, %v1334
  %1336 = vmatprep.mubr.f32.mxu0 %v913
  %1337 = vmatmul.mubr.f32.gmra.mxu0 %v689
  %v1338 = vpop.f32.mrf.mxu0
  %v1339 = vadd.f32 0.0, %v1338
  %v1340 = vpop.f32.mrf.mxu0
  %v1341 = vadd.f32 0.0, %v1340
  %1342 = vmatprep.mubr.f32.mxu0 %v916
  %1343 = vmatmul.mubr.f32.gmra.mxu0 %v691
  %v1344 = vpop.f32.mrf.mxu0
  %v1345 = vadd.f32 0.0, %v1344
  %v1346 = vpop.f32.mrf.mxu0
  %v1347 = vadd.f32 0.0, %v1346
  %1348 = vmatprep.mubr.f32.mxu0 %v919
  %1349 = vmatmul.mubr.f32.gmra.mxu0 %v693
  %v1350 = vpop.f32.mrf.mxu0
  %v1351 = vadd.f32 0.0, %v1350
  %v1352 = vpop.f32.mrf.mxu0
  %v1353 = vadd.f32 0.0, %v1352
  %1354 = vmatprep.mubr.f32.mxu0 %v922
  %1355 = vmatmul.mubr.f32.gmra.mxu0 %v695
  %v1356 = vpop.f32.mrf.mxu0
  %v1357 = vadd.f32 0.0, %v1356
  %v1358 = vpop.f32.mrf.mxu0
  %v1359 = vadd.f32 0.0, %v1358
  %1360 = vmatprep.mubr.f32.mxu0 %v925
  %1361 = vmatmul.mubr.f32.gmra.mxu0 %v697
  %v1362 = vpop.f32.mrf.mxu0
  %v1363 = vadd.f32 0.0, %v1362
  %v1364 = vpop.f32.mrf.mxu0
  %v1365 = vadd.f32 0.0, %v1364
  %1366 = vmatprep.mubr.f32.mxu0 %v928
  %1367 = vmatmul.mubr.f32.gmra.mxu0 %v699
  %v1368 = vpop.f32.mrf.mxu0
  %v1369 = vadd.f32 0.0, %v1368
  %v1370 = vpop.f32.mrf.mxu0
  %v1371 = vadd.f32 0.0, %v1370
  %1372 = vmatprep.mubr.f32.mxu0 %v931
  %1373 = vmatmul.mubr.f32.gmra.mxu0 %v701
  %v1374 = vpop.f32.mrf.mxu0
  %v1375 = vadd.f32 0.0, %v1374
  %v1376 = vpop.f32.mrf.mxu0
  %v1377 = vadd.f32 0.0, %v1376
  %1378 = vmatprep.mubr.f32.mxu0 %v934
  %1379 = vmatmul.mubr.f32.gmra.mxu0 %v703
  %v1380 = vpop.f32.mrf.mxu0
  %v1381 = vadd.f32 0.0, %v1380
  %v1382 = vpop.f32.mrf.mxu0
  %v1383 = vadd.f32 0.0, %v1382
  %1384 = vmatprep.mubr.f32.mxu0 %v937
  %1385 = vmatmul.mubr.f32.gmra.mxu0 %v705
  %v1386 = vpop.f32.mrf.mxu0
  %v1387 = vadd.f32 0.0, %v1386
  %v1388 = vpop.f32.mrf.mxu0
  %v1389 = vadd.f32 0.0, %v1388
  %1390 = vmatprep.mubr.f32.mxu0 %v940
  %1391 = vmatmul.mubr.f32.gmra.mxu0 %v707
  %v1392 = vpop.f32.mrf.mxu0
  %v1393 = vadd.f32 0.0, %v1392
  %v1394 = vpop.f32.mrf.mxu0
  %v1395 = vadd.f32 0.0, %v1394
  %1396 = vmatprep.mubr.f32.mxu0 %v943
  %1397 = vmatmul.mubr.f32.gmra.mxu0 %v709
  %v1398 = vpop.f32.mrf.mxu0
  %v1399 = vadd.f32 0.0, %v1398
  %v1400 = vpop.f32.mrf.mxu0
  %v1401 = vadd.f32 0.0, %v1400
  %1402 = vmatprep.mubr.f32.mxu0 %v946
  %1403 = vmatmul.mubr.f32.gmra.mxu0 %v711
  %v1404 = vpop.f32.mrf.mxu0
  %v1405 = vadd.f32 0.0, %v1404
  %v1406 = vpop.f32.mrf.mxu0
  %v1407 = vadd.f32 0.0, %v1406
  %1408 = vmatprep.mubr.f32.mxu0 %v949
  %1409 = vmatmul.mubr.f32.gmra.mxu0 %v713
  %v1410 = vpop.f32.mrf.mxu0
  %v1411 = vadd.f32 0.0, %v1410
  %v1412 = vpop.f32.mrf.mxu0
  %v1413 = vadd.f32 0.0, %v1412
  %1414 = vmatprep.mubr.f32.mxu0 %v952
  %1415 = vmatmul.mubr.f32.gmra.mxu0 %v715
  %v1416 = vpop.f32.mrf.mxu0
  %v1417 = vadd.f32 0.0, %v1416
  %v1418 = vpop.f32.mrf.mxu0
  %v1419 = vadd.f32 0.0, %v1418
  %1420 = vmatprep.mubr.f32.mxu0 %v955
  %1421 = vmatmul.mubr.f32.gmra.mxu0 %v717
  %v1422 = vpop.f32.mrf.mxu0
  %v1423 = vadd.f32 0.0, %v1422
  %v1424 = vpop.f32.mrf.mxu0
  %v1425 = vadd.f32 0.0, %v1424
  %1426 = vmatprep.mubr.f32.mxu0 %v958
  %1427 = vmatmul.mubr.f32.gmra.mxu0 %v719
  %v1428 = vpop.f32.mrf.mxu0
  %v1429 = vadd.f32 0.0, %v1428
  %v1430 = vpop.f32.mrf.mxu0
  %v1431 = vadd.f32 0.0, %v1430
  %1432 = vmatprep.mubr.f32.mxu0 %v961
  %1433 = vmatmul.mubr.f32.gmra.mxu0 %v721
  %v1434 = vpop.f32.mrf.mxu0
  %v1435 = vadd.f32 0.0, %v1434
  %v1436 = vpop.f32.mrf.mxu0
  %v1437 = vadd.f32 0.0, %v1436
  %1438 = vmatprep.mubr.f32.mxu0 %v964
  %1439 = vmatmul.mubr.f32.gmra.mxu0 %v723
  %v1440 = vpop.f32.mrf.mxu0
  %v1441 = vadd.f32 0.0, %v1440
  %v1442 = vpop.f32.mrf.mxu0
  %v1443 = vadd.f32 0.0, %v1442
  %1444 = vmatprep.mubr.f32.mxu0 %v967
  %1445 = vmatmul.mubr.f32.gmra.mxu0 %v725
  %v1446 = vpop.f32.mrf.mxu0
  %v1447 = vadd.f32 0.0, %v1446
  %v1448 = vpop.f32.mrf.mxu0
  %v1449 = vadd.f32 0.0, %v1448
  %1450 = vmatprep.mubr.f32.mxu0 %v970
  %1451 = vmatmul.mubr.f32.gmra.mxu0 %v727
  %v1452 = vpop.f32.mrf.mxu0
  %v1453 = vadd.f32 0.0, %v1452
  %v1454 = vpop.f32.mrf.mxu0
  %v1455 = vadd.f32 0.0, %v1454
  %1456 = vmatprep.mubr.f32.mxu0 %v973
  %1457 = vmatmul.mubr.f32.gmra.mxu0 %v729
  %v1458 = vpop.f32.mrf.mxu0
  %v1459 = vadd.f32 0.0, %v1458
  %v1460 = vpop.f32.mrf.mxu0
  %v1461 = vadd.f32 0.0, %v1460
  %1462 = vmatprep.mubr.f32.mxu0 %v976
  %1463 = vmatmul.mubr.f32.gmra.mxu0 %v731
  %v1464 = vpop.f32.mrf.mxu0
  %v1465 = vadd.f32 0.0, %v1464
  %v1466 = vpop.f32.mrf.mxu0
  %v1467 = vadd.f32 0.0, %v1466
  %1468 = vmatprep.mubr.f32.mxu0 %v979
  %1469 = vmatmul.mubr.f32.gmra.mxu0 %v733
  %v1470 = vpop.f32.mrf.mxu0
  %v1471 = vadd.f32 0.0, %v1470
  %v1472 = vpop.f32.mrf.mxu0
  %v1473 = vadd.f32 0.0, %v1472
  %1474 = vmatprep.mubr.f32.mxu0 %v982
  %1475 = vmatmul.mubr.f32.gmra.mxu0 %v735
  %v1476 = vpop.f32.mrf.mxu0
  %v1477 = vadd.f32 0.0, %v1476
  %v1478 = vpop.f32.mrf.mxu0
  %v1479 = vadd.f32 0.0, %v1478
  %1480 = vmatprep.mubr.f32.mxu0 %v985
  %1481 = vmatmul.mubr.f32.gmra.mxu0 %v737
  %v1482 = vpop.f32.mrf.mxu0
  %v1483 = vadd.f32 0.0, %v1482
  %v1484 = vpop.f32.mrf.mxu0
  %v1485 = vadd.f32 0.0, %v1484
  %1486 = vmatprep.mubr.f32.mxu0 %v988
  %1487 = vmatmul.mubr.f32.gmra.mxu0 %v739
  %v1488 = vpop.f32.mrf.mxu0
  %v1489 = vadd.f32 0.0, %v1488
  %v1490 = vpop.f32.mrf.mxu0
  %v1491 = vadd.f32 0.0, %v1490
  %1492 = vmatprep.mubr.f32.mxu0 %v991
  %1493 = vmatmul.mubr.f32.gmra.mxu0 %v741
  %v1494 = vpop.f32.mrf.mxu0
  %v1495 = vadd.f32 0.0, %v1494
  %v1496 = vpop.f32.mrf.mxu0
  %v1497 = vadd.f32 0.0, %v1496
  %1498 = vmatprep.mubr.f32.mxu0 %v994
  %1499 = vmatmul.mubr.f32.gmra.mxu0 %v743
  %v1500 = vpop.f32.mrf.mxu0
  %v1501 = vadd.f32 0.0, %v1500
  %v1502 = vpop.f32.mrf.mxu0
  %v1503 = vadd.f32 0.0, %v1502
  %1504 = vmatprep.mubr.f32.mxu0 %v997
  %1505 = vmatmul.mubr.f32.gmra.mxu0 %v745
  %v1506 = vpop.f32.mrf.mxu0
  %v1507 = vadd.f32 0.0, %v1506
  %v1508 = vpop.f32.mrf.mxu0
  %v1509 = vadd.f32 0.0, %v1508
  %1510 = vmatprep.mubr.f32.mxu0 %v1000
  %1511 = vmatmul.mubr.f32.gmra.mxu0 %v747
  %v1512 = vpop.f32.mrf.mxu0
  %v1513 = vadd.f32 0.0, %v1512
  %v1514 = vpop.f32.mrf.mxu0
  %v1515 = vadd.f32 0.0, %v1514
  %1516 = vmatprep.mubr.f32.mxu0 %v1003
  %1517 = vmatmul.mubr.f32.gmra.mxu0 %v749
  %v1518 = vpop.f32.mrf.mxu0
  %v1519 = vadd.f32 0.0, %v1518
  %v1520 = vpop.f32.mrf.mxu0
  %v1521 = vadd.f32 0.0, %v1520
  %1522 = vmatprep.mubr.f32.mxu0 %v1006
  %1523 = vmatmul.mubr.f32.gmra.mxu0 %v751
  %v1524 = vpop.f32.mrf.mxu0
  %v1525 = vadd.f32 0.0, %v1524
  %v1526 = vpop.f32.mrf.mxu0
  %v1527 = vadd.f32 0.0, %v1526
  %1528 = vmatprep.mubr.f32.mxu0 %v1009
  %1529 = vmatmul.mubr.f32.gmra.mxu0 %v753
  %v1530 = vpop.f32.mrf.mxu0
  %v1531 = vadd.f32 0.0, %v1530
  %v1532 = vpop.f32.mrf.mxu0
  %v1533 = vadd.f32 0.0, %v1532
  %1534 = vmatprep.mubr.f32.mxu0 %v1012
  %1535 = vmatmul.mubr.f32.gmra.mxu0 %v755
  %v1536 = vpop.f32.mrf.mxu0
  %v1537 = vadd.f32 0.0, %v1536
  %v1538 = vpop.f32.mrf.mxu0
  %v1539 = vadd.f32 0.0, %v1538
  %1540 = vmatprep.mubr.f32.mxu0 %v1015
  %1541 = vmatmul.mubr.f32.gmra.mxu0 %v757
  %v1542 = vpop.f32.mrf.mxu0
  %v1543 = vadd.f32 0.0, %v1542
  %v1544 = vpop.f32.mrf.mxu0
  %v1545 = vadd.f32 0.0, %v1544
  %1546 = vmatprep.mubr.f32.mxu0 %v1018
  %1547 = vmatmul.mubr.f32.gmra.mxu0 %v759
  %v1548 = vpop.f32.mrf.mxu0
  %v1549 = vadd.f32 0.0, %v1548
  %v1550 = vpop.f32.mrf.mxu0
  %v1551 = vadd.f32 0.0, %v1550
  %1552 = vmatprep.mubr.f32.mxu0 %v1021
  %1553 = vmatmul.mubr.f32.gmra.mxu0 %v761
  %v1554 = vpop.f32.mrf.mxu0
  %v1555 = vadd.f32 0.0, %v1554
  %v1556 = vpop.f32.mrf.mxu0
  %v1557 = vadd.f32 0.0, %v1556
  %1558 = vmatprep.mubr.f32.mxu0 %v1024
  %1559 = vmatmul.mubr.f32.gmra.mxu0 %v763
  %v1560 = vpop.f32.mrf.mxu0
  %v1561 = vadd.f32 0.0, %v1560
  %v1562 = vpop.f32.mrf.mxu0
  %v1563 = vadd.f32 0.0, %v1562
  %1564 = vmatprep.mubr.f32.mxu0 %v1027
  %1565 = vmatmul.mubr.f32.gmra.mxu0 %v765
  %v1566 = vpop.f32.mrf.mxu0
  %v1567 = vadd.f32 0.0, %v1566
  %v1568 = vpop.f32.mrf.mxu0
  %v1569 = vadd.f32 0.0, %v1568
  %1570 = vmatprep.mubr.f32.mxu0 %v1030
  %1571 = vmatmul.mubr.f32.gmra.mxu0 %v767
  %v1572 = vpop.f32.mrf.mxu0
  %v1573 = vadd.f32 0.0, %v1572
  %v1574 = vpop.f32.mrf.mxu0
  %v1575 = vadd.f32 0.0, %v1574
  %1576 = vmatprep.mubr.f32.mxu0 %v1033
  %1577 = vmatmul.mubr.f32.gmra.mxu0 %v769
  %v1578 = vpop.f32.mrf.mxu0
  %v1579 = vadd.f32 0.0, %v1578
  %v1580 = vpop.f32.mrf.mxu0
  %v1581 = vadd.f32 0.0, %v1580
  %1582 = vmatprep.mubr.f32.mxu0 %v1036
  %1583 = vmatmul.mubr.f32.gmra.mxu0 %v771
  %v1584 = vpop.f32.mrf.mxu0
  %v1585 = vadd.f32 0.0, %v1584
  %v1586 = vpop.f32.mrf.mxu0
  %v1587 = vadd.f32 0.0, %v1586
  %1588 = vmatprep.mubr.f32.mxu0 %v1039
  %1589 = vmatmul.mubr.f32.gmra.mxu0 %v773
  %v1590 = vpop.f32.mrf.mxu0
  %v1591 = vadd.f32 0.0, %v1590
  %v1592 = vpop.f32.mrf.mxu0
  %v1593 = vadd.f32 0.0, %v1592
  %1594 = vmatprep.mubr.f32.mxu0 %v1042
  %1595 = vmatmul.mubr.f32.gmra.mxu0 %v775
  %v1596 = vpop.f32.mrf.mxu0
  %v1597 = vadd.f32 0.0, %v1596
  %v1598 = vpop.f32.mrf.mxu0
  %v1599 = vadd.f32 0.0, %v1598
  %1600 = vmatprep.mubr.f32.mxu0 %v1045
  %1601 = vmatmul.mubr.f32.gmra.mxu0 %v777
  %v1602 = vpop.f32.mrf.mxu0
  %v1603 = vadd.f32 0.0, %v1602
  %v1604 = vpop.f32.mrf.mxu0
  %v1605 = vadd.f32 0.0, %v1604
  %1606 = vmatprep.mubr.f32.mxu0 %v1048
  %1607 = vmatmul.mubr.f32.gmra.mxu0 %v779
  %v1608 = vpop.f32.mrf.mxu0
  %v1609 = vadd.f32 0.0, %v1608
  %v1610 = vpop.f32.mrf.mxu0
  %v1611 = vadd.f32 0.0, %v1610
  %1612 = vmatprep.mubr.f32.mxu0 %v1051
  %1613 = vmatmul.mubr.f32.gmra.mxu0 %v781
  %v1614 = vpop.f32.mrf.mxu0
  %v1615 = vadd.f32 0.0, %v1614
  %v1616 = vpop.f32.mrf.mxu0
  %v1617 = vadd.f32 0.0, %v1616
  %1618 = vmatprep.mubr.f32.mxu0 %v1054
  %1619 = vmatmul.mubr.f32.gmra.mxu0 %v783
  %v1620 = vpop.f32.mrf.mxu0
  %v1621 = vadd.f32 0.0, %v1620
  %v1622 = vpop.f32.mrf.mxu0
  %v1623 = vadd.f32 0.0, %v1622
  %1624 = vmatprep.mubr.f32.mxu0 %v1057
  %1625 = vmatmul.mubr.f32.gmra.mxu0 %v785
  %v1626 = vpop.f32.mrf.mxu0
  %v1627 = vadd.f32 0.0, %v1626
  %v1628 = vpop.f32.mrf.mxu0
  %v1629 = vadd.f32 0.0, %v1628
  %1630 = vmatprep.mubr.f32.mxu0 %v1060
  %1631 = vmatmul.mubr.f32.gmra.mxu0 %v787
  %v1632 = vpop.f32.mrf.mxu0
  %v1633 = vadd.f32 0.0, %v1632
  %v1634 = vpop.f32.mrf.mxu0
  %v1635 = vadd.f32 0.0, %v1634
  %1636 = vmatprep.mubr.f32.mxu0 %v1063
  %1637 = vmatmul.mubr.f32.gmra.mxu0 %v789
  %v1638 = vpop.f32.mrf.mxu0
  %v1639 = vadd.f32 0.0, %v1638
  %v1640 = vpop.f32.mrf.mxu0
  %v1641 = vadd.f32 0.0, %v1640
  %1642 = vmatprep.mubr.f32.mxu0 %v1066
  %1643 = vmatmul.mubr.f32.gmra.mxu0 %v791
  %v1644 = vpop.f32.mrf.mxu0
  %v1645 = vadd.f32 0.0, %v1644
  %v1646 = vpop.f32.mrf.mxu0
  %v1647 = vadd.f32 0.0, %v1646
  %1648 = vmatprep.mubr.f32.mxu0 %v1069
  %1649 = vmatmul.mubr.f32.gmra.mxu0 %v793
  %v1650 = vpop.f32.mrf.mxu0
  %v1651 = vadd.f32 0.0, %v1650
  %v1652 = vpop.f32.mrf.mxu0
  %v1653 = vadd.f32 0.0, %v1652
  %1654 = vmatprep.mubr.f32.mxu0 %v1072
  %1655 = vmatmul.mubr.f32.gmra.mxu0 %v795
  %v1656 = vpop.f32.mrf.mxu0
  %v1657 = vadd.f32 0.0, %v1656
  %v1658 = vpop.f32.mrf.mxu0
  %v1659 = vadd.f32 0.0, %v1658
  %1660 = vmatprep.mubr.f32.mxu0 %v1075
  %1661 = vmatmul.mubr.f32.gmra.mxu0 %v797
  %v1662 = vpop.f32.mrf.mxu0
  %v1663 = vadd.f32 0.0, %v1662
  %v1664 = vpop.f32.mrf.mxu0
  %v1665 = vadd.f32 0.0, %v1664
  %1666 = vmatprep.mubr.f32.mxu0 %v1078
  %1667 = vmatmul.mubr.f32.gmra.mxu0 %v799
  %v1668 = vpop.f32.mrf.mxu0
  %v1669 = vadd.f32 0.0, %v1668
  %v1670 = vpop.f32.mrf.mxu0
  %v1671 = vadd.f32 0.0, %v1670
  %1672 = vmatprep.mubr.f32.mxu0 %v1081
  %1673 = vmatmul.mubr.f32.gmra.mxu0 %v801
  %v1674 = vpop.f32.mrf.mxu0
  %v1675 = vadd.f32 0.0, %v1674
  %v1676 = vpop.f32.mrf.mxu0
  %v1677 = vadd.f32 0.0, %v1676
  %1678 = vmatprep.mubr.f32.mxu0 %v1084
  %1679 = vmatmul.mubr.f32.gmra.mxu0 %v803
  %v1680 = vpop.f32.mrf.mxu0
  %v1681 = vadd.f32 0.0, %v1680
  %v1682 = vpop.f32.mrf.mxu0
  %v1683 = vadd.f32 0.0, %v1682
  %1684 = vmatprep.mubr.f32.mxu0 %v1087
  %1685 = vmatmul.mubr.f32.gmra.mxu0 %v805
  %v1686 = vpop.f32.mrf.mxu0
  %v1687 = vadd.f32 0.0, %v1686
  %v1688 = vpop.f32.mrf.mxu0
  %v1689 = vadd.f32 0.0, %v1688
  %1690 = vmatprep.mubr.f32.mxu0 %v1090
  %1691 = vmatmul.mubr.f32.gmra.mxu0 %v807
  %v1692 = vpop.f32.mrf.mxu0
  %v1693 = vadd.f32 0.0, %v1692
  %v1694 = vpop.f32.mrf.mxu0
  %v1695 = vadd.f32 0.0, %v1694
  %1696 = vmatprep.mubr.f32.mxu0 %v1093
  %1697 = vmatmul.mubr.f32.gmra.mxu0 %v809
  %v1698 = vpop.f32.mrf.mxu0
  %v1699 = vadd.f32 0.0, %v1698
  %v1700 = vpop.f32.mrf.mxu0
  %v1701 = vadd.f32 0.0, %v1700
  %1702 = vmatprep.mubr.f32.mxu0 %v1096
  %1703 = vmatmul.mubr.f32.gmra.mxu0 %v811
  %v1704 = vpop.f32.mrf.mxu0
  %v1705 = vadd.f32 0.0, %v1704
  %v1706 = vpop.f32.mrf.mxu0
  %v1707 = vadd.f32 0.0, %v1706
  %1708 = vmatprep.mubr.f32.mxu0 %v1099
  %1709 = vmatmul.mubr.f32.gmra.mxu0 %v813
  %v1710 = vpop.f32.mrf.mxu0
  %v1711 = vadd.f32 0.0, %v1710
  %v1712 = vpop.f32.mrf.mxu0
  %v1713 = vadd.f32 0.0, %v1712
  %1714 = vmatprep.mubr.f32.mxu0 %v1102
  %1715 = vmatmul.mubr.f32.gmra.mxu0 %v815
  %v1716 = vpop.f32.mrf.mxu0
  %v1717 = vadd.f32 0.0, %v1716
  %v1718 = vpop.f32.mrf.mxu0
  %v1719 = vadd.f32 0.0, %v1718
  %1720 = vmatprep.mubr.f32.mxu0 %v1105
  %1721 = vmatmul.mubr.f32.gmra.mxu0 %v817
  %v1722 = vpop.f32.mrf.mxu0
  %v1723 = vadd.f32 0.0, %v1722
  %v1724 = vpop.f32.mrf.mxu0
  %v1725 = vadd.f32 0.0, %v1724
  %1726 = vmatprep.mubr.f32.mxu0 %v1108
  %1727 = vmatmul.mubr.f32.gmra.mxu0 %v819
  %v1728 = vpop.f32.mrf.mxu0
  %v1729 = vadd.f32 0.0, %v1728
  %v1730 = vpop.f32.mrf.mxu0
  %v1731 = vadd.f32 0.0, %v1730
  %1732 = vmatprep.mubr.f32.mxu0 %v1111
  %1733 = vmatmul.mubr.f32.gmra.mxu0 %v821
  %v1734 = vpop.f32.mrf.mxu0
  %v1735 = vadd.f32 0.0, %v1734
  %v1736 = vpop.f32.mrf.mxu0
  %v1737 = vadd.f32 0.0, %v1736
  %1738 = vmatprep.mubr.f32.mxu0 %v1114
  %1739 = vmatmul.mubr.f32.gmra.mxu0 %v823
  %v1740 = vpop.f32.mrf.mxu0
  %v1741 = vadd.f32 0.0, %v1740
  %v1742 = vpop.f32.mrf.mxu0
  %v1743 = vadd.f32 0.0, %v1742
  %1744 = vmatprep.mubr.f32.mxu0 %v1117
  %1745 = vmatmul.mubr.f32.gmra.mxu0 %v825
  %v1746 = vpop.f32.mrf.mxu0
  %v1747 = vadd.f32 0.0, %v1746
  %v1748 = vpop.f32.mrf.mxu0
  %v1749 = vadd.f32 0.0, %v1748
  %1750 = vmatprep.mubr.f32.mxu0 %v1120
  %1751 = vmatmul.mubr.f32.gmra.mxu0 %v827
  %v1752 = vpop.f32.mrf.mxu0
  %v1753 = vadd.f32 0.0, %v1752
  %v1754 = vpop.f32.mrf.mxu0
  %v1755 = vadd.f32 0.0, %v1754
  %1756 = vmatprep.mubr.f32.mxu0 %v1123
  %1757 = vmatmul.mubr.f32.gmra.mxu0 %v829
  %v1758 = vpop.f32.mrf.mxu0
  %v1759 = vadd.f32 0.0, %v1758
  %v1760 = vpop.f32.mrf.mxu0
  %v1761 = vadd.f32 0.0, %v1760
  %1762 = vmatprep.mubr.f32.mxu0 %v1126
  %1763 = vmatmul.mubr.f32.gmra.mxu0 %v831
  %v1764 = vpop.f32.mrf.mxu0
  %v1765 = vadd.f32 0.0, %v1764
  %v1766 = vpop.f32.mrf.mxu0
  %v1767 = vadd.f32 0.0, %v1766
  %1768 = vmatprep.mubr.f32.mxu0 %v1129
  %1769 = vmatmul.mubr.f32.gmra.mxu0 %v833
  %v1770 = vpop.f32.mrf.mxu0
  %v1771 = vadd.f32 0.0, %v1770
  %v1772 = vpop.f32.mrf.mxu0
  %v1773 = vadd.f32 0.0, %v1772
  %1774 = vmatprep.mubr.f32.mxu0 %v1132
  %1775 = vmatmul.mubr.f32.gmra.mxu0 %v835
  %v1776 = vpop.f32.mrf.mxu0
  %v1777 = vadd.f32 0.0, %v1776
  %v1778 = vpop.f32.mrf.mxu0
  %v1779 = vadd.f32 0.0, %v1778
  %1780 = vmatprep.mubr.f32.mxu0 %v1135
  %1781 = vmatmul.mubr.f32.gmra.mxu0 %v837
  %v1782 = vpop.f32.mrf.mxu0
  %v1783 = vadd.f32 0.0, %v1782
  %v1784 = vpop.f32.mrf.mxu0
  %v1785 = vadd.f32 0.0, %v1784
  %1786 = vmatprep.mubr.f32.mxu0 %v1138
  %1787 = vmatmul.mubr.f32.gmra.mxu0 %v839
  %v1788 = vpop.f32.mrf.mxu0
  %v1789 = vadd.f32 0.0, %v1788
  %v1790 = vpop.f32.mrf.mxu0
  %v1791 = vadd.f32 0.0, %v1790
  %1792 = vmatprep.mubr.f32.mxu0 %v1141
  %1793 = vmatmul.mubr.f32.gmra.mxu0 %v841
  %v1794 = vpop.f32.mrf.mxu0
  %v1795 = vadd.f32 0.0, %v1794
  %v1796 = vpop.f32.mrf.mxu0
  %v1797 = vadd.f32 0.0, %v1796
  %1798 = vmatprep.mubr.f32.mxu0 %v1144
  %1799 = vmatmul.mubr.f32.gmra.mxu0 %v843
  %v1800 = vpop.f32.mrf.mxu0
  %v1801 = vadd.f32 0.0, %v1800
  %v1802 = vpop.f32.mrf.mxu0
  %v1803 = vadd.f32 0.0, %v1802
  %1804 = vmatprep.mubr.f32.mxu0 %v1147
  %1805 = vmatmul.mubr.f32.gmra.mxu0 %v845
  %v1806 = vpop.f32.mrf.mxu0
  %v1807 = vadd.f32 0.0, %v1806
  %v1808 = vpop.f32.mrf.mxu0
  %v1809 = vadd.f32 0.0, %v1808
  %1810 = vmatprep.mubr.f32.mxu0 %v1150
  %1811 = vmatmul.mubr.f32.gmra.mxu0 %v847
  %v1812 = vpop.f32.mrf.mxu0
  %v1813 = vadd.f32 0.0, %v1812
  %v1814 = vpop.f32.mrf.mxu0
  %v1815 = vadd.f32 0.0, %v1814
  %1816 = vmatprep.mubr.f32.mxu0 %v1153
  %1817 = vmatmul.mubr.f32.gmra.mxu0 %v849
  %v1818 = vpop.f32.mrf.mxu0
  %v1819 = vadd.f32 0.0, %v1818
  %v1820 = vpop.f32.mrf.mxu0
  %v1821 = vadd.f32 0.0, %v1820
  %1822 = vmatprep.mubr.f32.mxu0 %v1156
  %1823 = vmatmul.mubr.f32.gmra.mxu0 %v851
  %v1824 = vpop.f32.mrf.mxu0
  %v1825 = vadd.f32 0.0, %v1824
  %v1826 = vpop.f32.mrf.mxu0
  %v1827 = vadd.f32 0.0, %v1826
  %1828 = vmatprep.mubr.f32.mxu0 %v1159
  %1829 = vmatmul.mubr.f32.gmra.mxu0 %v853
  %v1830 = vpop.f32.mrf.mxu0
  %v1831 = vadd.f32 0.0, %v1830
  %v1832 = vpop.f32.mrf.mxu0
  %v1833 = vadd.f32 0.0, %v1832
  %1834 = vmatprep.mubr.f32.mxu0 %v1162
  %1835 = vmatmul.mubr.f32.gmra.mxu0 %v855
  %v1836 = vpop.f32.mrf.mxu0
  %v1837 = vadd.f32 0.0, %v1836
  %v1838 = vpop.f32.mrf.mxu0
  %v1839 = vadd.f32 0.0, %v1838
  %1840 = vdwg.mxu0
  %v1841 = vsel %vm57, %v1233, 0.0
  %v1842 = vadd.f32 %v1231, %v1841
  %1843 = vadd.xlane.f32.xlu0 %v1842
  %v1844 = vpop.xlane.xlu0 %1843
  %v1845 = vsel %vm57, %v1239, 0.0
  %v1846 = vadd.f32 %v1237, %v1845
  %1847 = vadd.xlane.f32.xlu0 %v1846
  %v1848 = vpop.xlane.xlu0 %1847
  %v1849 = vsel %vm57, %v1245, 0.0
  %v1850 = vadd.f32 %v1243, %v1849
  %1851 = vadd.xlane.f32.xlu0 %v1850
  %v1852 = vpop.xlane.xlu0 %1851
  %v1853 = vsel %vm57, %v1251, 0.0
  %v1854 = vadd.f32 %v1249, %v1853
  %1855 = vadd.xlane.f32.xlu0 %v1854
  %v1856 = vpop.xlane.xlu0 %1855
  %v1857 = vsel %vm57, %v1257, 0.0
  %v1858 = vadd.f32 %v1255, %v1857
  %1859 = vadd.xlane.f32.xlu0 %v1858
  %v1860 = vpop.xlane.xlu0 %1859
  %v1861 = vsel %vm57, %v1263, 0.0
  %v1862 = vadd.f32 %v1261, %v1861
  %1863 = vadd.xlane.f32.xlu0 %v1862
  %v1864 = vpop.xlane.xlu0 %1863
  %v1865 = vsel %vm57, %v1269, 0.0
  %v1866 = vadd.f32 %v1267, %v1865
  %1867 = vadd.xlane.f32.xlu0 %v1866
  %v1868 = vpop.xlane.xlu0 %1867
  %v1869 = vsel %vm57, %v1275, 0.0
  %v1870 = vadd.f32 %v1273, %v1869
  %1871 = vadd.xlane.f32.xlu0 %v1870
  %v1872 = vpop.xlane.xlu0 %1871
  %v1873 = vsel %vm57, %v1281, 0.0
  %v1874 = vadd.f32 %v1279, %v1873
  %1875 = vadd.xlane.f32.xlu0 %v1874
  %v1876 = vpop.xlane.xlu0 %1875
  %v1877 = vsel %vm57, %v1287, 0.0
  %v1878 = vadd.f32 %v1285, %v1877
  %1879 = vadd.xlane.f32.xlu0 %v1878
  %v1880 = vpop.xlane.xlu0 %1879
  %v1881 = vsel %vm57, %v1293, 0.0
  %v1882 = vadd.f32 %v1291, %v1881
  %1883 = vadd.xlane.f32.xlu0 %v1882
  %v1884 = vpop.xlane.xlu0 %1883
  %v1885 = vsel %vm57, %v1299, 0.0
  %v1886 = vadd.f32 %v1297, %v1885
  %1887 = vadd.xlane.f32.xlu0 %v1886
  %v1888 = vpop.xlane.xlu0 %1887
  %v1889 = vsel %vm57, %v1305, 0.0
  %v1890 = vadd.f32 %v1303, %v1889
  %1891 = vadd.xlane.f32.xlu0 %v1890
  %v1892 = vpop.xlane.xlu0 %1891
  %v1893 = vsel %vm57, %v1311, 0.0
  %v1894 = vadd.f32 %v1309, %v1893
  %1895 = vadd.xlane.f32.xlu0 %v1894
  %v1896 = vpop.xlane.xlu0 %1895
  %v1897 = vsel %vm57, %v1317, 0.0
  %v1898 = vadd.f32 %v1315, %v1897
  %1899 = vadd.xlane.f32.xlu0 %v1898
  %v1900 = vpop.xlane.xlu0 %1899
  %v1901 = vsel %vm57, %v1323, 0.0
  %v1902 = vadd.f32 %v1321, %v1901
  %1903 = vadd.xlane.f32.xlu0 %v1902
  %v1904 = vpop.xlane.xlu0 %1903
  %v1905 = vsel %vm57, %v1329, 0.0
  %v1906 = vadd.f32 %v1327, %v1905
  %1907 = vadd.xlane.f32.xlu0 %v1906
  %v1908 = vpop.xlane.xlu0 %1907
  %v1909 = vsel %vm57, %v1335, 0.0
  %v1910 = vadd.f32 %v1333, %v1909
  %1911 = vadd.xlane.f32.xlu0 %v1910
  %v1912 = vpop.xlane.xlu0 %1911
  %v1913 = vsel %vm57, %v1341, 0.0
  %v1914 = vadd.f32 %v1339, %v1913
  %1915 = vadd.xlane.f32.xlu0 %v1914
  %v1916 = vpop.xlane.xlu0 %1915
  %v1917 = vsel %vm57, %v1347, 0.0
  %v1918 = vadd.f32 %v1345, %v1917
  %1919 = vadd.xlane.f32.xlu0 %v1918
  %v1920 = vpop.xlane.xlu0 %1919
  %v1921 = vsel %vm57, %v1353, 0.0
  %v1922 = vadd.f32 %v1351, %v1921
  %1923 = vadd.xlane.f32.xlu0 %v1922
  %v1924 = vpop.xlane.xlu0 %1923
  %v1925 = vsel %vm57, %v1359, 0.0
  %v1926 = vadd.f32 %v1357, %v1925
  %1927 = vadd.xlane.f32.xlu0 %v1926
  %v1928 = vpop.xlane.xlu0 %1927
  %v1929 = vsel %vm57, %v1365, 0.0
  %v1930 = vadd.f32 %v1363, %v1929
  %1931 = vadd.xlane.f32.xlu0 %v1930
  %v1932 = vpop.xlane.xlu0 %1931
  %v1933 = vsel %vm57, %v1371, 0.0
  %v1934 = vadd.f32 %v1369, %v1933
  %1935 = vadd.xlane.f32.xlu0 %v1934
  %v1936 = vpop.xlane.xlu0 %1935
  %v1937 = vsel %vm57, %v1377, 0.0
  %v1938 = vadd.f32 %v1375, %v1937
  %1939 = vadd.xlane.f32.xlu0 %v1938
  %v1940 = vpop.xlane.xlu0 %1939
  %v1941 = vsel %vm57, %v1383, 0.0
  %v1942 = vadd.f32 %v1381, %v1941
  %1943 = vadd.xlane.f32.xlu0 %v1942
  %v1944 = vpop.xlane.xlu0 %1943
  %v1945 = vsel %vm57, %v1389, 0.0
  %v1946 = vadd.f32 %v1387, %v1945
  %1947 = vadd.xlane.f32.xlu0 %v1946
  %v1948 = vpop.xlane.xlu0 %1947
  %v1949 = vsel %vm57, %v1395, 0.0
  %v1950 = vadd.f32 %v1393, %v1949
  %1951 = vadd.xlane.f32.xlu0 %v1950
  %v1952 = vpop.xlane.xlu0 %1951
  %v1953 = vsel %vm57, %v1401, 0.0
  %v1954 = vadd.f32 %v1399, %v1953
  %1955 = vadd.xlane.f32.xlu0 %v1954
  %v1956 = vpop.xlane.xlu0 %1955
  %v1957 = vsel %vm57, %v1407, 0.0
  %v1958 = vadd.f32 %v1405, %v1957
  %1959 = vadd.xlane.f32.xlu0 %v1958
  %v1960 = vpop.xlane.xlu0 %1959
  %v1961 = vsel %vm57, %v1413, 0.0
  %v1962 = vadd.f32 %v1411, %v1961
  %1963 = vadd.xlane.f32.xlu0 %v1962
  %v1964 = vpop.xlane.xlu0 %1963
  %v1965 = vsel %vm57, %v1419, 0.0
  %v1966 = vadd.f32 %v1417, %v1965
  %1967 = vadd.xlane.f32.xlu0 %v1966
  %v1968 = vpop.xlane.xlu0 %1967
  %v1969 = vsel %vm57, %v1425, 0.0
  %v1970 = vadd.f32 %v1423, %v1969
  %1971 = vadd.xlane.f32.xlu0 %v1970
  %v1972 = vpop.xlane.xlu0 %1971
  %v1973 = vsel %vm57, %v1431, 0.0
  %v1974 = vadd.f32 %v1429, %v1973
  %1975 = vadd.xlane.f32.xlu0 %v1974
  %v1976 = vpop.xlane.xlu0 %1975
  %v1977 = vsel %vm57, %v1437, 0.0
  %v1978 = vadd.f32 %v1435, %v1977
  %1979 = vadd.xlane.f32.xlu0 %v1978
  %v1980 = vpop.xlane.xlu0 %1979
  %v1981 = vsel %vm57, %v1443, 0.0
  %v1982 = vadd.f32 %v1441, %v1981
  %1983 = vadd.xlane.f32.xlu0 %v1982
  %v1984 = vpop.xlane.xlu0 %1983
  %v1985 = vsel %vm57, %v1449, 0.0
  %v1986 = vadd.f32 %v1447, %v1985
  %1987 = vadd.xlane.f32.xlu0 %v1986
  %v1988 = vpop.xlane.xlu0 %1987
  %v1989 = vsel %vm57, %v1455, 0.0
  %v1990 = vadd.f32 %v1453, %v1989
  %1991 = vadd.xlane.f32.xlu0 %v1990
  %v1992 = vpop.xlane.xlu0 %1991
  %v1993 = vsel %vm57, %v1461, 0.0
  %v1994 = vadd.f32 %v1459, %v1993
  %1995 = vadd.xlane.f32.xlu0 %v1994
  %v1996 = vpop.xlane.xlu0 %1995
  %v1997 = vsel %vm57, %v1467, 0.0
  %v1998 = vadd.f32 %v1465, %v1997
  %1999 = vadd.xlane.f32.xlu0 %v1998
  %v2000 = vpop.xlane.xlu0 %1999
  %v2001 = vsel %vm57, %v1473, 0.0
  %v2002 = vadd.f32 %v1471, %v2001
  %2003 = vadd.xlane.f32.xlu0 %v2002
  %v2004 = vpop.xlane.xlu0 %2003
  %v2005 = vsel %vm57, %v1479, 0.0
  %v2006 = vadd.f32 %v1477, %v2005
  %2007 = vadd.xlane.f32.xlu0 %v2006
  %v2008 = vpop.xlane.xlu0 %2007
  %v2009 = vsel %vm57, %v1485, 0.0
  %v2010 = vadd.f32 %v1483, %v2009
  %2011 = vadd.xlane.f32.xlu0 %v2010
  %v2012 = vpop.xlane.xlu0 %2011
  %v2013 = vsel %vm57, %v1491, 0.0
  %v2014 = vadd.f32 %v1489, %v2013
  %2015 = vadd.xlane.f32.xlu0 %v2014
  %v2016 = vpop.xlane.xlu0 %2015
  %v2017 = vsel %vm57, %v1497, 0.0
  %v2018 = vadd.f32 %v1495, %v2017
  %2019 = vadd.xlane.f32.xlu0 %v2018
  %v2020 = vpop.xlane.xlu0 %2019
  %v2021 = vsel %vm57, %v1503, 0.0
  %v2022 = vadd.f32 %v1501, %v2021
  %2023 = vadd.xlane.f32.xlu0 %v2022
  %v2024 = vpop.xlane.xlu0 %2023
  %v2025 = vsel %vm57, %v1509, 0.0
  %v2026 = vadd.f32 %v1507, %v2025
  %2027 = vadd.xlane.f32.xlu0 %v2026
  %v2028 = vpop.xlane.xlu0 %2027
  %v2029 = vsel %vm57, %v1515, 0.0
  %v2030 = vadd.f32 %v1513, %v2029
  %2031 = vadd.xlane.f32.xlu0 %v2030
  %v2032 = vpop.xlane.xlu0 %2031
  %v2033 = vsel %vm57, %v1521, 0.0
  %v2034 = vadd.f32 %v1519, %v2033
  %2035 = vadd.xlane.f32.xlu0 %v2034
  %v2036 = vpop.xlane.xlu0 %2035
  %v2037 = vsel %vm57, %v1527, 0.0
  %v2038 = vadd.f32 %v1525, %v2037
  %2039 = vadd.xlane.f32.xlu0 %v2038
  %v2040 = vpop.xlane.xlu0 %2039
  %v2041 = vsel %vm57, %v1533, 0.0
  %v2042 = vadd.f32 %v1531, %v2041
  %2043 = vadd.xlane.f32.xlu0 %v2042
  %v2044 = vpop.xlane.xlu0 %2043
  %v2045 = vsel %vm57, %v1539, 0.0
  %v2046 = vadd.f32 %v1537, %v2045
  %2047 = vadd.xlane.f32.xlu0 %v2046
  %v2048 = vpop.xlane.xlu0 %2047
  %v2049 = vsel %vm57, %v1545, 0.0
  %v2050 = vadd.f32 %v1543, %v2049
  %2051 = vadd.xlane.f32.xlu0 %v2050
  %v2052 = vpop.xlane.xlu0 %2051
  %v2053 = vsel %vm57, %v1551, 0.0
  %v2054 = vadd.f32 %v1549, %v2053
  %2055 = vadd.xlane.f32.xlu0 %v2054
  %v2056 = vpop.xlane.xlu0 %2055
  %v2057 = vsel %vm57, %v1557, 0.0
  %v2058 = vadd.f32 %v1555, %v2057
  %2059 = vadd.xlane.f32.xlu0 %v2058
  %v2060 = vpop.xlane.xlu0 %2059
  %v2061 = vsel %vm57, %v1563, 0.0
  %v2062 = vadd.f32 %v1561, %v2061
  %2063 = vadd.xlane.f32.xlu0 %v2062
  %v2064 = vpop.xlane.xlu0 %2063
  %v2065 = vsel %vm57, %v1569, 0.0
  %v2066 = vadd.f32 %v1567, %v2065
  %2067 = vadd.xlane.f32.xlu0 %v2066
  %v2068 = vpop.xlane.xlu0 %2067
  %v2069 = vsel %vm57, %v1575, 0.0
  %v2070 = vadd.f32 %v1573, %v2069
  %2071 = vadd.xlane.f32.xlu0 %v2070
  %v2072 = vpop.xlane.xlu0 %2071
  %v2073 = vsel %vm57, %v1581, 0.0
  %v2074 = vadd.f32 %v1579, %v2073
  %2075 = vadd.xlane.f32.xlu0 %v2074
  %v2076 = vpop.xlane.xlu0 %2075
  %v2077 = vsel %vm57, %v1587, 0.0
  %v2078 = vadd.f32 %v1585, %v2077
  %2079 = vadd.xlane.f32.xlu0 %v2078
  %v2080 = vpop.xlane.xlu0 %2079
  %v2081 = vsel %vm57, %v1593, 0.0
  %v2082 = vadd.f32 %v1591, %v2081
  %2083 = vadd.xlane.f32.xlu0 %v2082
  %v2084 = vpop.xlane.xlu0 %2083
  %v2085 = vsel %vm57, %v1599, 0.0
  %v2086 = vadd.f32 %v1597, %v2085
  %2087 = vadd.xlane.f32.xlu0 %v2086
  %v2088 = vpop.xlane.xlu0 %2087
  %v2089 = vsel %vm57, %v1605, 0.0
  %v2090 = vadd.f32 %v1603, %v2089
  %2091 = vadd.xlane.f32.xlu0 %v2090
  %v2092 = vpop.xlane.xlu0 %2091
  %v2093 = vsel %vm57, %v1611, 0.0
  %v2094 = vadd.f32 %v1609, %v2093
  %2095 = vadd.xlane.f32.xlu0 %v2094
  %v2096 = vpop.xlane.xlu0 %2095
  %v2097 = vsel %vm57, %v1617, 0.0
  %v2098 = vadd.f32 %v1615, %v2097
  %2099 = vadd.xlane.f32.xlu0 %v2098
  %v2100 = vpop.xlane.xlu0 %2099
  %v2101 = vsel %vm57, %v1623, 0.0
  %v2102 = vadd.f32 %v1621, %v2101
  %2103 = vadd.xlane.f32.xlu0 %v2102
  %v2104 = vpop.xlane.xlu0 %2103
  %v2105 = vsel %vm57, %v1629, 0.0
  %v2106 = vadd.f32 %v1627, %v2105
  %2107 = vadd.xlane.f32.xlu0 %v2106
  %v2108 = vpop.xlane.xlu0 %2107
  %v2109 = vsel %vm57, %v1635, 0.0
  %v2110 = vadd.f32 %v1633, %v2109
  %2111 = vadd.xlane.f32.xlu0 %v2110
  %v2112 = vpop.xlane.xlu0 %2111
  %v2113 = vsel %vm57, %v1641, 0.0
  %v2114 = vadd.f32 %v1639, %v2113
  %2115 = vadd.xlane.f32.xlu0 %v2114
  %v2116 = vpop.xlane.xlu0 %2115
  %v2117 = vsel %vm57, %v1647, 0.0
  %v2118 = vadd.f32 %v1645, %v2117
  %2119 = vadd.xlane.f32.xlu0 %v2118
  %v2120 = vpop.xlane.xlu0 %2119
  %v2121 = vsel %vm57, %v1653, 0.0
  %v2122 = vadd.f32 %v1651, %v2121
  %2123 = vadd.xlane.f32.xlu0 %v2122
  %v2124 = vpop.xlane.xlu0 %2123
  %v2125 = vsel %vm57, %v1659, 0.0
  %v2126 = vadd.f32 %v1657, %v2125
  %2127 = vadd.xlane.f32.xlu0 %v2126
  %v2128 = vpop.xlane.xlu0 %2127
  %v2129 = vsel %vm57, %v1665, 0.0
  %v2130 = vadd.f32 %v1663, %v2129
  %2131 = vadd.xlane.f32.xlu0 %v2130
  %v2132 = vpop.xlane.xlu0 %2131
  %v2133 = vsel %vm57, %v1671, 0.0
  %v2134 = vadd.f32 %v1669, %v2133
  %2135 = vadd.xlane.f32.xlu0 %v2134
  %v2136 = vpop.xlane.xlu0 %2135
  %v2137 = vsel %vm57, %v1677, 0.0
  %v2138 = vadd.f32 %v1675, %v2137
  %2139 = vadd.xlane.f32.xlu0 %v2138
  %v2140 = vpop.xlane.xlu0 %2139
  %v2141 = vsel %vm57, %v1683, 0.0
  %v2142 = vadd.f32 %v1681, %v2141
  %2143 = vadd.xlane.f32.xlu0 %v2142
  %v2144 = vpop.xlane.xlu0 %2143
  %v2145 = vsel %vm57, %v1689, 0.0
  %v2146 = vadd.f32 %v1687, %v2145
  %2147 = vadd.xlane.f32.xlu0 %v2146
  %v2148 = vpop.xlane.xlu0 %2147
  %v2149 = vsel %vm57, %v1695, 0.0
  %v2150 = vadd.f32 %v1693, %v2149
  %2151 = vadd.xlane.f32.xlu0 %v2150
  %v2152 = vpop.xlane.xlu0 %2151
  %v2153 = vsel %vm57, %v1701, 0.0
  %v2154 = vadd.f32 %v1699, %v2153
  %2155 = vadd.xlane.f32.xlu0 %v2154
  %v2156 = vpop.xlane.xlu0 %2155
  %v2157 = vsel %vm57, %v1707, 0.0
  %v2158 = vadd.f32 %v1705, %v2157
  %2159 = vadd.xlane.f32.xlu0 %v2158
  %v2160 = vpop.xlane.xlu0 %2159
  %v2161 = vsel %vm57, %v1713, 0.0
  %v2162 = vadd.f32 %v1711, %v2161
  %2163 = vadd.xlane.f32.xlu0 %v2162
  %v2164 = vpop.xlane.xlu0 %2163
  %v2165 = vsel %vm57, %v1719, 0.0
  %v2166 = vadd.f32 %v1717, %v2165
  %2167 = vadd.xlane.f32.xlu0 %v2166
  %v2168 = vpop.xlane.xlu0 %2167
  %v2169 = vsel %vm57, %v1725, 0.0
  %v2170 = vadd.f32 %v1723, %v2169
  %2171 = vadd.xlane.f32.xlu0 %v2170
  %v2172 = vpop.xlane.xlu0 %2171
  %v2173 = vsel %vm57, %v1731, 0.0
  %v2174 = vadd.f32 %v1729, %v2173
  %2175 = vadd.xlane.f32.xlu0 %v2174
  %v2176 = vpop.xlane.xlu0 %2175
  %v2177 = vsel %vm57, %v1737, 0.0
  %v2178 = vadd.f32 %v1735, %v2177
  %2179 = vadd.xlane.f32.xlu0 %v2178
  %v2180 = vpop.xlane.xlu0 %2179
  %v2181 = vsel %vm57, %v1743, 0.0
  %v2182 = vadd.f32 %v1741, %v2181
  %2183 = vadd.xlane.f32.xlu0 %v2182
  %v2184 = vpop.xlane.xlu0 %2183
  %v2185 = vsel %vm57, %v1749, 0.0
  %v2186 = vadd.f32 %v1747, %v2185
  %2187 = vadd.xlane.f32.xlu0 %v2186
  %v2188 = vpop.xlane.xlu0 %2187
  %v2189 = vsel %vm57, %v1755, 0.0
  %v2190 = vadd.f32 %v1753, %v2189
  %2191 = vadd.xlane.f32.xlu0 %v2190
  %v2192 = vpop.xlane.xlu0 %2191
  %v2193 = vsel %vm57, %v1761, 0.0
  %v2194 = vadd.f32 %v1759, %v2193
  %2195 = vadd.xlane.f32.xlu0 %v2194
  %v2196 = vpop.xlane.xlu0 %2195
  %v2197 = vsel %vm57, %v1767, 0.0
  %v2198 = vadd.f32 %v1765, %v2197
  %2199 = vadd.xlane.f32.xlu0 %v2198
  %v2200 = vpop.xlane.xlu0 %2199
  %v2201 = vsel %vm57, %v1773, 0.0
  %v2202 = vadd.f32 %v1771, %v2201
  %2203 = vadd.xlane.f32.xlu0 %v2202
  %v2204 = vpop.xlane.xlu0 %2203
  %v2205 = vsel %vm57, %v1779, 0.0
  %v2206 = vadd.f32 %v1777, %v2205
  %2207 = vadd.xlane.f32.xlu0 %v2206
  %v2208 = vpop.xlane.xlu0 %2207
  %v2209 = vsel %vm57, %v1785, 0.0
  %v2210 = vadd.f32 %v1783, %v2209
  %2211 = vadd.xlane.f32.xlu0 %v2210
  %v2212 = vpop.xlane.xlu0 %2211
  %v2213 = vsel %vm57, %v1791, 0.0
  %v2214 = vadd.f32 %v1789, %v2213
  %2215 = vadd.xlane.f32.xlu0 %v2214
  %v2216 = vpop.xlane.xlu0 %2215
  %v2217 = vsel %vm57, %v1797, 0.0
  %v2218 = vadd.f32 %v1795, %v2217
  %2219 = vadd.xlane.f32.xlu0 %v2218
  %v2220 = vpop.xlane.xlu0 %2219
  %v2221 = vsel %vm57, %v1803, 0.0
  %v2222 = vadd.f32 %v1801, %v2221
  %2223 = vadd.xlane.f32.xlu0 %v2222
  %v2224 = vpop.xlane.xlu0 %2223
  %v2225 = vsel %vm57, %v1809, 0.0
  %v2226 = vadd.f32 %v1807, %v2225
  %2227 = vadd.xlane.f32.xlu0 %v2226
  %v2228 = vpop.xlane.xlu0 %2227
  %v2229 = vsel %vm57, %v1815, 0.0
  %v2230 = vadd.f32 %v1813, %v2229
  %2231 = vadd.xlane.f32.xlu0 %v2230
  %v2232 = vpop.xlane.xlu0 %2231
  %v2233 = vsel %vm57, %v1821, 0.0
  %v2234 = vadd.f32 %v1819, %v2233
  %2235 = vadd.xlane.f32.xlu0 %v2234
  %v2236 = vpop.xlane.xlu0 %2235
  %v2237 = vsel %vm57, %v1827, 0.0
  %v2238 = vadd.f32 %v1825, %v2237
  %2239 = vadd.xlane.f32.xlu0 %v2238
  %v2240 = vpop.xlane.xlu0 %2239
  %v2241 = vsel %vm57, %v1833, 0.0
  %v2242 = vadd.f32 %v1831, %v2241
  %2243 = vadd.xlane.f32.xlu0 %v2242
  %v2244 = vpop.xlane.xlu0 %2243
  %v2245 = vsel %vm57, %v1839, 0.0
  %v2246 = vadd.f32 %v1837, %v2245
  %2247 = vadd.xlane.f32.xlu0 %v2246
  %v2248 = vpop.xlane.xlu0 %2247
  %v2249 = vmul.f32 %v1844, 0.0051020407
  %v2250 = vmul.f32 %v1848, 0.0051020407
  %v2251 = vmul.f32 %v1852, 0.0051020407
  %v2252 = vmul.f32 %v1856, 0.0051020407
  %v2253 = vmul.f32 %v1860, 0.0051020407
  %v2254 = vmul.f32 %v1864, 0.0051020407
  %v2255 = vmul.f32 %v1868, 0.0051020407
  %v2256 = vmul.f32 %v1872, 0.0051020407
  %v2257 = vmul.f32 %v1876, 0.0051020407
  %v2258 = vmul.f32 %v1880, 0.0051020407
  %v2259 = vmul.f32 %v1884, 0.0051020407
  %v2260 = vmul.f32 %v1888, 0.0051020407
  %v2261 = vmul.f32 %v1892, 0.0051020407
  %v2262 = vmul.f32 %v1896, 0.0051020407
  %v2263 = vmul.f32 %v1900, 0.0051020407
  %v2264 = vmul.f32 %v1904, 0.0051020407
  %v2265 = vmul.f32 %v1908, 0.0051020407
  %v2266 = vmul.f32 %v1912, 0.0051020407
  %v2267 = vmul.f32 %v1916, 0.0051020407
  %v2268 = vmul.f32 %v1920, 0.0051020407
  %v2269 = vmul.f32 %v1924, 0.0051020407
  %v2270 = vmul.f32 %v1928, 0.0051020407
  %v2271 = vmul.f32 %v1932, 0.0051020407
  %v2272 = vmul.f32 %v1936, 0.0051020407
  %v2273 = vmul.f32 %v1940, 0.0051020407
  %v2274 = vmul.f32 %v1944, 0.0051020407
  %v2275 = vmul.f32 %v1948, 0.0051020407
  %v2276 = vmul.f32 %v1952, 0.0051020407
  %v2277 = vmul.f32 %v1956, 0.0051020407
  %v2278 = vmul.f32 %v1960, 0.0051020407
  %v2279 = vmul.f32 %v1964, 0.0051020407
  %v2280 = vmul.f32 %v1968, 0.0051020407
  %v2281 = vmul.f32 %v1972, 0.0051020407
  %v2282 = vmul.f32 %v1976, 0.0051020407
  %v2283 = vmul.f32 %v1980, 0.0051020407
  %v2284 = vmul.f32 %v1984, 0.0051020407
  %v2285 = vmul.f32 %v1988, 0.0051020407
  %v2286 = vmul.f32 %v1992, 0.0051020407
  %v2287 = vmul.f32 %v1996, 0.0051020407
  %v2288 = vmul.f32 %v2000, 0.0051020407
  %v2289 = vmul.f32 %v2004, 0.0051020407
  %v2290 = vmul.f32 %v2008, 0.0051020407
  %v2291 = vmul.f32 %v2012, 0.0051020407
  %v2292 = vmul.f32 %v2016, 0.0051020407
  %v2293 = vmul.f32 %v2020, 0.0051020407
  %v2294 = vmul.f32 %v2024, 0.0051020407
  %v2295 = vmul.f32 %v2028, 0.0051020407
  %v2296 = vmul.f32 %v2032, 0.0051020407
  %v2297 = vmul.f32 %v2036, 0.0051020407
  %v2298 = vmul.f32 %v2040, 0.0051020407
  %v2299 = vmul.f32 %v2044, 0.0051020407
  %v2300 = vmul.f32 %v2048, 0.0051020407
  %v2301 = vmul.f32 %v2052, 0.0051020407
  %v2302 = vmul.f32 %v2056, 0.0051020407
  %v2303 = vmul.f32 %v2060, 0.0051020407
  %v2304 = vmul.f32 %v2064, 0.0051020407
  %v2305 = vmul.f32 %v2068, 0.0051020407
  %v2306 = vmul.f32 %v2072, 0.0051020407
  %v2307 = vmul.f32 %v2076, 0.0051020407
  %v2308 = vmul.f32 %v2080, 0.0051020407
  %v2309 = vmul.f32 %v2084, 0.0051020407
  %v2310 = vmul.f32 %v2088, 0.0051020407
  %v2311 = vmul.f32 %v2092, 0.0051020407
  %v2312 = vmul.f32 %v2096, 0.0051020407
  %v2313 = vmul.f32 %v2100, 0.0051020407
  %v2314 = vmul.f32 %v2104, 0.0051020407
  %v2315 = vmul.f32 %v2108, 0.0051020407
  %v2316 = vmul.f32 %v2112, 0.0051020407
  %v2317 = vmul.f32 %v2116, 0.0051020407
  %v2318 = vmul.f32 %v2120, 0.0051020407
  %v2319 = vmul.f32 %v2124, 0.0051020407
  %v2320 = vmul.f32 %v2128, 0.0051020407
  %v2321 = vmul.f32 %v2132, 0.0051020407
  %v2322 = vmul.f32 %v2136, 0.0051020407
  %v2323 = vmul.f32 %v2140, 0.0051020407
  %v2324 = vmul.f32 %v2144, 0.0051020407
  %v2325 = vmul.f32 %v2148, 0.0051020407
  %v2326 = vmul.f32 %v2152, 0.0051020407
  %v2327 = vmul.f32 %v2156, 0.0051020407
  %v2328 = vmul.f32 %v2160, 0.0051020407
  %v2329 = vmul.f32 %v2164, 0.0051020407
  %v2330 = vmul.f32 %v2168, 0.0051020407
  %v2331 = vmul.f32 %v2172, 0.0051020407
  %v2332 = vmul.f32 %v2176, 0.0051020407
  %v2333 = vmul.f32 %v2180, 0.0051020407
  %v2334 = vmul.f32 %v2184, 0.0051020407
  %v2335 = vmul.f32 %v2188, 0.0051020407
  %v2336 = vmul.f32 %v2192, 0.0051020407
  %v2337 = vmul.f32 %v2196, 0.0051020407
  %v2338 = vmul.f32 %v2200, 0.0051020407
  %v2339 = vmul.f32 %v2204, 0.0051020407
  %v2340 = vmul.f32 %v2208, 0.0051020407
  %v2341 = vmul.f32 %v2212, 0.0051020407
  %v2342 = vmul.f32 %v2216, 0.0051020407
  %v2343 = vmul.f32 %v2220, 0.0051020407
  %v2344 = vmul.f32 %v2224, 0.0051020407
  %v2345 = vmul.f32 %v2228, 0.0051020407
  %v2346 = vmul.f32 %v2232, 0.0051020407
  %v2347 = vmul.f32 %v2236, 0.0051020407
  %v2348 = vmul.f32 %v2240, 0.0051020407
  %v2349 = vmul.f32 %v2244, 0.0051020407
  %v2350 = vmul.f32 %v2248, 0.0051020407
  %v2351 = vmul.f32 %v1231, %v1231
  %v2352 = vmul.f32 %v1233, %v1233
  %v2353 = vmul.f32 %v1237, %v1237
  %v2354 = vmul.f32 %v1239, %v1239
  %v2355 = vmul.f32 %v1243, %v1243
  %v2356 = vmul.f32 %v1245, %v1245
  %v2357 = vmul.f32 %v1249, %v1249
  %v2358 = vmul.f32 %v1251, %v1251
  %v2359 = vmul.f32 %v1255, %v1255
  %v2360 = vmul.f32 %v1257, %v1257
  %v2361 = vmul.f32 %v1261, %v1261
  %v2362 = vmul.f32 %v1263, %v1263
  %v2363 = vmul.f32 %v1267, %v1267
  %v2364 = vmul.f32 %v1269, %v1269
  %v2365 = vmul.f32 %v1273, %v1273
  %v2366 = vmul.f32 %v1275, %v1275
  %v2367 = vmul.f32 %v1279, %v1279
  %v2368 = vmul.f32 %v1281, %v1281
  %v2369 = vmul.f32 %v1285, %v1285
  %v2370 = vmul.f32 %v1287, %v1287
  %v2371 = vmul.f32 %v1291, %v1291
  %v2372 = vmul.f32 %v1293, %v1293
  %v2373 = vmul.f32 %v1297, %v1297
  %v2374 = vmul.f32 %v1299, %v1299
  %v2375 = vmul.f32 %v1303, %v1303
  %v2376 = vmul.f32 %v1305, %v1305
  %v2377 = vmul.f32 %v1309, %v1309
  %v2378 = vmul.f32 %v1311, %v1311
  %v2379 = vmul.f32 %v1315, %v1315
  %v2380 = vmul.f32 %v1317, %v1317
  %v2381 = vmul.f32 %v1321, %v1321
  %v2382 = vmul.f32 %v1323, %v1323
  %v2383 = vmul.f32 %v1327, %v1327
  %v2384 = vmul.f32 %v1329, %v1329
  %v2385 = vmul.f32 %v1333, %v1333
  %v2386 = vmul.f32 %v1335, %v1335
  %v2387 = vmul.f32 %v1339, %v1339
  %v2388 = vmul.f32 %v1341, %v1341
  %v2389 = vmul.f32 %v1345, %v1345
  %v2390 = vmul.f32 %v1347, %v1347
  %v2391 = vmul.f32 %v1351, %v1351
  %v2392 = vmul.f32 %v1353, %v1353
  %v2393 = vmul.f32 %v1357, %v1357
  %v2394 = vmul.f32 %v1359, %v1359
  %v2395 = vmul.f32 %v1363, %v1363
  %v2396 = vmul.f32 %v1365, %v1365
  %v2397 = vmul.f32 %v1369, %v1369
  %v2398 = vmul.f32 %v1371, %v1371
  %v2399 = vmul.f32 %v1375, %v1375
  %v2400 = vmul.f32 %v1377, %v1377
  %v2401 = vmul.f32 %v1381, %v1381
  %v2402 = vmul.f32 %v1383, %v1383
  %v2403 = vmul.f32 %v1387, %v1387
  %v2404 = vmul.f32 %v1389, %v1389
  %v2405 = vmul.f32 %v1393, %v1393
  %v2406 = vmul.f32 %v1395, %v1395
  %v2407 = vmul.f32 %v1399, %v1399
  %v2408 = vmul.f32 %v1401, %v1401
  %v2409 = vmul.f32 %v1405, %v1405
  %v2410 = vmul.f32 %v1407, %v1407
  %v2411 = vmul.f32 %v1411, %v1411
  %v2412 = vmul.f32 %v1413, %v1413
  %v2413 = vmul.f32 %v1417, %v1417
  %v2414 = vmul.f32 %v1419, %v1419
  %v2415 = vmul.f32 %v1423, %v1423
  %v2416 = vmul.f32 %v1425, %v1425
  %v2417 = vmul.f32 %v1429, %v1429
  %v2418 = vmul.f32 %v1431, %v1431
  %v2419 = vmul.f32 %v1435, %v1435
  %v2420 = vmul.f32 %v1437, %v1437
  %v2421 = vmul.f32 %v1441, %v1441
  %v2422 = vmul.f32 %v1443, %v1443
  %v2423 = vmul.f32 %v1447, %v1447
  %v2424 = vmul.f32 %v1449, %v1449
  %v2425 = vmul.f32 %v1453, %v1453
  %v2426 = vmul.f32 %v1455, %v1455
  %v2427 = vmul.f32 %v1459, %v1459
  %v2428 = vmul.f32 %v1461, %v1461
  %v2429 = vmul.f32 %v1465, %v1465
  %v2430 = vmul.f32 %v1467, %v1467
  %v2431 = vmul.f32 %v1471, %v1471
  %v2432 = vmul.f32 %v1473, %v1473
  %v2433 = vmul.f32 %v1477, %v1477
  %v2434 = vmul.f32 %v1479, %v1479
  %v2435 = vmul.f32 %v1483, %v1483
  %v2436 = vmul.f32 %v1485, %v1485
  %v2437 = vmul.f32 %v1489, %v1489
  %v2438 = vmul.f32 %v1491, %v1491
  %v2439 = vmul.f32 %v1495, %v1495
  %v2440 = vmul.f32 %v1497, %v1497
  %v2441 = vmul.f32 %v1501, %v1501
  %v2442 = vmul.f32 %v1503, %v1503
  %v2443 = vmul.f32 %v1507, %v1507
  %v2444 = vmul.f32 %v1509, %v1509
  %v2445 = vmul.f32 %v1513, %v1513
  %v2446 = vmul.f32 %v1515, %v1515
  %v2447 = vmul.f32 %v1519, %v1519
  %v2448 = vmul.f32 %v1521, %v1521
  %v2449 = vmul.f32 %v1525, %v1525
  %v2450 = vmul.f32 %v1527, %v1527
  %v2451 = vmul.f32 %v1531, %v1531
  %v2452 = vmul.f32 %v1533, %v1533
  %v2453 = vmul.f32 %v1537, %v1537
  %v2454 = vmul.f32 %v1539, %v1539
  %v2455 = vmul.f32 %v1543, %v1543
  %v2456 = vmul.f32 %v1545, %v1545
  %v2457 = vmul.f32 %v1549, %v1549
  %v2458 = vmul.f32 %v1551, %v1551
  %v2459 = vmul.f32 %v1555, %v1555
  %v2460 = vmul.f32 %v1557, %v1557
  %v2461 = vmul.f32 %v1561, %v1561
  %v2462 = vmul.f32 %v1563, %v1563
  %v2463 = vmul.f32 %v1567, %v1567
  %v2464 = vmul.f32 %v1569, %v1569
  %v2465 = vmul.f32 %v1573, %v1573
  %v2466 = vmul.f32 %v1575, %v1575
  %v2467 = vmul.f32 %v1579, %v1579
  %v2468 = vmul.f32 %v1581, %v1581
  %v2469 = vmul.f32 %v1585, %v1585
  %v2470 = vmul.f32 %v1587, %v1587
  %v2471 = vmul.f32 %v1591, %v1591
  %v2472 = vmul.f32 %v1593, %v1593
  %v2473 = vmul.f32 %v1597, %v1597
  %v2474 = vmul.f32 %v1599, %v1599
  %v2475 = vmul.f32 %v1603, %v1603
  %v2476 = vmul.f32 %v1605, %v1605
  %v2477 = vmul.f32 %v1609, %v1609
  %v2478 = vmul.f32 %v1611, %v1611
  %v2479 = vmul.f32 %v1615, %v1615
  %v2480 = vmul.f32 %v1617, %v1617
  %v2481 = vmul.f32 %v1621, %v1621
  %v2482 = vmul.f32 %v1623, %v1623
  %v2483 = vmul.f32 %v1627, %v1627
  %v2484 = vmul.f32 %v1629, %v1629
  %v2485 = vmul.f32 %v1633, %v1633
  %v2486 = vmul.f32 %v1635, %v1635
  %v2487 = vmul.f32 %v1639, %v1639
  %v2488 = vmul.f32 %v1641, %v1641
  %v2489 = vmul.f32 %v1645, %v1645
  %v2490 = vmul.f32 %v1647, %v1647
  %v2491 = vmul.f32 %v1651, %v1651
  %v2492 = vmul.f32 %v1653, %v1653
  %v2493 = vmul.f32 %v1657, %v1657
  %v2494 = vmul.f32 %v1659, %v1659
  %v2495 = vmul.f32 %v1663, %v1663
  %v2496 = vmul.f32 %v1665, %v1665
  %v2497 = vmul.f32 %v1669, %v1669
  %v2498 = vmul.f32 %v1671, %v1671
  %v2499 = vmul.f32 %v1675, %v1675
  %v2500 = vmul.f32 %v1677, %v1677
  %v2501 = vmul.f32 %v1681, %v1681
  %v2502 = vmul.f32 %v1683, %v1683
  %v2503 = vmul.f32 %v1687, %v1687
  %v2504 = vmul.f32 %v1689, %v1689
  %v2505 = vmul.f32 %v1693, %v1693
  %v2506 = vmul.f32 %v1695, %v1695
  %v2507 = vmul.f32 %v1699, %v1699
  %v2508 = vmul.f32 %v1701, %v1701
  %v2509 = vmul.f32 %v1705, %v1705
  %v2510 = vmul.f32 %v1707, %v1707
  %v2511 = vmul.f32 %v1711, %v1711
  %v2512 = vmul.f32 %v1713, %v1713
  %v2513 = vmul.f32 %v1717, %v1717
  %v2514 = vmul.f32 %v1719, %v1719
  %v2515 = vmul.f32 %v1723, %v1723
  %v2516 = vmul.f32 %v1725, %v1725
  %v2517 = vmul.f32 %v1729, %v1729
  %v2518 = vmul.f32 %v1731, %v1731
  %v2519 = vmul.f32 %v1735, %v1735
  %v2520 = vmul.f32 %v1737, %v1737
  %v2521 = vmul.f32 %v1741, %v1741
  %v2522 = vmul.f32 %v1743, %v1743
  %v2523 = vmul.f32 %v1747, %v1747
  %v2524 = vmul.f32 %v1749, %v1749
  %v2525 = vmul.f32 %v1753, %v1753
  %v2526 = vmul.f32 %v1755, %v1755
  %v2527 = vmul.f32 %v1759, %v1759
  %v2528 = vmul.f32 %v1761, %v1761
  %v2529 = vmul.f32 %v1765, %v1765
  %v2530 = vmul.f32 %v1767, %v1767
  %v2531 = vmul.f32 %v1771, %v1771
  %v2532 = vmul.f32 %v1773, %v1773
  %v2533 = vmul.f32 %v1777, %v1777
  %v2534 = vmul.f32 %v1779, %v1779
  %v2535 = vmul.f32 %v1783, %v1783
  %v2536 = vmul.f32 %v1785, %v1785
  %v2537 = vmul.f32 %v1789, %v1789
  %v2538 = vmul.f32 %v1791, %v1791
  %v2539 = vmul.f32 %v1795, %v1795
  %v2540 = vmul.f32 %v1797, %v1797
  %v2541 = vmul.f32 %v1801, %v1801
  %v2542 = vmul.f32 %v1803, %v1803
  %v2543 = vmul.f32 %v1807, %v1807
  %v2544 = vmul.f32 %v1809, %v1809
  %v2545 = vmul.f32 %v1813, %v1813
  %v2546 = vmul.f32 %v1815, %v1815
  %v2547 = vmul.f32 %v1819, %v1819
  %v2548 = vmul.f32 %v1821, %v1821
  %v2549 = vmul.f32 %v1825, %v1825
  %v2550 = vmul.f32 %v1827, %v1827
  %v2551 = vmul.f32 %v1831, %v1831
  %v2552 = vmul.f32 %v1833, %v1833
  %v2553 = vmul.f32 %v1837, %v1837
  %v2554 = vmul.f32 %v1839, %v1839
  %v2555 = vsel %vm57, %v2352, 0.0
  %v2556 = vadd.f32 %v2351, %v2555
  %2557 = vadd.xlane.f32.xlu0 %v2556
  %v2558 = vpop.xlane.xlu0 %2557
  %v2559 = vsel %vm57, %v2354, 0.0
  %v2560 = vadd.f32 %v2353, %v2559
  %2561 = vadd.xlane.f32.xlu0 %v2560
  %v2562 = vpop.xlane.xlu0 %2561
  %v2563 = vsel %vm57, %v2356, 0.0
  %v2564 = vadd.f32 %v2355, %v2563
  %2565 = vadd.xlane.f32.xlu0 %v2564
  %v2566 = vpop.xlane.xlu0 %2565
  %v2567 = vsel %vm57, %v2358, 0.0
  %v2568 = vadd.f32 %v2357, %v2567
  %2569 = vadd.xlane.f32.xlu0 %v2568
  %v2570 = vpop.xlane.xlu0 %2569
  %v2571 = vsel %vm57, %v2360, 0.0
  %v2572 = vadd.f32 %v2359, %v2571
  %2573 = vadd.xlane.f32.xlu0 %v2572
  %v2574 = vpop.xlane.xlu0 %2573
  %v2575 = vsel %vm57, %v2362, 0.0
  %v2576 = vadd.f32 %v2361, %v2575
  %2577 = vadd.xlane.f32.xlu0 %v2576
  %v2578 = vpop.xlane.xlu0 %2577
  %v2579 = vsel %vm57, %v2364, 0.0
  %v2580 = vadd.f32 %v2363, %v2579
  %2581 = vadd.xlane.f32.xlu0 %v2580
  %v2582 = vpop.xlane.xlu0 %2581
  %v2583 = vsel %vm57, %v2366, 0.0
  %v2584 = vadd.f32 %v2365, %v2583
  %2585 = vadd.xlane.f32.xlu0 %v2584
  %v2586 = vpop.xlane.xlu0 %2585
  %v2587 = vsel %vm57, %v2368, 0.0
  %v2588 = vadd.f32 %v2367, %v2587
  %2589 = vadd.xlane.f32.xlu0 %v2588
  %v2590 = vpop.xlane.xlu0 %2589
  %v2591 = vsel %vm57, %v2370, 0.0
  %v2592 = vadd.f32 %v2369, %v2591
  %2593 = vadd.xlane.f32.xlu0 %v2592
  %v2594 = vpop.xlane.xlu0 %2593
  %v2595 = vsel %vm57, %v2372, 0.0
  %v2596 = vadd.f32 %v2371, %v2595
  %2597 = vadd.xlane.f32.xlu0 %v2596
  %v2598 = vpop.xlane.xlu0 %2597
  %v2599 = vsel %vm57, %v2374, 0.0
  %v2600 = vadd.f32 %v2373, %v2599
  %2601 = vadd.xlane.f32.xlu0 %v2600
  %v2602 = vpop.xlane.xlu0 %2601
  %v2603 = vsel %vm57, %v2376, 0.0
  %v2604 = vadd.f32 %v2375, %v2603
  %2605 = vadd.xlane.f32.xlu0 %v2604
  %v2606 = vpop.xlane.xlu0 %2605
  %v2607 = vsel %vm57, %v2378, 0.0
  %v2608 = vadd.f32 %v2377, %v2607
  %2609 = vadd.xlane.f32.xlu0 %v2608
  %v2610 = vpop.xlane.xlu0 %2609
  %v2611 = vsel %vm57, %v2380, 0.0
  %v2612 = vadd.f32 %v2379, %v2611
  %2613 = vadd.xlane.f32.xlu0 %v2612
  %v2614 = vpop.xlane.xlu0 %2613
  %v2615 = vsel %vm57, %v2382, 0.0
  %v2616 = vadd.f32 %v2381, %v2615
  %2617 = vadd.xlane.f32.xlu0 %v2616
  %v2618 = vpop.xlane.xlu0 %2617
  %v2619 = vsel %vm57, %v2384, 0.0
  %v2620 = vadd.f32 %v2383, %v2619
  %2621 = vadd.xlane.f32.xlu0 %v2620
  %v2622 = vpop.xlane.xlu0 %2621
  %v2623 = vsel %vm57, %v2386, 0.0
  %v2624 = vadd.f32 %v2385, %v2623
  %2625 = vadd.xlane.f32.xlu0 %v2624
  %v2626 = vpop.xlane.xlu0 %2625
  %v2627 = vsel %vm57, %v2388, 0.0
  %v2628 = vadd.f32 %v2387, %v2627
  %2629 = vadd.xlane.f32.xlu0 %v2628
  %v2630 = vpop.xlane.xlu0 %2629
  %v2631 = vsel %vm57, %v2390, 0.0
  %v2632 = vadd.f32 %v2389, %v2631
  %2633 = vadd.xlane.f32.xlu0 %v2632
  %v2634 = vpop.xlane.xlu0 %2633
  %v2635 = vsel %vm57, %v2392, 0.0
  %v2636 = vadd.f32 %v2391, %v2635
  %2637 = vadd.xlane.f32.xlu0 %v2636
  %v2638 = vpop.xlane.xlu0 %2637
  %v2639 = vsel %vm57, %v2394, 0.0
  %v2640 = vadd.f32 %v2393, %v2639
  %2641 = vadd.xlane.f32.xlu0 %v2640
  %v2642 = vpop.xlane.xlu0 %2641
  %v2643 = vsel %vm57, %v2396, 0.0
  %v2644 = vadd.f32 %v2395, %v2643
  %2645 = vadd.xlane.f32.xlu0 %v2644
  %v2646 = vpop.xlane.xlu0 %2645
  %v2647 = vsel %vm57, %v2398, 0.0
  %v2648 = vadd.f32 %v2397, %v2647
  %2649 = vadd.xlane.f32.xlu0 %v2648
  %v2650 = vpop.xlane.xlu0 %2649
  %v2651 = vsel %vm57, %v2400, 0.0
  %v2652 = vadd.f32 %v2399, %v2651
  %2653 = vadd.xlane.f32.xlu0 %v2652
  %v2654 = vpop.xlane.xlu0 %2653
  %v2655 = vsel %vm57, %v2402, 0.0
  %v2656 = vadd.f32 %v2401, %v2655
  %2657 = vadd.xlane.f32.xlu0 %v2656
  %v2658 = vpop.xlane.xlu0 %2657
  %v2659 = vsel %vm57, %v2404, 0.0
  %v2660 = vadd.f32 %v2403, %v2659
  %2661 = vadd.xlane.f32.xlu0 %v2660
  %v2662 = vpop.xlane.xlu0 %2661
  %v2663 = vsel %vm57, %v2406, 0.0
  %v2664 = vadd.f32 %v2405, %v2663
  %2665 = vadd.xlane.f32.xlu0 %v2664
  %v2666 = vpop.xlane.xlu0 %2665
  %v2667 = vsel %vm57, %v2408, 0.0
  %v2668 = vadd.f32 %v2407, %v2667
  %2669 = vadd.xlane.f32.xlu0 %v2668
  %v2670 = vpop.xlane.xlu0 %2669
  %v2671 = vsel %vm57, %v2410, 0.0
  %v2672 = vadd.f32 %v2409, %v2671
  %2673 = vadd.xlane.f32.xlu0 %v2672
  %v2674 = vpop.xlane.xlu0 %2673
  %v2675 = vsel %vm57, %v2412, 0.0
  %v2676 = vadd.f32 %v2411, %v2675
  %2677 = vadd.xlane.f32.xlu0 %v2676
  %v2678 = vpop.xlane.xlu0 %2677
  %v2679 = vsel %vm57, %v2414, 0.0
  %v2680 = vadd.f32 %v2413, %v2679
  %2681 = vadd.xlane.f32.xlu0 %v2680
  %v2682 = vpop.xlane.xlu0 %2681
  %v2683 = vsel %vm57, %v2416, 0.0
  %v2684 = vadd.f32 %v2415, %v2683
  %2685 = vadd.xlane.f32.xlu0 %v2684
  %v2686 = vpop.xlane.xlu0 %2685
  %v2687 = vsel %vm57, %v2418, 0.0
  %v2688 = vadd.f32 %v2417, %v2687
  %2689 = vadd.xlane.f32.xlu0 %v2688
  %v2690 = vpop.xlane.xlu0 %2689
  %v2691 = vsel %vm57, %v2420, 0.0
  %v2692 = vadd.f32 %v2419, %v2691
  %2693 = vadd.xlane.f32.xlu0 %v2692
  %v2694 = vpop.xlane.xlu0 %2693
  %v2695 = vsel %vm57, %v2422, 0.0
  %v2696 = vadd.f32 %v2421, %v2695
  %2697 = vadd.xlane.f32.xlu0 %v2696
  %v2698 = vpop.xlane.xlu0 %2697
  %v2699 = vsel %vm57, %v2424, 0.0
  %v2700 = vadd.f32 %v2423, %v2699
  %2701 = vadd.xlane.f32.xlu0 %v2700
  %v2702 = vpop.xlane.xlu0 %2701
  %v2703 = vsel %vm57, %v2426, 0.0
  %v2704 = vadd.f32 %v2425, %v2703
  %2705 = vadd.xlane.f32.xlu0 %v2704
  %v2706 = vpop.xlane.xlu0 %2705
  %v2707 = vsel %vm57, %v2428, 0.0
  %v2708 = vadd.f32 %v2427, %v2707
  %2709 = vadd.xlane.f32.xlu0 %v2708
  %v2710 = vpop.xlane.xlu0 %2709
  %v2711 = vsel %vm57, %v2430, 0.0
  %v2712 = vadd.f32 %v2429, %v2711
  %2713 = vadd.xlane.f32.xlu0 %v2712
  %v2714 = vpop.xlane.xlu0 %2713
  %v2715 = vsel %vm57, %v2432, 0.0
  %v2716 = vadd.f32 %v2431, %v2715
  %2717 = vadd.xlane.f32.xlu0 %v2716
  %v2718 = vpop.xlane.xlu0 %2717
  %v2719 = vsel %vm57, %v2434, 0.0
  %v2720 = vadd.f32 %v2433, %v2719
  %2721 = vadd.xlane.f32.xlu0 %v2720
  %v2722 = vpop.xlane.xlu0 %2721
  %v2723 = vsel %vm57, %v2436, 0.0
  %v2724 = vadd.f32 %v2435, %v2723
  %2725 = vadd.xlane.f32.xlu0 %v2724
  %v2726 = vpop.xlane.xlu0 %2725
  %v2727 = vsel %vm57, %v2438, 0.0
  %v2728 = vadd.f32 %v2437, %v2727
  %2729 = vadd.xlane.f32.xlu0 %v2728
  %v2730 = vpop.xlane.xlu0 %2729
  %v2731 = vsel %vm57, %v2440, 0.0
  %v2732 = vadd.f32 %v2439, %v2731
  %2733 = vadd.xlane.f32.xlu0 %v2732
  %v2734 = vpop.xlane.xlu0 %2733
  %v2735 = vsel %vm57, %v2442, 0.0
  %v2736 = vadd.f32 %v2441, %v2735
  %2737 = vadd.xlane.f32.xlu0 %v2736
  %v2738 = vpop.xlane.xlu0 %2737
  %v2739 = vsel %vm57, %v2444, 0.0
  %v2740 = vadd.f32 %v2443, %v2739
  %2741 = vadd.xlane.f32.xlu0 %v2740
  %v2742 = vpop.xlane.xlu0 %2741
  %v2743 = vsel %vm57, %v2446, 0.0
  %v2744 = vadd.f32 %v2445, %v2743
  %2745 = vadd.xlane.f32.xlu0 %v2744
  %v2746 = vpop.xlane.xlu0 %2745
  %v2747 = vsel %vm57, %v2448, 0.0
  %v2748 = vadd.f32 %v2447, %v2747
  %2749 = vadd.xlane.f32.xlu0 %v2748
  %v2750 = vpop.xlane.xlu0 %2749
  %v2751 = vsel %vm57, %v2450, 0.0
  %v2752 = vadd.f32 %v2449, %v2751
  %2753 = vadd.xlane.f32.xlu0 %v2752
  %v2754 = vpop.xlane.xlu0 %2753
  %v2755 = vsel %vm57, %v2452, 0.0
  %v2756 = vadd.f32 %v2451, %v2755
  %2757 = vadd.xlane.f32.xlu0 %v2756
  %v2758 = vpop.xlane.xlu0 %2757
  %v2759 = vsel %vm57, %v2454, 0.0
  %v2760 = vadd.f32 %v2453, %v2759
  %2761 = vadd.xlane.f32.xlu0 %v2760
  %v2762 = vpop.xlane.xlu0 %2761
  %v2763 = vsel %vm57, %v2456, 0.0
  %v2764 = vadd.f32 %v2455, %v2763
  %2765 = vadd.xlane.f32.xlu0 %v2764
  %v2766 = vpop.xlane.xlu0 %2765
  %v2767 = vsel %vm57, %v2458, 0.0
  %v2768 = vadd.f32 %v2457, %v2767
  %2769 = vadd.xlane.f32.xlu0 %v2768
  %v2770 = vpop.xlane.xlu0 %2769
  %v2771 = vsel %vm57, %v2460, 0.0
  %v2772 = vadd.f32 %v2459, %v2771
  %2773 = vadd.xlane.f32.xlu0 %v2772
  %v2774 = vpop.xlane.xlu0 %2773
  %v2775 = vsel %vm57, %v2462, 0.0
  %v2776 = vadd.f32 %v2461, %v2775
  %2777 = vadd.xlane.f32.xlu0 %v2776
  %v2778 = vpop.xlane.xlu0 %2777
  %v2779 = vsel %vm57, %v2464, 0.0
  %v2780 = vadd.f32 %v2463, %v2779
  %2781 = vadd.xlane.f32.xlu0 %v2780
  %v2782 = vpop.xlane.xlu0 %2781
  %v2783 = vsel %vm57, %v2466, 0.0
  %v2784 = vadd.f32 %v2465, %v2783
  %2785 = vadd.xlane.f32.xlu0 %v2784
  %v2786 = vpop.xlane.xlu0 %2785
  %v2787 = vsel %vm57, %v2468, 0.0
  %v2788 = vadd.f32 %v2467, %v2787
  %2789 = vadd.xlane.f32.xlu0 %v2788
  %v2790 = vpop.xlane.xlu0 %2789
  %v2791 = vsel %vm57, %v2470, 0.0
  %v2792 = vadd.f32 %v2469, %v2791
  %2793 = vadd.xlane.f32.xlu0 %v2792
  %v2794 = vpop.xlane.xlu0 %2793
  %v2795 = vsel %vm57, %v2472, 0.0
  %v2796 = vadd.f32 %v2471, %v2795
  %2797 = vadd.xlane.f32.xlu0 %v2796
  %v2798 = vpop.xlane.xlu0 %2797
  %v2799 = vsel %vm57, %v2474, 0.0
  %v2800 = vadd.f32 %v2473, %v2799
  %2801 = vadd.xlane.f32.xlu0 %v2800
  %v2802 = vpop.xlane.xlu0 %2801
  %v2803 = vsel %vm57, %v2476, 0.0
  %v2804 = vadd.f32 %v2475, %v2803
  %2805 = vadd.xlane.f32.xlu0 %v2804
  %v2806 = vpop.xlane.xlu0 %2805
  %v2807 = vsel %vm57, %v2478, 0.0
  %v2808 = vadd.f32 %v2477, %v2807
  %2809 = vadd.xlane.f32.xlu0 %v2808
  %v2810 = vpop.xlane.xlu0 %2809
  %v2811 = vsel %vm57, %v2480, 0.0
  %v2812 = vadd.f32 %v2479, %v2811
  %2813 = vadd.xlane.f32.xlu0 %v2812
  %v2814 = vpop.xlane.xlu0 %2813
  %v2815 = vsel %vm57, %v2482, 0.0
  %v2816 = vadd.f32 %v2481, %v2815
  %2817 = vadd.xlane.f32.xlu0 %v2816
  %v2818 = vpop.xlane.xlu0 %2817
  %v2819 = vsel %vm57, %v2484, 0.0
  %v2820 = vadd.f32 %v2483, %v2819
  %2821 = vadd.xlane.f32.xlu0 %v2820
  %v2822 = vpop.xlane.xlu0 %2821
  %v2823 = vsel %vm57, %v2486, 0.0
  %v2824 = vadd.f32 %v2485, %v2823
  %2825 = vadd.xlane.f32.xlu0 %v2824
  %v2826 = vpop.xlane.xlu0 %2825
  %v2827 = vsel %vm57, %v2488, 0.0
  %v2828 = vadd.f32 %v2487, %v2827
  %2829 = vadd.xlane.f32.xlu0 %v2828
  %v2830 = vpop.xlane.xlu0 %2829
  %v2831 = vsel %vm57, %v2490, 0.0
  %v2832 = vadd.f32 %v2489, %v2831
  %2833 = vadd.xlane.f32.xlu0 %v2832
  %v2834 = vpop.xlane.xlu0 %2833
  %v2835 = vsel %vm57, %v2492, 0.0
  %v2836 = vadd.f32 %v2491, %v2835
  %2837 = vadd.xlane.f32.xlu0 %v2836
  %v2838 = vpop.xlane.xlu0 %2837
  %v2839 = vsel %vm57, %v2494, 0.0
  %v2840 = vadd.f32 %v2493, %v2839
  %2841 = vadd.xlane.f32.xlu0 %v2840
  %v2842 = vpop.xlane.xlu0 %2841
  %v2843 = vsel %vm57, %v2496, 0.0
  %v2844 = vadd.f32 %v2495, %v2843
  %2845 = vadd.xlane.f32.xlu0 %v2844
  %v2846 = vpop.xlane.xlu0 %2845
  %v2847 = vsel %vm57, %v2498, 0.0
  %v2848 = vadd.f32 %v2497, %v2847
  %2849 = vadd.xlane.f32.xlu0 %v2848
  %v2850 = vpop.xlane.xlu0 %2849
  %v2851 = vsel %vm57, %v2500, 0.0
  %v2852 = vadd.f32 %v2499, %v2851
  %2853 = vadd.xlane.f32.xlu0 %v2852
  %v2854 = vpop.xlane.xlu0 %2853
  %v2855 = vsel %vm57, %v2502, 0.0
  %v2856 = vadd.f32 %v2501, %v2855
  %2857 = vadd.xlane.f32.xlu0 %v2856
  %v2858 = vpop.xlane.xlu0 %2857
  %v2859 = vsel %vm57, %v2504, 0.0
  %v2860 = vadd.f32 %v2503, %v2859
  %2861 = vadd.xlane.f32.xlu0 %v2860
  %v2862 = vpop.xlane.xlu0 %2861
  %v2863 = vsel %vm57, %v2506, 0.0
  %v2864 = vadd.f32 %v2505, %v2863
  %2865 = vadd.xlane.f32.xlu0 %v2864
  %v2866 = vpop.xlane.xlu0 %2865
  %v2867 = vsel %vm57, %v2508, 0.0
  %v2868 = vadd.f32 %v2507, %v2867
  %2869 = vadd.xlane.f32.xlu0 %v2868
  %v2870 = vpop.xlane.xlu0 %2869
  %v2871 = vsel %vm57, %v2510, 0.0
  %v2872 = vadd.f32 %v2509, %v2871
  %2873 = vadd.xlane.f32.xlu0 %v2872
  %v2874 = vpop.xlane.xlu0 %2873
  %v2875 = vsel %vm57, %v2512, 0.0
  %v2876 = vadd.f32 %v2511, %v2875
  %2877 = vadd.xlane.f32.xlu0 %v2876
  %v2878 = vpop.xlane.xlu0 %2877
  %v2879 = vsel %vm57, %v2514, 0.0
  %v2880 = vadd.f32 %v2513, %v2879
  %2881 = vadd.xlane.f32.xlu0 %v2880
  %v2882 = vpop.xlane.xlu0 %2881
  %v2883 = vsel %vm57, %v2516, 0.0
  %v2884 = vadd.f32 %v2515, %v2883
  %2885 = vadd.xlane.f32.xlu0 %v2884
  %v2886 = vpop.xlane.xlu0 %2885
  %v2887 = vsel %vm57, %v2518, 0.0
  %v2888 = vadd.f32 %v2517, %v2887
  %2889 = vadd.xlane.f32.xlu0 %v2888
  %v2890 = vpop.xlane.xlu0 %2889
  %v2891 = vsel %vm57, %v2520, 0.0
  %v2892 = vadd.f32 %v2519, %v2891
  %2893 = vadd.xlane.f32.xlu0 %v2892
  %v2894 = vpop.xlane.xlu0 %2893
  %v2895 = vsel %vm57, %v2522, 0.0
  %v2896 = vadd.f32 %v2521, %v2895
  %2897 = vadd.xlane.f32.xlu0 %v2896
  %v2898 = vpop.xlane.xlu0 %2897
  %v2899 = vsel %vm57, %v2524, 0.0
  %v2900 = vadd.f32 %v2523, %v2899
  %2901 = vadd.xlane.f32.xlu0 %v2900
  %v2902 = vpop.xlane.xlu0 %2901
  %v2903 = vsel %vm57, %v2526, 0.0
  %v2904 = vadd.f32 %v2525, %v2903
  %2905 = vadd.xlane.f32.xlu0 %v2904
  %v2906 = vpop.xlane.xlu0 %2905
  %v2907 = vsel %vm57, %v2528, 0.0
  %v2908 = vadd.f32 %v2527, %v2907
  %2909 = vadd.xlane.f32.xlu0 %v2908
  %v2910 = vpop.xlane.xlu0 %2909
  %v2911 = vsel %vm57, %v2530, 0.0
  %v2912 = vadd.f32 %v2529, %v2911
  %2913 = vadd.xlane.f32.xlu0 %v2912
  %v2914 = vpop.xlane.xlu0 %2913
  %v2915 = vsel %vm57, %v2532, 0.0
  %v2916 = vadd.f32 %v2531, %v2915
  %2917 = vadd.xlane.f32.xlu0 %v2916
  %v2918 = vpop.xlane.xlu0 %2917
  %v2919 = vsel %vm57, %v2534, 0.0
  %v2920 = vadd.f32 %v2533, %v2919
  %2921 = vadd.xlane.f32.xlu0 %v2920
  %v2922 = vpop.xlane.xlu0 %2921
  %v2923 = vsel %vm57, %v2536, 0.0
  %v2924 = vadd.f32 %v2535, %v2923
  %2925 = vadd.xlane.f32.xlu0 %v2924
  %v2926 = vpop.xlane.xlu0 %2925
  %v2927 = vsel %vm57, %v2538, 0.0
  %v2928 = vadd.f32 %v2537, %v2927
  %2929 = vadd.xlane.f32.xlu0 %v2928
  %v2930 = vpop.xlane.xlu0 %2929
  %v2931 = vsel %vm57, %v2540, 0.0
  %v2932 = vadd.f32 %v2539, %v2931
  %2933 = vadd.xlane.f32.xlu0 %v2932
  %v2934 = vpop.xlane.xlu0 %2933
  %v2935 = vsel %vm57, %v2542, 0.0
  %v2936 = vadd.f32 %v2541, %v2935
  %2937 = vadd.xlane.f32.xlu0 %v2936
  %v2938 = vpop.xlane.xlu0 %2937
  %v2939 = vsel %vm57, %v2544, 0.0
  %v2940 = vadd.f32 %v2543, %v2939
  %2941 = vadd.xlane.f32.xlu0 %v2940
  %v2942 = vpop.xlane.xlu0 %2941
  %v2943 = vsel %vm57, %v2546, 0.0
  %v2944 = vadd.f32 %v2545, %v2943
  %2945 = vadd.xlane.f32.xlu0 %v2944
  %v2946 = vpop.xlane.xlu0 %2945
  %v2947 = vsel %vm57, %v2548, 0.0
  %v2948 = vadd.f32 %v2547, %v2947
  %2949 = vadd.xlane.f32.xlu0 %v2948
  %v2950 = vpop.xlane.xlu0 %2949
  %v2951 = vsel %vm57, %v2550, 0.0
  %v2952 = vadd.f32 %v2549, %v2951
  %2953 = vadd.xlane.f32.xlu0 %v2952
  %v2954 = vpop.xlane.xlu0 %2953
  %v2955 = vsel %vm57, %v2552, 0.0
  %v2956 = vadd.f32 %v2551, %v2955
  %2957 = vadd.xlane.f32.xlu0 %v2956
  %v2958 = vpop.xlane.xlu0 %2957
  %v2959 = vsel %vm57, %v2554, 0.0
  %v2960 = vadd.f32 %v2553, %v2959
  %2961 = vadd.xlane.f32.xlu0 %v2960
  %v2962 = vpop.xlane.xlu0 %2961
  %v2963 = vmul.f32 %v2558, 0.0051020407
  %v2964 = vmul.f32 %v2562, 0.0051020407
  %v2965 = vmul.f32 %v2566, 0.0051020407
  %v2966 = vmul.f32 %v2570, 0.0051020407
  %v2967 = vmul.f32 %v2574, 0.0051020407
  %v2968 = vmul.f32 %v2578, 0.0051020407
  %v2969 = vmul.f32 %v2582, 0.0051020407
  %v2970 = vmul.f32 %v2586, 0.0051020407
  %v2971 = vmul.f32 %v2590, 0.0051020407
  %v2972 = vmul.f32 %v2594, 0.0051020407
  %v2973 = vmul.f32 %v2598, 0.0051020407
  %v2974 = vmul.f32 %v2602, 0.0051020407
  %v2975 = vmul.f32 %v2606, 0.0051020407
  %v2976 = vmul.f32 %v2610, 0.0051020407
  %v2977 = vmul.f32 %v2614, 0.0051020407
  %v2978 = vmul.f32 %v2618, 0.0051020407
  %v2979 = vmul.f32 %v2622, 0.0051020407
  %v2980 = vmul.f32 %v2626, 0.0051020407
  %v2981 = vmul.f32 %v2630, 0.0051020407
  %v2982 = vmul.f32 %v2634, 0.0051020407
  %v2983 = vmul.f32 %v2638, 0.0051020407
  %v2984 = vmul.f32 %v2642, 0.0051020407
  %v2985 = vmul.f32 %v2646, 0.0051020407
  %v2986 = vmul.f32 %v2650, 0.0051020407
  %v2987 = vmul.f32 %v2654, 0.0051020407
  %v2988 = vmul.f32 %v2658, 0.0051020407
  %v2989 = vmul.f32 %v2662, 0.0051020407
  %v2990 = vmul.f32 %v2666, 0.0051020407
  %v2991 = vmul.f32 %v2670, 0.0051020407
  %v2992 = vmul.f32 %v2674, 0.0051020407
  %v2993 = vmul.f32 %v2678, 0.0051020407
  %v2994 = vmul.f32 %v2682, 0.0051020407
  %v2995 = vmul.f32 %v2686, 0.0051020407
  %v2996 = vmul.f32 %v2690, 0.0051020407
  %v2997 = vmul.f32 %v2694, 0.0051020407
  %v2998 = vmul.f32 %v2698, 0.0051020407
  %v2999 = vmul.f32 %v2702, 0.0051020407
  %v3000 = vmul.f32 %v2706, 0.0051020407
  %v3001 = vmul.f32 %v2710, 0.0051020407
  %v3002 = vmul.f32 %v2714, 0.0051020407
  %v3003 = vmul.f32 %v2718, 0.0051020407
  %v3004 = vmul.f32 %v2722, 0.0051020407
  %v3005 = vmul.f32 %v2726, 0.0051020407
  %v3006 = vmul.f32 %v2730, 0.0051020407
  %v3007 = vmul.f32 %v2734, 0.0051020407
  %v3008 = vmul.f32 %v2738, 0.0051020407
  %v3009 = vmul.f32 %v2742, 0.0051020407
  %v3010 = vmul.f32 %v2746, 0.0051020407
  %v3011 = vmul.f32 %v2750, 0.0051020407
  %v3012 = vmul.f32 %v2754, 0.0051020407
  %v3013 = vmul.f32 %v2758, 0.0051020407
  %v3014 = vmul.f32 %v2762, 0.0051020407
  %v3015 = vmul.f32 %v2766, 0.0051020407
  %v3016 = vmul.f32 %v2770, 0.0051020407
  %v3017 = vmul.f32 %v2774, 0.0051020407
  %v3018 = vmul.f32 %v2778, 0.0051020407
  %v3019 = vmul.f32 %v2782, 0.0051020407
  %v3020 = vmul.f32 %v2786, 0.0051020407
  %v3021 = vmul.f32 %v2790, 0.0051020407
  %v3022 = vmul.f32 %v2794, 0.0051020407
  %v3023 = vmul.f32 %v2798, 0.0051020407
  %v3024 = vmul.f32 %v2802, 0.0051020407
  %v3025 = vmul.f32 %v2806, 0.0051020407
  %v3026 = vmul.f32 %v2810, 0.0051020407
  %v3027 = vmul.f32 %v2814, 0.0051020407
  %v3028 = vmul.f32 %v2818, 0.0051020407
  %v3029 = vmul.f32 %v2822, 0.0051020407
  %v3030 = vmul.f32 %v2826, 0.0051020407
  %v3031 = vmul.f32 %v2830, 0.0051020407
  %v3032 = vmul.f32 %v2834, 0.0051020407
  %v3033 = vmul.f32 %v2838, 0.0051020407
  %v3034 = vmul.f32 %v2842, 0.0051020407
  %v3035 = vmul.f32 %v2846, 0.0051020407
  %v3036 = vmul.f32 %v2850, 0.0051020407
  %v3037 = vmul.f32 %v2854, 0.0051020407
  %v3038 = vmul.f32 %v2858, 0.0051020407
  %v3039 = vmul.f32 %v2862, 0.0051020407
  %v3040 = vmul.f32 %v2866, 0.0051020407
  %v3041 = vmul.f32 %v2870, 0.0051020407
  %v3042 = vmul.f32 %v2874, 0.0051020407
  %v3043 = vmul.f32 %v2878, 0.0051020407
  %v3044 = vmul.f32 %v2882, 0.0051020407
  %v3045 = vmul.f32 %v2886, 0.0051020407
  %v3046 = vmul.f32 %v2890, 0.0051020407
  %v3047 = vmul.f32 %v2894, 0.0051020407
  %v3048 = vmul.f32 %v2898, 0.0051020407
  %v3049 = vmul.f32 %v2902, 0.0051020407
  %v3050 = vmul.f32 %v2906, 0.0051020407
  %v3051 = vmul.f32 %v2910, 0.0051020407
  %v3052 = vmul.f32 %v2914, 0.0051020407
  %v3053 = vmul.f32 %v2918, 0.0051020407
  %v3054 = vmul.f32 %v2922, 0.0051020407
  %v3055 = vmul.f32 %v2926, 0.0051020407
  %v3056 = vmul.f32 %v2930, 0.0051020407
  %v3057 = vmul.f32 %v2934, 0.0051020407
  %v3058 = vmul.f32 %v2938, 0.0051020407
  %v3059 = vmul.f32 %v2942, 0.0051020407
  %v3060 = vmul.f32 %v2946, 0.0051020407
  %v3061 = vmul.f32 %v2950, 0.0051020407
  %v3062 = vmul.f32 %v2954, 0.0051020407
  %v3063 = vmul.f32 %v2958, 0.0051020407
  %v3064 = vmul.f32 %v2962, 0.0051020407
  %v3065 = vmul.f32 %v2249, %v2249
  %v3066 = vmul.f32 %v2250, %v2250
  %v3067 = vmul.f32 %v2251, %v2251
  %v3068 = vmul.f32 %v2252, %v2252
  %v3069 = vmul.f32 %v2253, %v2253
  %v3070 = vmul.f32 %v2254, %v2254
  %v3071 = vmul.f32 %v2255, %v2255
  %v3072 = vmul.f32 %v2256, %v2256
  %v3073 = vmul.f32 %v2257, %v2257
  %v3074 = vmul.f32 %v2258, %v2258
  %v3075 = vmul.f32 %v2259, %v2259
  %v3076 = vmul.f32 %v2260, %v2260
  %v3077 = vmul.f32 %v2261, %v2261
  %v3078 = vmul.f32 %v2262, %v2262
  %v3079 = vmul.f32 %v2263, %v2263
  %v3080 = vmul.f32 %v2264, %v2264
  %v3081 = vmul.f32 %v2265, %v2265
  %v3082 = vmul.f32 %v2266, %v2266
  %v3083 = vmul.f32 %v2267, %v2267
  %v3084 = vmul.f32 %v2268, %v2268
  %v3085 = vmul.f32 %v2269, %v2269
  %v3086 = vmul.f32 %v2270, %v2270
  %v3087 = vmul.f32 %v2271, %v2271
  %v3088 = vmul.f32 %v2272, %v2272
  %v3089 = vmul.f32 %v2273, %v2273
  %v3090 = vmul.f32 %v2274, %v2274
  %v3091 = vmul.f32 %v2275, %v2275
  %v3092 = vmul.f32 %v2276, %v2276
  %v3093 = vmul.f32 %v2277, %v2277
  %v3094 = vmul.f32 %v2278, %v2278
  %v3095 = vmul.f32 %v2279, %v2279
  %v3096 = vmul.f32 %v2280, %v2280
  %v3097 = vmul.f32 %v2281, %v2281
  %v3098 = vmul.f32 %v2282, %v2282
  %v3099 = vmul.f32 %v2283, %v2283
  %v3100 = vmul.f32 %v2284, %v2284
  %v3101 = vmul.f32 %v2285, %v2285
  %v3102 = vmul.f32 %v2286, %v2286
  %v3103 = vmul.f32 %v2287, %v2287
  %v3104 = vmul.f32 %v2288, %v2288
  %v3105 = vmul.f32 %v2289, %v2289
  %v3106 = vmul.f32 %v2290, %v2290
  %v3107 = vmul.f32 %v2291, %v2291
  %v3108 = vmul.f32 %v2292, %v2292
  %v3109 = vmul.f32 %v2293, %v2293
  %v3110 = vmul.f32 %v2294, %v2294
  %v3111 = vmul.f32 %v2295, %v2295
  %v3112 = vmul.f32 %v2296, %v2296
  %v3113 = vmul.f32 %v2297, %v2297
  %v3114 = vmul.f32 %v2298, %v2298
  %v3115 = vmul.f32 %v2299, %v2299
  %v3116 = vmul.f32 %v2300, %v2300
  %v3117 = vmul.f32 %v2301, %v2301
  %v3118 = vmul.f32 %v2302, %v2302
  %v3119 = vmul.f32 %v2303, %v2303
  %v3120 = vmul.f32 %v2304, %v2304
  %v3121 = vmul.f32 %v2305, %v2305
  %v3122 = vmul.f32 %v2306, %v2306
  %v3123 = vmul.f32 %v2307, %v2307
  %v3124 = vmul.f32 %v2308, %v2308
  %v3125 = vmul.f32 %v2309, %v2309
  %v3126 = vmul.f32 %v2310, %v2310
  %v3127 = vmul.f32 %v2311, %v2311
  %v3128 = vmul.f32 %v2312, %v2312
  %v3129 = vmul.f32 %v2313, %v2313
  %v3130 = vmul.f32 %v2314, %v2314
  %v3131 = vmul.f32 %v2315, %v2315
  %v3132 = vmul.f32 %v2316, %v2316
  %v3133 = vmul.f32 %v2317, %v2317
  %v3134 = vmul.f32 %v2318, %v2318
  %v3135 = vmul.f32 %v2319, %v2319
  %v3136 = vmul.f32 %v2320, %v2320
  %v3137 = vmul.f32 %v2321, %v2321
  %v3138 = vmul.f32 %v2322, %v2322
  %v3139 = vmul.f32 %v2323, %v2323
  %v3140 = vmul.f32 %v2324, %v2324
  %v3141 = vmul.f32 %v2325, %v2325
  %v3142 = vmul.f32 %v2326, %v2326
  %v3143 = vmul.f32 %v2327, %v2327
  %v3144 = vmul.f32 %v2328, %v2328
  %v3145 = vmul.f32 %v2329, %v2329
  %v3146 = vmul.f32 %v2330, %v2330
  %v3147 = vmul.f32 %v2331, %v2331
  %v3148 = vmul.f32 %v2332, %v2332
  %v3149 = vmul.f32 %v2333, %v2333
  %v3150 = vmul.f32 %v2334, %v2334
  %v3151 = vmul.f32 %v2335, %v2335
  %v3152 = vmul.f32 %v2336, %v2336
  %v3153 = vmul.f32 %v2337, %v2337
  %v3154 = vmul.f32 %v2338, %v2338
  %v3155 = vmul.f32 %v2339, %v2339
  %v3156 = vmul.f32 %v2340, %v2340
  %v3157 = vmul.f32 %v2341, %v2341
  %v3158 = vmul.f32 %v2342, %v2342
  %v3159 = vmul.f32 %v2343, %v2343
  %v3160 = vmul.f32 %v2344, %v2344
  %v3161 = vmul.f32 %v2345, %v2345
  %v3162 = vmul.f32 %v2346, %v2346
  %v3163 = vmul.f32 %v2347, %v2347
  %v3164 = vmul.f32 %v2348, %v2348
  %v3165 = vmul.f32 %v2349, %v2349
  %v3166 = vmul.f32 %v2350, %v2350
  %v3167 = vsub.f32 %v2963, %v3065
  %v3168 = vsub.f32 %v2964, %v3066
  %v3169 = vsub.f32 %v2965, %v3067
  %v3170 = vsub.f32 %v2966, %v3068
  %v3171 = vsub.f32 %v2967, %v3069
  %v3172 = vsub.f32 %v2968, %v3070
  %v3173 = vsub.f32 %v2969, %v3071
  %v3174 = vsub.f32 %v2970, %v3072
  %v3175 = vsub.f32 %v2971, %v3073
  %v3176 = vsub.f32 %v2972, %v3074
  %v3177 = vsub.f32 %v2973, %v3075
  %v3178 = vsub.f32 %v2974, %v3076
  %v3179 = vsub.f32 %v2975, %v3077
  %v3180 = vsub.f32 %v2976, %v3078
  %v3181 = vsub.f32 %v2977, %v3079
  %v3182 = vsub.f32 %v2978, %v3080
  %v3183 = vsub.f32 %v2979, %v3081
  %v3184 = vsub.f32 %v2980, %v3082
  %v3185 = vsub.f32 %v2981, %v3083
  %v3186 = vsub.f32 %v2982, %v3084
  %v3187 = vsub.f32 %v2983, %v3085
  %v3188 = vsub.f32 %v2984, %v3086
  %v3189 = vsub.f32 %v2985, %v3087
  %v3190 = vsub.f32 %v2986, %v3088
  %v3191 = vsub.f32 %v2987, %v3089
  %v3192 = vsub.f32 %v2988, %v3090
  %v3193 = vsub.f32 %v2989, %v3091
  %v3194 = vsub.f32 %v2990, %v3092
  %v3195 = vsub.f32 %v2991, %v3093
  %v3196 = vsub.f32 %v2992, %v3094
  %v3197 = vsub.f32 %v2993, %v3095
  %v3198 = vsub.f32 %v2994, %v3096
  %v3199 = vsub.f32 %v2995, %v3097
  %v3200 = vsub.f32 %v2996, %v3098
  %v3201 = vsub.f32 %v2997, %v3099
  %v3202 = vsub.f32 %v2998, %v3100
  %v3203 = vsub.f32 %v2999, %v3101
  %v3204 = vsub.f32 %v3000, %v3102
  %v3205 = vsub.f32 %v3001, %v3103
  %v3206 = vsub.f32 %v3002, %v3104
  %v3207 = vsub.f32 %v3003, %v3105
  %v3208 = vsub.f32 %v3004, %v3106
  %v3209 = vsub.f32 %v3005, %v3107
  %v3210 = vsub.f32 %v3006, %v3108
  %v3211 = vsub.f32 %v3007, %v3109
  %v3212 = vsub.f32 %v3008, %v3110
  %v3213 = vsub.f32 %v3009, %v3111
  %v3214 = vsub.f32 %v3010, %v3112
  %v3215 = vsub.f32 %v3011, %v3113
  %v3216 = vsub.f32 %v3012, %v3114
  %v3217 = vsub.f32 %v3013, %v3115
  %v3218 = vsub.f32 %v3014, %v3116
  %v3219 = vsub.f32 %v3015, %v3117
  %v3220 = vsub.f32 %v3016, %v3118
  %v3221 = vsub.f32 %v3017, %v3119
  %v3222 = vsub.f32 %v3018, %v3120
  %v3223 = vsub.f32 %v3019, %v3121
  %v3224 = vsub.f32 %v3020, %v3122
  %v3225 = vsub.f32 %v3021, %v3123
  %v3226 = vsub.f32 %v3022, %v3124
  %v3227 = vsub.f32 %v3023, %v3125
  %v3228 = vsub.f32 %v3024, %v3126
  %v3229 = vsub.f32 %v3025, %v3127
  %v3230 = vsub.f32 %v3026, %v3128
  %v3231 = vsub.f32 %v3027, %v3129
  %v3232 = vsub.f32 %v3028, %v3130
  %v3233 = vsub.f32 %v3029, %v3131
  %v3234 = vsub.f32 %v3030, %v3132
  %v3235 = vsub.f32 %v3031, %v3133
  %v3236 = vsub.f32 %v3032, %v3134
  %v3237 = vsub.f32 %v3033, %v3135
  %v3238 = vsub.f32 %v3034, %v3136
  %v3239 = vsub.f32 %v3035, %v3137
  %v3240 = vsub.f32 %v3036, %v3138
  %v3241 = vsub.f32 %v3037, %v3139
  %v3242 = vsub.f32 %v3038, %v3140
  %v3243 = vsub.f32 %v3039, %v3141
  %v3244 = vsub.f32 %v3040, %v3142
  %v3245 = vsub.f32 %v3041, %v3143
  %v3246 = vsub.f32 %v3042, %v3144
  %v3247 = vsub.f32 %v3043, %v3145
  %v3248 = vsub.f32 %v3044, %v3146
  %v3249 = vsub.f32 %v3045, %v3147
  %v3250 = vsub.f32 %v3046, %v3148
  %v3251 = vsub.f32 %v3047, %v3149
  %v3252 = vsub.f32 %v3048, %v3150
  %v3253 = vsub.f32 %v3049, %v3151
  %v3254 = vsub.f32 %v3050, %v3152
  %v3255 = vsub.f32 %v3051, %v3153
  %v3256 = vsub.f32 %v3052, %v3154
  %v3257 = vsub.f32 %v3053, %v3155
  %v3258 = vsub.f32 %v3054, %v3156
  %v3259 = vsub.f32 %v3055, %v3157
  %v3260 = vsub.f32 %v3056, %v3158
  %v3261 = vsub.f32 %v3057, %v3159
  %v3262 = vsub.f32 %v3058, %v3160
  %v3263 = vsub.f32 %v3059, %v3161
  %v3264 = vsub.f32 %v3060, %v3162
  %v3265 = vsub.f32 %v3061, %v3163
  %v3266 = vsub.f32 %v3062, %v3164
  %v3267 = vsub.f32 %v3063, %v3165
  %v3268 = vsub.f32 %v3064, %v3166
  %v3269 = vld [vmem:[%s4] sm:$0xff]
  %v3270 = vld [vmem:[%s4 + $0x8] sm:$0xff]
  %v3271 = vld [vmem:[%s4 + $0x10] sm:$0xff]
  %v3272 = vld [vmem:[%s4 + $0x18] sm:$0xff]
  %v3273 = vld [vmem:[%s4 + $0x20] sm:$0xff]
  %v3274 = vld [vmem:[%s4 + $0x28] sm:$0xff]
  %v3275 = vld [vmem:[%s4 + $0x30] sm:$0xff]
  %v3276 = vld [vmem:[%s4 + $0x38] sm:$0xff]
  %v3277 = vld [vmem:[%s4 + $0x40] sm:$0xff]
  %v3278 = vld [vmem:[%s4 + $0x48] sm:$0xff]
  %v3279 = vld [vmem:[%s4 + $0x50] sm:$0xff]
  %v3280 = vld [vmem:[%s4 + $0x58] sm:$0xff]
  %v3281 = vld [vmem:[%s4 + $0x60] sm:$0xff]
  %v3282 = vld [vmem:[%s4 + $0x68] sm:$0xff]
  %v3283 = vld [vmem:[%s4 + $0x70] sm:$0xff]
  %v3284 = vld [vmem:[%s4 + $0x78] sm:$0xff]
  %v3285 = vld [vmem:[%s4 + $0x80] sm:$0xff]
  %v3286 = vld [vmem:[%s4 + $0x88] sm:$0xff]
  %v3287 = vld [vmem:[%s4 + $0x90] sm:$0xff]
  %v3288 = vld [vmem:[%s4 + $0x98] sm:$0xff]
  %v3289 = vld [vmem:[%s4 + $0xa0] sm:$0xff]
  %v3290 = vld [vmem:[%s4 + $0xa8] sm:$0xff]
  %v3291 = vld [vmem:[%s4 + $0xb0] sm:$0xff]
  %v3292 = vld [vmem:[%s4 + $0xb8] sm:$0xff]
  %v3293 = vld [vmem:[%s4 + $0xc0] sm:$0xff]
  %v3294 = vld [vmem:[%s4 + $0xc8] sm:$0xff]
  %v3295 = vld [vmem:[%s4 + $0xd0] sm:$0xff]
  %v3296 = vld [vmem:[%s4 + $0xd8] sm:$0xff]
  %v3297 = vld [vmem:[%s4 + $0xe0] sm:$0xff]
  %v3298 = vld [vmem:[%s4 + $0xe8] sm:$0xff]
  %v3299 = vld [vmem:[%s4 + $0xf0] sm:$0xff]
  %v3300 = vld [vmem:[%s4 + $0xf8] sm:$0xff]
  %v3301 = vld [vmem:[%s4 + $0x100] sm:$0xff]
  %v3302 = vld [vmem:[%s4 + $0x108] sm:$0xff]
  %v3303 = vld [vmem:[%s4 + $0x110] sm:$0xff]
  %v3304 = vld [vmem:[%s4 + $0x118] sm:$0xff]
  %v3305 = vld [vmem:[%s4 + $0x120] sm:$0xff]
  %v3306 = vld [vmem:[%s4 + $0x128] sm:$0xff]
  %v3307 = vld [vmem:[%s4 + $0x130] sm:$0xff]
  %v3308 = vld [vmem:[%s4 + $0x138] sm:$0xff]
  %v3309 = vld [vmem:[%s4 + $0x140] sm:$0xff]
  %v3310 = vld [vmem:[%s4 + $0x148] sm:$0xff]
  %v3311 = vld [vmem:[%s4 + $0x150] sm:$0xff]
  %v3312 = vld [vmem:[%s4 + $0x158] sm:$0xff]
  %v3313 = vld [vmem:[%s4 + $0x160] sm:$0xff]
  %v3314 = vld [vmem:[%s4 + $0x168] sm:$0xff]
  %v3315 = vld [vmem:[%s4 + $0x170] sm:$0xff]
  %v3316 = vld [vmem:[%s4 + $0x178] sm:$0xff]
  %v3317 = vld [vmem:[%s4 + $0x180] sm:$0xff]
  %v3318 = vld [vmem:[%s4 + $0x188] sm:$0xff]
  %v3319 = vld [vmem:[%s4 + $0x190] sm:$0xff]
  %v3320 = vld [vmem:[%s4 + $0x198] sm:$0xff]
  %v3321 = vld [vmem:[%s4 + $0x1a0] sm:$0xff]
  %v3322 = vld [vmem:[%s4 + $0x1a8] sm:$0xff]
  %v3323 = vld [vmem:[%s4 + $0x1b0] sm:$0xff]
  %v3324 = vld [vmem:[%s4 + $0x1b8] sm:$0xff]
  %v3325 = vld [vmem:[%s4 + $0x1c0] sm:$0xff]
  %v3326 = vld [vmem:[%s4 + $0x1c8] sm:$0xff]
  %v3327 = vld [vmem:[%s4 + $0x1d0] sm:$0xff]
  %v3328 = vld [vmem:[%s4 + $0x1d8] sm:$0xff]
  %v3329 = vld [vmem:[%s4 + $0x1e0] sm:$0xff]
  %v3330 = vld [vmem:[%s4 + $0x1e8] sm:$0xff]
  %v3331 = vld [vmem:[%s4 + $0x1f0] sm:$0xff]
  %v3332 = vld [vmem:[%s4 + $0x1f8] sm:$0xff]
  %v3333 = vld [vmem:[%s4 + $0x200] sm:$0xff]
  %v3334 = vld [vmem:[%s4 + $0x208] sm:$0xff]
  %v3335 = vld [vmem:[%s4 + $0x210] sm:$0xff]
  %v3336 = vld [vmem:[%s4 + $0x218] sm:$0xff]
  %v3337 = vld [vmem:[%s4 + $0x220] sm:$0xff]
  %v3338 = vld [vmem:[%s4 + $0x228] sm:$0xff]
  %v3339 = vld [vmem:[%s4 + $0x230] sm:$0xff]
  %v3340 = vld [vmem:[%s4 + $0x238] sm:$0xff]
  %v3341 = vld [vmem:[%s4 + $0x240] sm:$0xff]
  %v3342 = vld [vmem:[%s4 + $0x248] sm:$0xff]
  %v3343 = vld [vmem:[%s4 + $0x250] sm:$0xff]
  %v3344 = vld [vmem:[%s4 + $0x258] sm:$0xff]
  %v3345 = vld [vmem:[%s4 + $0x260] sm:$0xff]
  %v3346 = vld [vmem:[%s4 + $0x268] sm:$0xff]
  %v3347 = vld [vmem:[%s4 + $0x270] sm:$0xff]
  %v3348 = vld [vmem:[%s4 + $0x278] sm:$0xff]
  %v3349 = vld [vmem:[%s4 + $0x280] sm:$0xff]
  %v3350 = vld [vmem:[%s4 + $0x288] sm:$0xff]
  %v3351 = vld [vmem:[%s4 + $0x290] sm:$0xff]
  %v3352 = vld [vmem:[%s4 + $0x298] sm:$0xff]
  %v3353 = vld [vmem:[%s4 + $0x2a0] sm:$0xff]
  %v3354 = vld [vmem:[%s4 + $0x2a8] sm:$0xff]
  %v3355 = vld [vmem:[%s4 + $0x2b0] sm:$0xff]
  %v3356 = vld [vmem:[%s4 + $0x2b8] sm:$0xff]
  %v3357 = vld [vmem:[%s4 + $0x2c0] sm:$0xff]
  %v3358 = vld [vmem:[%s4 + $0x2c8] sm:$0xff]
  %v3359 = vld [vmem:[%s4 + $0x2d0] sm:$0xff]
  %v3360 = vld [vmem:[%s4 + $0x2d8] sm:$0xff]
  %v3361 = vld [vmem:[%s4 + $0x2e0] sm:$0xff]
  %v3362 = vld [vmem:[%s4 + $0x2e8] sm:$0xff]
  %v3363 = vld [vmem:[%s4 + $0x2f0] sm:$0xff]
  %v3364 = vld [vmem:[%s4 + $0x2f8] sm:$0xff]
  %v3365 = vld [vmem:[%s4 + $0x300] sm:$0xff]
  %v3366 = vld [vmem:[%s4 + $0x308] sm:$0xff]
  %v3367 = vld [vmem:[%s4 + $0x310] sm:$0xff]
  %v3368 = vld [vmem:[%s4 + $0x318] sm:$0xff]
  %v3369 = vld [vmem:[%s4 + $0x320] sm:$0xff]
  %v3370 = vld [vmem:[%s4 + $0x328] sm:$0xff]
  %v3371 = vadd.f32 %v3167, 1e-05
  %v3372 = vadd.f32 %v3168, 1e-05
  %v3373 = vadd.f32 %v3169, 1e-05
  %v3374 = vadd.f32 %v3170, 1e-05
  %v3375 = vadd.f32 %v3171, 1e-05
  %v3376 = vadd.f32 %v3172, 1e-05
  %v3377 = vadd.f32 %v3173, 1e-05
  %v3378 = vadd.f32 %v3174, 1e-05
  %v3379 = vadd.f32 %v3175, 1e-05
  %v3380 = vadd.f32 %v3176, 1e-05
  %v3381 = vadd.f32 %v3177, 1e-05
  %v3382 = vadd.f32 %v3178, 1e-05
  %v3383 = vadd.f32 %v3179, 1e-05
  %v3384 = vadd.f32 %v3180, 1e-05
  %v3385 = vadd.f32 %v3181, 1e-05
  %v3386 = vadd.f32 %v3182, 1e-05
  %v3387 = vadd.f32 %v3183, 1e-05
  %v3388 = vadd.f32 %v3184, 1e-05
  %v3389 = vadd.f32 %v3185, 1e-05
  %v3390 = vadd.f32 %v3186, 1e-05
  %v3391 = vadd.f32 %v3187, 1e-05
  %v3392 = vadd.f32 %v3188, 1e-05
  %v3393 = vadd.f32 %v3189, 1e-05
  %v3394 = vadd.f32 %v3190, 1e-05
  %v3395 = vadd.f32 %v3191, 1e-05
  %v3396 = vadd.f32 %v3192, 1e-05
  %v3397 = vadd.f32 %v3193, 1e-05
  %v3398 = vadd.f32 %v3194, 1e-05
  %v3399 = vadd.f32 %v3195, 1e-05
  %v3400 = vadd.f32 %v3196, 1e-05
  %v3401 = vadd.f32 %v3197, 1e-05
  %v3402 = vadd.f32 %v3198, 1e-05
  %v3403 = vadd.f32 %v3199, 1e-05
  %v3404 = vadd.f32 %v3200, 1e-05
  %v3405 = vadd.f32 %v3201, 1e-05
  %v3406 = vadd.f32 %v3202, 1e-05
  %v3407 = vadd.f32 %v3203, 1e-05
  %v3408 = vadd.f32 %v3204, 1e-05
  %v3409 = vadd.f32 %v3205, 1e-05
  %v3410 = vadd.f32 %v3206, 1e-05
  %v3411 = vadd.f32 %v3207, 1e-05
  %v3412 = vadd.f32 %v3208, 1e-05
  %v3413 = vadd.f32 %v3209, 1e-05
  %v3414 = vadd.f32 %v3210, 1e-05
  %v3415 = vadd.f32 %v3211, 1e-05
  %v3416 = vadd.f32 %v3212, 1e-05
  %v3417 = vadd.f32 %v3213, 1e-05
  %v3418 = vadd.f32 %v3214, 1e-05
  %v3419 = vadd.f32 %v3215, 1e-05
  %v3420 = vadd.f32 %v3216, 1e-05
  %v3421 = vadd.f32 %v3217, 1e-05
  %v3422 = vadd.f32 %v3218, 1e-05
  %v3423 = vadd.f32 %v3219, 1e-05
  %v3424 = vadd.f32 %v3220, 1e-05
  %v3425 = vadd.f32 %v3221, 1e-05
  %v3426 = vadd.f32 %v3222, 1e-05
  %v3427 = vadd.f32 %v3223, 1e-05
  %v3428 = vadd.f32 %v3224, 1e-05
  %v3429 = vadd.f32 %v3225, 1e-05
  %v3430 = vadd.f32 %v3226, 1e-05
  %v3431 = vadd.f32 %v3227, 1e-05
  %v3432 = vadd.f32 %v3228, 1e-05
  %v3433 = vadd.f32 %v3229, 1e-05
  %v3434 = vadd.f32 %v3230, 1e-05
  %v3435 = vadd.f32 %v3231, 1e-05
  %v3436 = vadd.f32 %v3232, 1e-05
  %v3437 = vadd.f32 %v3233, 1e-05
  %v3438 = vadd.f32 %v3234, 1e-05
  %v3439 = vadd.f32 %v3235, 1e-05
  %v3440 = vadd.f32 %v3236, 1e-05
  %v3441 = vadd.f32 %v3237, 1e-05
  %v3442 = vadd.f32 %v3238, 1e-05
  %v3443 = vadd.f32 %v3239, 1e-05
  %v3444 = vadd.f32 %v3240, 1e-05
  %v3445 = vadd.f32 %v3241, 1e-05
  %v3446 = vadd.f32 %v3242, 1e-05
  %v3447 = vadd.f32 %v3243, 1e-05
  %v3448 = vadd.f32 %v3244, 1e-05
  %v3449 = vadd.f32 %v3245, 1e-05
  %v3450 = vadd.f32 %v3246, 1e-05
  %v3451 = vadd.f32 %v3247, 1e-05
  %v3452 = vadd.f32 %v3248, 1e-05
  %v3453 = vadd.f32 %v3249, 1e-05
  %v3454 = vadd.f32 %v3250, 1e-05
  %v3455 = vadd.f32 %v3251, 1e-05
  %v3456 = vadd.f32 %v3252, 1e-05
  %v3457 = vadd.f32 %v3253, 1e-05
  %v3458 = vadd.f32 %v3254, 1e-05
  %v3459 = vadd.f32 %v3255, 1e-05
  %v3460 = vadd.f32 %v3256, 1e-05
  %v3461 = vadd.f32 %v3257, 1e-05
  %v3462 = vadd.f32 %v3258, 1e-05
  %v3463 = vadd.f32 %v3259, 1e-05
  %v3464 = vadd.f32 %v3260, 1e-05
  %v3465 = vadd.f32 %v3261, 1e-05
  %v3466 = vadd.f32 %v3262, 1e-05
  %v3467 = vadd.f32 %v3263, 1e-05
  %v3468 = vadd.f32 %v3264, 1e-05
  %v3469 = vadd.f32 %v3265, 1e-05
  %v3470 = vadd.f32 %v3266, 1e-05
  %v3471 = vadd.f32 %v3267, 1e-05
  %v3472 = vadd.f32 %v3268, 1e-05
  %v3473 = vrsqrt.pop %v3371
  %v3474 = vrsqrt.pop %v3372
  %v3475 = vrsqrt.pop %v3373
  %v3476 = vrsqrt.pop %v3374
  %v3477 = vrsqrt.pop %v3375
  %v3478 = vrsqrt.pop %v3376
  %v3479 = vrsqrt.pop %v3377
  %v3480 = vrsqrt.pop %v3378
  %v3481 = vrsqrt.pop %v3379
  %v3482 = vrsqrt.pop %v3380
  %v3483 = vrsqrt.pop %v3381
  %v3484 = vrsqrt.pop %v3382
  %v3485 = vrsqrt.pop %v3383
  %v3486 = vrsqrt.pop %v3384
  %v3487 = vrsqrt.pop %v3385
  %v3488 = vrsqrt.pop %v3386
  %v3489 = vrsqrt.pop %v3387
  %v3490 = vrsqrt.pop %v3388
  %v3491 = vrsqrt.pop %v3389
  %v3492 = vrsqrt.pop %v3390
  %v3493 = vrsqrt.pop %v3391
  %v3494 = vrsqrt.pop %v3392
  %v3495 = vrsqrt.pop %v3393
  %v3496 = vrsqrt.pop %v3394
  %v3497 = vrsqrt.pop %v3395
  %v3498 = vrsqrt.pop %v3396
  %v3499 = vrsqrt.pop %v3397
  %v3500 = vrsqrt.pop %v3398
  %v3501 = vrsqrt.pop %v3399
  %v3502 = vrsqrt.pop %v3400
  %v3503 = vrsqrt.pop %v3401
  %v3504 = vrsqrt.pop %v3402
  %v3505 = vrsqrt.pop %v3403
  %v3506 = vrsqrt.pop %v3404
  %v3507 = vrsqrt.pop %v3405
  %v3508 = vrsqrt.pop %v3406
  %v3509 = vrsqrt.pop %v3407
  %v3510 = vrsqrt.pop %v3408
  %v3511 = vrsqrt.pop %v3409
  %v3512 = vrsqrt.pop %v3410
  %v3513 = vrsqrt.pop %v3411
  %v3514 = vrsqrt.pop %v3412
  %v3515 = vrsqrt.pop %v3413
  %v3516 = vrsqrt.pop %v3414
  %v3517 = vrsqrt.pop %v3415
  %v3518 = vrsqrt.pop %v3416
  %v3519 = vrsqrt.pop %v3417
  %v3520 = vrsqrt.pop %v3418
  %v3521 = vrsqrt.pop %v3419
  %v3522 = vrsqrt.pop %v3420
  %v3523 = vrsqrt.pop %v3421
  %v3524 = vrsqrt.pop %v3422
  %v3525 = vrsqrt.pop %v3423
  %v3526 = vrsqrt.pop %v3424
  %v3527 = vrsqrt.pop %v3425
  %v3528 = vrsqrt.pop %v3426
  %v3529 = vrsqrt.pop %v3427
  %v3530 = vrsqrt.pop %v3428
  %v3531 = vrsqrt.pop %v3429
  %v3532 = vrsqrt.pop %v3430
  %v3533 = vrsqrt.pop %v3431
  %v3534 = vrsqrt.pop %v3432
  %v3535 = vrsqrt.pop %v3433
  %v3536 = vrsqrt.pop %v3434
  %v3537 = vrsqrt.pop %v3435
  %v3538 = vrsqrt.pop %v3436
  %v3539 = vrsqrt.pop %v3437
  %v3540 = vrsqrt.pop %v3438
  %v3541 = vrsqrt.pop %v3439
  %v3542 = vrsqrt.pop %v3440
  %v3543 = vrsqrt.pop %v3441
  %v3544 = vrsqrt.pop %v3442
  %v3545 = vrsqrt.pop %v3443
  %v3546 = vrsqrt.pop %v3444
  %v3547 = vrsqrt.pop %v3445
  %v3548 = vrsqrt.pop %v3446
  %v3549 = vrsqrt.pop %v3447
  %v3550 = vrsqrt.pop %v3448
  %v3551 = vrsqrt.pop %v3449
  %v3552 = vrsqrt.pop %v3450
  %v3553 = vrsqrt.pop %v3451
  %v3554 = vrsqrt.pop %v3452
  %v3555 = vrsqrt.pop %v3453
  %v3556 = vrsqrt.pop %v3454
  %v3557 = vrsqrt.pop %v3455
  %v3558 = vrsqrt.pop %v3456
  %v3559 = vrsqrt.pop %v3457
  %v3560 = vrsqrt.pop %v3458
  %v3561 = vrsqrt.pop %v3459
  %v3562 = vrsqrt.pop %v3460
  %v3563 = vrsqrt.pop %v3461
  %v3564 = vrsqrt.pop %v3462
  %v3565 = vrsqrt.pop %v3463
  %v3566 = vrsqrt.pop %v3464
  %v3567 = vrsqrt.pop %v3465
  %v3568 = vrsqrt.pop %v3466
  %v3569 = vrsqrt.pop %v3467
  %v3570 = vrsqrt.pop %v3468
  %v3571 = vrsqrt.pop %v3469
  %v3572 = vrsqrt.pop %v3470
  %v3573 = vrsqrt.pop %v3471
  %v3574 = vrsqrt.pop %v3472
  %v3575 = vmul.f32 %v3269, %v3473
  %v3576 = vmul.f32 %v3270, %v3474
  %v3577 = vmul.f32 %v3271, %v3475
  %v3578 = vmul.f32 %v3272, %v3476
  %v3579 = vmul.f32 %v3273, %v3477
  %v3580 = vmul.f32 %v3274, %v3478
  %v3581 = vmul.f32 %v3275, %v3479
  %v3582 = vmul.f32 %v3276, %v3480
  %v3583 = vmul.f32 %v3277, %v3481
  %v3584 = vmul.f32 %v3278, %v3482
  %v3585 = vmul.f32 %v3279, %v3483
  %v3586 = vmul.f32 %v3280, %v3484
  %v3587 = vmul.f32 %v3281, %v3485
  %v3588 = vmul.f32 %v3282, %v3486
  %v3589 = vmul.f32 %v3283, %v3487
  %v3590 = vmul.f32 %v3284, %v3488
  %v3591 = vmul.f32 %v3285, %v3489
  %v3592 = vmul.f32 %v3286, %v3490
  %v3593 = vmul.f32 %v3287, %v3491
  %v3594 = vmul.f32 %v3288, %v3492
  %v3595 = vmul.f32 %v3289, %v3493
  %v3596 = vmul.f32 %v3290, %v3494
  %v3597 = vmul.f32 %v3291, %v3495
  %v3598 = vmul.f32 %v3292, %v3496
  %v3599 = vmul.f32 %v3293, %v3497
  %v3600 = vmul.f32 %v3294, %v3498
  %v3601 = vmul.f32 %v3295, %v3499
  %v3602 = vmul.f32 %v3296, %v3500
  %v3603 = vmul.f32 %v3297, %v3501
  %v3604 = vmul.f32 %v3298, %v3502
  %v3605 = vmul.f32 %v3299, %v3503
  %v3606 = vmul.f32 %v3300, %v3504
  %v3607 = vmul.f32 %v3301, %v3505
  %v3608 = vmul.f32 %v3302, %v3506
  %v3609 = vmul.f32 %v3303, %v3507
  %v3610 = vmul.f32 %v3304, %v3508
  %v3611 = vmul.f32 %v3305, %v3509
  %v3612 = vmul.f32 %v3306, %v3510
  %v3613 = vmul.f32 %v3307, %v3511
  %v3614 = vmul.f32 %v3308, %v3512
  %v3615 = vmul.f32 %v3309, %v3513
  %v3616 = vmul.f32 %v3310, %v3514
  %v3617 = vmul.f32 %v3311, %v3515
  %v3618 = vmul.f32 %v3312, %v3516
  %v3619 = vmul.f32 %v3313, %v3517
  %v3620 = vmul.f32 %v3314, %v3518
  %v3621 = vmul.f32 %v3315, %v3519
  %v3622 = vmul.f32 %v3316, %v3520
  %v3623 = vmul.f32 %v3317, %v3521
  %v3624 = vmul.f32 %v3318, %v3522
  %v3625 = vmul.f32 %v3319, %v3523
  %v3626 = vmul.f32 %v3320, %v3524
  %v3627 = vmul.f32 %v3321, %v3525
  %v3628 = vmul.f32 %v3322, %v3526
  %v3629 = vmul.f32 %v3323, %v3527
  %v3630 = vmul.f32 %v3324, %v3528
  %v3631 = vmul.f32 %v3325, %v3529
  %v3632 = vmul.f32 %v3326, %v3530
  %v3633 = vmul.f32 %v3327, %v3531
  %v3634 = vmul.f32 %v3328, %v3532
  %v3635 = vmul.f32 %v3329, %v3533
  %v3636 = vmul.f32 %v3330, %v3534
  %v3637 = vmul.f32 %v3331, %v3535
  %v3638 = vmul.f32 %v3332, %v3536
  %v3639 = vmul.f32 %v3333, %v3537
  %v3640 = vmul.f32 %v3334, %v3538
  %v3641 = vmul.f32 %v3335, %v3539
  %v3642 = vmul.f32 %v3336, %v3540
  %v3643 = vmul.f32 %v3337, %v3541
  %v3644 = vmul.f32 %v3338, %v3542
  %v3645 = vmul.f32 %v3339, %v3543
  %v3646 = vmul.f32 %v3340, %v3544
  %v3647 = vmul.f32 %v3341, %v3545
  %v3648 = vmul.f32 %v3342, %v3546
  %v3649 = vmul.f32 %v3343, %v3547
  %v3650 = vmul.f32 %v3344, %v3548
  %v3651 = vmul.f32 %v3345, %v3549
  %v3652 = vmul.f32 %v3346, %v3550
  %v3653 = vmul.f32 %v3347, %v3551
  %v3654 = vmul.f32 %v3348, %v3552
  %v3655 = vmul.f32 %v3349, %v3553
  %v3656 = vmul.f32 %v3350, %v3554
  %v3657 = vmul.f32 %v3351, %v3555
  %v3658 = vmul.f32 %v3352, %v3556
  %v3659 = vmul.f32 %v3353, %v3557
  %v3660 = vmul.f32 %v3354, %v3558
  %v3661 = vmul.f32 %v3355, %v3559
  %v3662 = vmul.f32 %v3356, %v3560
  %v3663 = vmul.f32 %v3357, %v3561
  %v3664 = vmul.f32 %v3358, %v3562
  %v3665 = vmul.f32 %v3359, %v3563
  %v3666 = vmul.f32 %v3360, %v3564
  %v3667 = vmul.f32 %v3361, %v3565
  %v3668 = vmul.f32 %v3362, %v3566
  %v3669 = vmul.f32 %v3363, %v3567
  %v3670 = vmul.f32 %v3364, %v3568
  %v3671 = vmul.f32 %v3365, %v3569
  %v3672 = vmul.f32 %v3366, %v3570
  %v3673 = vmul.f32 %v3367, %v3571
  %v3674 = vmul.f32 %v3368, %v3572
  %v3675 = vmul.f32 %v3369, %v3573
  %v3676 = vmul.f32 %v3370, %v3574
  %v3677 = vld [vmem:[%s5] sm:$0xff]
  %v3678 = vld [vmem:[%s5 + $0x8] sm:$0xff]
  %v3679 = vld [vmem:[%s5 + $0x10] sm:$0xff]
  %v3680 = vld [vmem:[%s5 + $0x18] sm:$0xff]
  %v3681 = vld [vmem:[%s5 + $0x20] sm:$0xff]
  %v3682 = vld [vmem:[%s5 + $0x28] sm:$0xff]
  %v3683 = vld [vmem:[%s5 + $0x30] sm:$0xff]
  %v3684 = vld [vmem:[%s5 + $0x38] sm:$0xff]
  %v3685 = vld [vmem:[%s5 + $0x40] sm:$0xff]
  %v3686 = vld [vmem:[%s5 + $0x48] sm:$0xff]
  %v3687 = vld [vmem:[%s5 + $0x50] sm:$0xff]
  %v3688 = vld [vmem:[%s5 + $0x58] sm:$0xff]
  %v3689 = vld [vmem:[%s5 + $0x60] sm:$0xff]
  %v3690 = vld [vmem:[%s5 + $0x68] sm:$0xff]
  %v3691 = vld [vmem:[%s5 + $0x70] sm:$0xff]
  %v3692 = vld [vmem:[%s5 + $0x78] sm:$0xff]
  %v3693 = vld [vmem:[%s5 + $0x80] sm:$0xff]
  %v3694 = vld [vmem:[%s5 + $0x88] sm:$0xff]
  %v3695 = vld [vmem:[%s5 + $0x90] sm:$0xff]
  %v3696 = vld [vmem:[%s5 + $0x98] sm:$0xff]
  %v3697 = vld [vmem:[%s5 + $0xa0] sm:$0xff]
  %v3698 = vld [vmem:[%s5 + $0xa8] sm:$0xff]
  %v3699 = vld [vmem:[%s5 + $0xb0] sm:$0xff]
  %v3700 = vld [vmem:[%s5 + $0xb8] sm:$0xff]
  %v3701 = vld [vmem:[%s5 + $0xc0] sm:$0xff]
  %v3702 = vld [vmem:[%s5 + $0xc8] sm:$0xff]
  %v3703 = vld [vmem:[%s5 + $0xd0] sm:$0xff]
  %v3704 = vld [vmem:[%s5 + $0xd8] sm:$0xff]
  %v3705 = vld [vmem:[%s5 + $0xe0] sm:$0xff]
  %v3706 = vld [vmem:[%s5 + $0xe8] sm:$0xff]
  %v3707 = vld [vmem:[%s5 + $0xf0] sm:$0xff]
  %v3708 = vld [vmem:[%s5 + $0xf8] sm:$0xff]
  %v3709 = vld [vmem:[%s5 + $0x100] sm:$0xff]
  %v3710 = vld [vmem:[%s5 + $0x108] sm:$0xff]
  %v3711 = vld [vmem:[%s5 + $0x110] sm:$0xff]
  %v3712 = vld [vmem:[%s5 + $0x118] sm:$0xff]
  %v3713 = vld [vmem:[%s5 + $0x120] sm:$0xff]
  %v3714 = vld [vmem:[%s5 + $0x128] sm:$0xff]
  %v3715 = vld [vmem:[%s5 + $0x130] sm:$0xff]
  %v3716 = vld [vmem:[%s5 + $0x138] sm:$0xff]
  %v3717 = vld [vmem:[%s5 + $0x140] sm:$0xff]
  %v3718 = vld [vmem:[%s5 + $0x148] sm:$0xff]
  %v3719 = vld [vmem:[%s5 + $0x150] sm:$0xff]
  %v3720 = vld [vmem:[%s5 + $0x158] sm:$0xff]
  %v3721 = vld [vmem:[%s5 + $0x160] sm:$0xff]
  %v3722 = vld [vmem:[%s5 + $0x168] sm:$0xff]
  %v3723 = vld [vmem:[%s5 + $0x170] sm:$0xff]
  %v3724 = vld [vmem:[%s5 + $0x178] sm:$0xff]
  %v3725 = vld [vmem:[%s5 + $0x180] sm:$0xff]
  %v3726 = vld [vmem:[%s5 + $0x188] sm:$0xff]
  %v3727 = vld [vmem:[%s5 + $0x190] sm:$0xff]
  %v3728 = vld [vmem:[%s5 + $0x198] sm:$0xff]
  %v3729 = vld [vmem:[%s5 + $0x1a0] sm:$0xff]
  %v3730 = vld [vmem:[%s5 + $0x1a8] sm:$0xff]
  %v3731 = vld [vmem:[%s5 + $0x1b0] sm:$0xff]
  %v3732 = vld [vmem:[%s5 + $0x1b8] sm:$0xff]
  %v3733 = vld [vmem:[%s5 + $0x1c0] sm:$0xff]
  %v3734 = vld [vmem:[%s5 + $0x1c8] sm:$0xff]
  %v3735 = vld [vmem:[%s5 + $0x1d0] sm:$0xff]
  %v3736 = vld [vmem:[%s5 + $0x1d8] sm:$0xff]
  %v3737 = vld [vmem:[%s5 + $0x1e0] sm:$0xff]
  %v3738 = vld [vmem:[%s5 + $0x1e8] sm:$0xff]
  %v3739 = vld [vmem:[%s5 + $0x1f0] sm:$0xff]
  %v3740 = vld [vmem:[%s5 + $0x1f8] sm:$0xff]
  %v3741 = vld [vmem:[%s5 + $0x200] sm:$0xff]
  %v3742 = vld [vmem:[%s5 + $0x208] sm:$0xff]
  %v3743 = vld [vmem:[%s5 + $0x210] sm:$0xff]
  %v3744 = vld [vmem:[%s5 + $0x218] sm:$0xff]
  %v3745 = vld [vmem:[%s5 + $0x220] sm:$0xff]
  %v3746 = vld [vmem:[%s5 + $0x228] sm:$0xff]
  %v3747 = vld [vmem:[%s5 + $0x230] sm:$0xff]
  %v3748 = vld [vmem:[%s5 + $0x238] sm:$0xff]
  %v3749 = vld [vmem:[%s5 + $0x240] sm:$0xff]
  %v3750 = vld [vmem:[%s5 + $0x248] sm:$0xff]
  %v3751 = vld [vmem:[%s5 + $0x250] sm:$0xff]
  %v3752 = vld [vmem:[%s5 + $0x258] sm:$0xff]
  %v3753 = vld [vmem:[%s5 + $0x260] sm:$0xff]
  %v3754 = vld [vmem:[%s5 + $0x268] sm:$0xff]
  %v3755 = vld [vmem:[%s5 + $0x270] sm:$0xff]
  %v3756 = vld [vmem:[%s5 + $0x278] sm:$0xff]
  %v3757 = vld [vmem:[%s5 + $0x280] sm:$0xff]
  %v3758 = vld [vmem:[%s5 + $0x288] sm:$0xff]
  %v3759 = vld [vmem:[%s5 + $0x290] sm:$0xff]
  %v3760 = vld [vmem:[%s5 + $0x298] sm:$0xff]
  %v3761 = vld [vmem:[%s5 + $0x2a0] sm:$0xff]
  %v3762 = vld [vmem:[%s5 + $0x2a8] sm:$0xff]
  %v3763 = vld [vmem:[%s5 + $0x2b0] sm:$0xff]
  %v3764 = vld [vmem:[%s5 + $0x2b8] sm:$0xff]
  %v3765 = vld [vmem:[%s5 + $0x2c0] sm:$0xff]
  %v3766 = vld [vmem:[%s5 + $0x2c8] sm:$0xff]
  %v3767 = vld [vmem:[%s5 + $0x2d0] sm:$0xff]
  %v3768 = vld [vmem:[%s5 + $0x2d8] sm:$0xff]
  %v3769 = vld [vmem:[%s5 + $0x2e0] sm:$0xff]
  %v3770 = vld [vmem:[%s5 + $0x2e8] sm:$0xff]
  %v3771 = vld [vmem:[%s5 + $0x2f0] sm:$0xff]
  %v3772 = vld [vmem:[%s5 + $0x2f8] sm:$0xff]
  %v3773 = vld [vmem:[%s5 + $0x300] sm:$0xff]
  %v3774 = vld [vmem:[%s5 + $0x308] sm:$0xff]
  %v3775 = vld [vmem:[%s5 + $0x310] sm:$0xff]
  %v3776 = vld [vmem:[%s5 + $0x318] sm:$0xff]
  %v3777 = vld [vmem:[%s5 + $0x320] sm:$0xff]
  %v3778 = vld [vmem:[%s5 + $0x328] sm:$0xff]
  %v3779 = vmul.f32 %v2249, %v3575
  %v3780 = vmul.f32 %v2250, %v3576
  %v3781 = vmul.f32 %v2251, %v3577
  %v3782 = vmul.f32 %v2252, %v3578
  %v3783 = vmul.f32 %v2253, %v3579
  %v3784 = vmul.f32 %v2254, %v3580
  %v3785 = vmul.f32 %v2255, %v3581
  %v3786 = vmul.f32 %v2256, %v3582
  %v3787 = vmul.f32 %v2257, %v3583
  %v3788 = vmul.f32 %v2258, %v3584
  %v3789 = vmul.f32 %v2259, %v3585
  %v3790 = vmul.f32 %v2260, %v3586
  %v3791 = vmul.f32 %v2261, %v3587
  %v3792 = vmul.f32 %v2262, %v3588
  %v3793 = vmul.f32 %v2263, %v3589
  %v3794 = vmul.f32 %v2264, %v3590
  %v3795 = vmul.f32 %v2265, %v3591
  %v3796 = vmul.f32 %v2266, %v3592
  %v3797 = vmul.f32 %v2267, %v3593
  %v3798 = vmul.f32 %v2268, %v3594
  %v3799 = vmul.f32 %v2269, %v3595
  %v3800 = vmul.f32 %v2270, %v3596
  %v3801 = vmul.f32 %v2271, %v3597
  %v3802 = vmul.f32 %v2272, %v3598
  %v3803 = vmul.f32 %v2273, %v3599
  %v3804 = vmul.f32 %v2274, %v3600
  %v3805 = vmul.f32 %v2275, %v3601
  %v3806 = vmul.f32 %v2276, %v3602
  %v3807 = vmul.f32 %v2277, %v3603
  %v3808 = vmul.f32 %v2278, %v3604
  %v3809 = vmul.f32 %v2279, %v3605
  %v3810 = vmul.f32 %v2280, %v3606
  %v3811 = vmul.f32 %v2281, %v3607
  %v3812 = vmul.f32 %v2282, %v3608
  %v3813 = vmul.f32 %v2283, %v3609
  %v3814 = vmul.f32 %v2284, %v3610
  %v3815 = vmul.f32 %v2285, %v3611
  %v3816 = vmul.f32 %v2286, %v3612
  %v3817 = vmul.f32 %v2287, %v3613
  %v3818 = vmul.f32 %v2288, %v3614
  %v3819 = vmul.f32 %v2289, %v3615
  %v3820 = vmul.f32 %v2290, %v3616
  %v3821 = vmul.f32 %v2291, %v3617
  %v3822 = vmul.f32 %v2292, %v3618
  %v3823 = vmul.f32 %v2293, %v3619
  %v3824 = vmul.f32 %v2294, %v3620
  %v3825 = vmul.f32 %v2295, %v3621
  %v3826 = vmul.f32 %v2296, %v3622
  %v3827 = vmul.f32 %v2297, %v3623
  %v3828 = vmul.f32 %v2298, %v3624
  %v3829 = vmul.f32 %v2299, %v3625
  %v3830 = vmul.f32 %v2300, %v3626
  %v3831 = vmul.f32 %v2301, %v3627
  %v3832 = vmul.f32 %v2302, %v3628
  %v3833 = vmul.f32 %v2303, %v3629
  %v3834 = vmul.f32 %v2304, %v3630
  %v3835 = vmul.f32 %v2305, %v3631
  %v3836 = vmul.f32 %v2306, %v3632
  %v3837 = vmul.f32 %v2307, %v3633
  %v3838 = vmul.f32 %v2308, %v3634
  %v3839 = vmul.f32 %v2309, %v3635
  %v3840 = vmul.f32 %v2310, %v3636
  %v3841 = vmul.f32 %v2311, %v3637
  %v3842 = vmul.f32 %v2312, %v3638
  %v3843 = vmul.f32 %v2313, %v3639
  %v3844 = vmul.f32 %v2314, %v3640
  %v3845 = vmul.f32 %v2315, %v3641
  %v3846 = vmul.f32 %v2316, %v3642
  %v3847 = vmul.f32 %v2317, %v3643
  %v3848 = vmul.f32 %v2318, %v3644
  %v3849 = vmul.f32 %v2319, %v3645
  %v3850 = vmul.f32 %v2320, %v3646
  %v3851 = vmul.f32 %v2321, %v3647
  %v3852 = vmul.f32 %v2322, %v3648
  %v3853 = vmul.f32 %v2323, %v3649
  %v3854 = vmul.f32 %v2324, %v3650
  %v3855 = vmul.f32 %v2325, %v3651
  %v3856 = vmul.f32 %v2326, %v3652
  %v3857 = vmul.f32 %v2327, %v3653
  %v3858 = vmul.f32 %v2328, %v3654
  %v3859 = vmul.f32 %v2329, %v3655
  %v3860 = vmul.f32 %v2330, %v3656
  %v3861 = vmul.f32 %v2331, %v3657
  %v3862 = vmul.f32 %v2332, %v3658
  %v3863 = vmul.f32 %v2333, %v3659
  %v3864 = vmul.f32 %v2334, %v3660
  %v3865 = vmul.f32 %v2335, %v3661
  %v3866 = vmul.f32 %v2336, %v3662
  %v3867 = vmul.f32 %v2337, %v3663
  %v3868 = vmul.f32 %v2338, %v3664
  %v3869 = vmul.f32 %v2339, %v3665
  %v3870 = vmul.f32 %v2340, %v3666
  %v3871 = vmul.f32 %v2341, %v3667
  %v3872 = vmul.f32 %v2342, %v3668
  %v3873 = vmul.f32 %v2343, %v3669
  %v3874 = vmul.f32 %v2344, %v3670
  %v3875 = vmul.f32 %v2345, %v3671
  %v3876 = vmul.f32 %v2346, %v3672
  %v3877 = vmul.f32 %v2347, %v3673
  %v3878 = vmul.f32 %v2348, %v3674
  %v3879 = vmul.f32 %v2349, %v3675
  %v3880 = vmul.f32 %v2350, %v3676
  %v3881 = vsub.f32 %v3677, %v3779
  %v3882 = vsub.f32 %v3678, %v3780
  %v3883 = vsub.f32 %v3679, %v3781
  %v3884 = vsub.f32 %v3680, %v3782
  %v3885 = vsub.f32 %v3681, %v3783
  %v3886 = vsub.f32 %v3682, %v3784
  %v3887 = vsub.f32 %v3683, %v3785
  %v3888 = vsub.f32 %v3684, %v3786
  %v3889 = vsub.f32 %v3685, %v3787
  %v3890 = vsub.f32 %v3686, %v3788
  %v3891 = vsub.f32 %v3687, %v3789
  %v3892 = vsub.f32 %v3688, %v3790
  %v3893 = vsub.f32 %v3689, %v3791
  %v3894 = vsub.f32 %v3690, %v3792
  %v3895 = vsub.f32 %v3691, %v3793
  %v3896 = vsub.f32 %v3692, %v3794
  %v3897 = vsub.f32 %v3693, %v3795
  %v3898 = vsub.f32 %v3694, %v3796
  %v3899 = vsub.f32 %v3695, %v3797
  %v3900 = vsub.f32 %v3696, %v3798
  %v3901 = vsub.f32 %v3697, %v3799
  %v3902 = vsub.f32 %v3698, %v3800
  %v3903 = vsub.f32 %v3699, %v3801
  %v3904 = vsub.f32 %v3700, %v3802
  %v3905 = vsub.f32 %v3701, %v3803
  %v3906 = vsub.f32 %v3702, %v3804
  %v3907 = vsub.f32 %v3703, %v3805
  %v3908 = vsub.f32 %v3704, %v3806
  %v3909 = vsub.f32 %v3705, %v3807
  %v3910 = vsub.f32 %v3706, %v3808
  %v3911 = vsub.f32 %v3707, %v3809
  %v3912 = vsub.f32 %v3708, %v3810
  %v3913 = vsub.f32 %v3709, %v3811
  %v3914 = vsub.f32 %v3710, %v3812
  %v3915 = vsub.f32 %v3711, %v3813
  %v3916 = vsub.f32 %v3712, %v3814
  %v3917 = vsub.f32 %v3713, %v3815
  %v3918 = vsub.f32 %v3714, %v3816
  %v3919 = vsub.f32 %v3715, %v3817
  %v3920 = vsub.f32 %v3716, %v3818
  %v3921 = vsub.f32 %v3717, %v3819
  %v3922 = vsub.f32 %v3718, %v3820
  %v3923 = vsub.f32 %v3719, %v3821
  %v3924 = vsub.f32 %v3720, %v3822
  %v3925 = vsub.f32 %v3721, %v3823
  %v3926 = vsub.f32 %v3722, %v3824
  %v3927 = vsub.f32 %v3723, %v3825
  %v3928 = vsub.f32 %v3724, %v3826
  %v3929 = vsub.f32 %v3725, %v3827
  %v3930 = vsub.f32 %v3726, %v3828
  %v3931 = vsub.f32 %v3727, %v3829
  %v3932 = vsub.f32 %v3728, %v3830
  %v3933 = vsub.f32 %v3729, %v3831
  %v3934 = vsub.f32 %v3730, %v3832
  %v3935 = vsub.f32 %v3731, %v3833
  %v3936 = vsub.f32 %v3732, %v3834
  %v3937 = vsub.f32 %v3733, %v3835
  %v3938 = vsub.f32 %v3734, %v3836
  %v3939 = vsub.f32 %v3735, %v3837
  %v3940 = vsub.f32 %v3736, %v3838
  %v3941 = vsub.f32 %v3737, %v3839
  %v3942 = vsub.f32 %v3738, %v3840
  %v3943 = vsub.f32 %v3739, %v3841
  %v3944 = vsub.f32 %v3740, %v3842
  %v3945 = vsub.f32 %v3741, %v3843
  %v3946 = vsub.f32 %v3742, %v3844
  %v3947 = vsub.f32 %v3743, %v3845
  %v3948 = vsub.f32 %v3744, %v3846
  %v3949 = vsub.f32 %v3745, %v3847
  %v3950 = vsub.f32 %v3746, %v3848
  %v3951 = vsub.f32 %v3747, %v3849
  %v3952 = vsub.f32 %v3748, %v3850
  %v3953 = vsub.f32 %v3749, %v3851
  %v3954 = vsub.f32 %v3750, %v3852
  %v3955 = vsub.f32 %v3751, %v3853
  %v3956 = vsub.f32 %v3752, %v3854
  %v3957 = vsub.f32 %v3753, %v3855
  %v3958 = vsub.f32 %v3754, %v3856
  %v3959 = vsub.f32 %v3755, %v3857
  %v3960 = vsub.f32 %v3756, %v3858
  %v3961 = vsub.f32 %v3757, %v3859
  %v3962 = vsub.f32 %v3758, %v3860
  %v3963 = vsub.f32 %v3759, %v3861
  %v3964 = vsub.f32 %v3760, %v3862
  %v3965 = vsub.f32 %v3761, %v3863
  %v3966 = vsub.f32 %v3762, %v3864
  %v3967 = vsub.f32 %v3763, %v3865
  %v3968 = vsub.f32 %v3764, %v3866
  %v3969 = vsub.f32 %v3765, %v3867
  %v3970 = vsub.f32 %v3766, %v3868
  %v3971 = vsub.f32 %v3767, %v3869
  %v3972 = vsub.f32 %v3768, %v3870
  %v3973 = vsub.f32 %v3769, %v3871
  %v3974 = vsub.f32 %v3770, %v3872
  %v3975 = vsub.f32 %v3771, %v3873
  %v3976 = vsub.f32 %v3772, %v3874
  %v3977 = vsub.f32 %v3773, %v3875
  %v3978 = vsub.f32 %v3774, %v3876
  %v3979 = vsub.f32 %v3775, %v3877
  %v3980 = vsub.f32 %v3776, %v3878
  %v3981 = vsub.f32 %v3777, %v3879
  %v3982 = vsub.f32 %v3778, %v3880
  %3984 = vset.pattern.permute.xlu0 0
  %3985 = vperm.xlu0 %3984, %v3575
  %v3986 = vpop.permute.xlu0 %3985
  %3989 = vset.pattern.permute.xlu0 0
  %3990 = vperm.xlu0 %3989, %v3576
  %v3991 = vpop.permute.xlu0 %3990
  %3994 = vset.pattern.permute.xlu0 0
  %3995 = vperm.xlu0 %3994, %v3577
  %v3996 = vpop.permute.xlu0 %3995
  %3999 = vset.pattern.permute.xlu0 0
  %4000 = vperm.xlu0 %3999, %v3578
  %v4001 = vpop.permute.xlu0 %4000
  %4004 = vset.pattern.permute.xlu0 0
  %4005 = vperm.xlu0 %4004, %v3579
  %v4006 = vpop.permute.xlu0 %4005
  %4009 = vset.pattern.permute.xlu0 0
  %4010 = vperm.xlu0 %4009, %v3580
  %v4011 = vpop.permute.xlu0 %4010
  %4014 = vset.pattern.permute.xlu0 0
  %4015 = vperm.xlu0 %4014, %v3581
  %v4016 = vpop.permute.xlu0 %4015
  %4019 = vset.pattern.permute.xlu0 0
  %4020 = vperm.xlu0 %4019, %v3582
  %v4021 = vpop.permute.xlu0 %4020
  %4024 = vset.pattern.permute.xlu0 0
  %4025 = vperm.xlu0 %4024, %v3583
  %v4026 = vpop.permute.xlu0 %4025
  %4029 = vset.pattern.permute.xlu0 0
  %4030 = vperm.xlu0 %4029, %v3584
  %v4031 = vpop.permute.xlu0 %4030
  %4034 = vset.pattern.permute.xlu0 0
  %4035 = vperm.xlu0 %4034, %v3585
  %v4036 = vpop.permute.xlu0 %4035
  %4039 = vset.pattern.permute.xlu0 0
  %4040 = vperm.xlu0 %4039, %v3586
  %v4041 = vpop.permute.xlu0 %4040
  %4044 = vset.pattern.permute.xlu0 0
  %4045 = vperm.xlu0 %4044, %v3587
  %v4046 = vpop.permute.xlu0 %4045
  %4049 = vset.pattern.permute.xlu0 0
  %4050 = vperm.xlu0 %4049, %v3588
  %v4051 = vpop.permute.xlu0 %4050
  %4054 = vset.pattern.permute.xlu0 0
  %4055 = vperm.xlu0 %4054, %v3589
  %v4056 = vpop.permute.xlu0 %4055
  %4059 = vset.pattern.permute.xlu0 0
  %4060 = vperm.xlu0 %4059, %v3590
  %v4061 = vpop.permute.xlu0 %4060
  %4064 = vset.pattern.permute.xlu0 0
  %4065 = vperm.xlu0 %4064, %v3591
  %v4066 = vpop.permute.xlu0 %4065
  %4069 = vset.pattern.permute.xlu0 0
  %4070 = vperm.xlu0 %4069, %v3592
  %v4071 = vpop.permute.xlu0 %4070
  %4074 = vset.pattern.permute.xlu0 0
  %4075 = vperm.xlu0 %4074, %v3593
  %v4076 = vpop.permute.xlu0 %4075
  %4079 = vset.pattern.permute.xlu0 0
  %4080 = vperm.xlu0 %4079, %v3594
  %v4081 = vpop.permute.xlu0 %4080
  %4084 = vset.pattern.permute.xlu0 0
  %4085 = vperm.xlu0 %4084, %v3595
  %v4086 = vpop.permute.xlu0 %4085
  %4089 = vset.pattern.permute.xlu0 0
  %4090 = vperm.xlu0 %4089, %v3596
  %v4091 = vpop.permute.xlu0 %4090
  %4094 = vset.pattern.permute.xlu0 0
  %4095 = vperm.xlu0 %4094, %v3597
  %v4096 = vpop.permute.xlu0 %4095
  %4099 = vset.pattern.permute.xlu0 0
  %4100 = vperm.xlu0 %4099, %v3598
  %v4101 = vpop.permute.xlu0 %4100
  %4104 = vset.pattern.permute.xlu0 0
  %4105 = vperm.xlu0 %4104, %v3599
  %v4106 = vpop.permute.xlu0 %4105
  %4109 = vset.pattern.permute.xlu0 0
  %4110 = vperm.xlu0 %4109, %v3600
  %v4111 = vpop.permute.xlu0 %4110
  %4114 = vset.pattern.permute.xlu0 0
  %4115 = vperm.xlu0 %4114, %v3601
  %v4116 = vpop.permute.xlu0 %4115
  %4119 = vset.pattern.permute.xlu0 0
  %4120 = vperm.xlu0 %4119, %v3602
  %v4121 = vpop.permute.xlu0 %4120
  %4124 = vset.pattern.permute.xlu0 0
  %4125 = vperm.xlu0 %4124, %v3603
  %v4126 = vpop.permute.xlu0 %4125
  %4129 = vset.pattern.permute.xlu0 0
  %4130 = vperm.xlu0 %4129, %v3604
  %v4131 = vpop.permute.xlu0 %4130
  %4134 = vset.pattern.permute.xlu0 0
  %4135 = vperm.xlu0 %4134, %v3605
  %v4136 = vpop.permute.xlu0 %4135
  %4139 = vset.pattern.permute.xlu0 0
  %4140 = vperm.xlu0 %4139, %v3606
  %v4141 = vpop.permute.xlu0 %4140
  %4144 = vset.pattern.permute.xlu0 0
  %4145 = vperm.xlu0 %4144, %v3607
  %v4146 = vpop.permute.xlu0 %4145
  %4149 = vset.pattern.permute.xlu0 0
  %4150 = vperm.xlu0 %4149, %v3608
  %v4151 = vpop.permute.xlu0 %4150
  %4154 = vset.pattern.permute.xlu0 0
  %4155 = vperm.xlu0 %4154, %v3609
  %v4156 = vpop.permute.xlu0 %4155
  %4159 = vset.pattern.permute.xlu0 0
  %4160 = vperm.xlu0 %4159, %v3610
  %v4161 = vpop.permute.xlu0 %4160
  %4164 = vset.pattern.permute.xlu0 0
  %4165 = vperm.xlu0 %4164, %v3611
  %v4166 = vpop.permute.xlu0 %4165
  %4169 = vset.pattern.permute.xlu0 0
  %4170 = vperm.xlu0 %4169, %v3612
  %v4171 = vpop.permute.xlu0 %4170
  %4174 = vset.pattern.permute.xlu0 0
  %4175 = vperm.xlu0 %4174, %v3613
  %v4176 = vpop.permute.xlu0 %4175
  %4179 = vset.pattern.permute.xlu0 0
  %4180 = vperm.xlu0 %4179, %v3614
  %v4181 = vpop.permute.xlu0 %4180
  %4184 = vset.pattern.permute.xlu0 0
  %4185 = vperm.xlu0 %4184, %v3615
  %v4186 = vpop.permute.xlu0 %4185
  %4189 = vset.pattern.permute.xlu0 0
  %4190 = vperm.xlu0 %4189, %v3616
  %v4191 = vpop.permute.xlu0 %4190
  %4194 = vset.pattern.permute.xlu0 0
  %4195 = vperm.xlu0 %4194, %v3617
  %v4196 = vpop.permute.xlu0 %4195
  %4199 = vset.pattern.permute.xlu0 0
  %4200 = vperm.xlu0 %4199, %v3618
  %v4201 = vpop.permute.xlu0 %4200
  %4204 = vset.pattern.permute.xlu0 0
  %4205 = vperm.xlu0 %4204, %v3619
  %v4206 = vpop.permute.xlu0 %4205
  %4209 = vset.pattern.permute.xlu0 0
  %4210 = vperm.xlu0 %4209, %v3620
  %v4211 = vpop.permute.xlu0 %4210
  %4214 = vset.pattern.permute.xlu0 0
  %4215 = vperm.xlu0 %4214, %v3621
  %v4216 = vpop.permute.xlu0 %4215
  %4219 = vset.pattern.permute.xlu0 0
  %4220 = vperm.xlu0 %4219, %v3622
  %v4221 = vpop.permute.xlu0 %4220
  %4224 = vset.pattern.permute.xlu0 0
  %4225 = vperm.xlu0 %4224, %v3623
  %v4226 = vpop.permute.xlu0 %4225
  %4229 = vset.pattern.permute.xlu0 0
  %4230 = vperm.xlu0 %4229, %v3624
  %v4231 = vpop.permute.xlu0 %4230
  %4234 = vset.pattern.permute.xlu0 0
  %4235 = vperm.xlu0 %4234, %v3625
  %v4236 = vpop.permute.xlu0 %4235
  %4239 = vset.pattern.permute.xlu0 0
  %4240 = vperm.xlu0 %4239, %v3626
  %v4241 = vpop.permute.xlu0 %4240
  %4244 = vset.pattern.permute.xlu0 0
  %4245 = vperm.xlu0 %4244, %v3627
  %v4246 = vpop.permute.xlu0 %4245
  %4249 = vset.pattern.permute.xlu0 0
  %4250 = vperm.xlu0 %4249, %v3628
  %v4251 = vpop.permute.xlu0 %4250
  %4254 = vset.pattern.permute.xlu0 0
  %4255 = vperm.xlu0 %4254, %v3629
  %v4256 = vpop.permute.xlu0 %4255
  %4259 = vset.pattern.permute.xlu0 0
  %4260 = vperm.xlu0 %4259, %v3630
  %v4261 = vpop.permute.xlu0 %4260
  %4264 = vset.pattern.permute.xlu0 0
  %4265 = vperm.xlu0 %4264, %v3631
  %v4266 = vpop.permute.xlu0 %4265
  %4269 = vset.pattern.permute.xlu0 0
  %4270 = vperm.xlu0 %4269, %v3632
  %v4271 = vpop.permute.xlu0 %4270
  %4274 = vset.pattern.permute.xlu0 0
  %4275 = vperm.xlu0 %4274, %v3633
  %v4276 = vpop.permute.xlu0 %4275
  %4279 = vset.pattern.permute.xlu0 0
  %4280 = vperm.xlu0 %4279, %v3634
  %v4281 = vpop.permute.xlu0 %4280
  %4284 = vset.pattern.permute.xlu0 0
  %4285 = vperm.xlu0 %4284, %v3635
  %v4286 = vpop.permute.xlu0 %4285
  %4289 = vset.pattern.permute.xlu0 0
  %4290 = vperm.xlu0 %4289, %v3636
  %v4291 = vpop.permute.xlu0 %4290
  %4294 = vset.pattern.permute.xlu0 0
  %4295 = vperm.xlu0 %4294, %v3637
  %v4296 = vpop.permute.xlu0 %4295
  %4299 = vset.pattern.permute.xlu0 0
  %4300 = vperm.xlu0 %4299, %v3638
  %v4301 = vpop.permute.xlu0 %4300
  %4304 = vset.pattern.permute.xlu0 0
  %4305 = vperm.xlu0 %4304, %v3639
  %v4306 = vpop.permute.xlu0 %4305
  %4309 = vset.pattern.permute.xlu0 0
  %4310 = vperm.xlu0 %4309, %v3640
  %v4311 = vpop.permute.xlu0 %4310
  %4314 = vset.pattern.permute.xlu0 0
  %4315 = vperm.xlu0 %4314, %v3641
  %v4316 = vpop.permute.xlu0 %4315
  %4319 = vset.pattern.permute.xlu0 0
  %4320 = vperm.xlu0 %4319, %v3642
  %v4321 = vpop.permute.xlu0 %4320
  %4324 = vset.pattern.permute.xlu0 0
  %4325 = vperm.xlu0 %4324, %v3643
  %v4326 = vpop.permute.xlu0 %4325
  %4329 = vset.pattern.permute.xlu0 0
  %4330 = vperm.xlu0 %4329, %v3644
  %v4331 = vpop.permute.xlu0 %4330
  %4334 = vset.pattern.permute.xlu0 0
  %4335 = vperm.xlu0 %4334, %v3645
  %v4336 = vpop.permute.xlu0 %4335
  %4339 = vset.pattern.permute.xlu0 0
  %4340 = vperm.xlu0 %4339, %v3646
  %v4341 = vpop.permute.xlu0 %4340
  %4344 = vset.pattern.permute.xlu0 0
  %4345 = vperm.xlu0 %4344, %v3647
  %v4346 = vpop.permute.xlu0 %4345
  %4349 = vset.pattern.permute.xlu0 0
  %4350 = vperm.xlu0 %4349, %v3648
  %v4351 = vpop.permute.xlu0 %4350
  %4354 = vset.pattern.permute.xlu0 0
  %4355 = vperm.xlu0 %4354, %v3649
  %v4356 = vpop.permute.xlu0 %4355
  %4359 = vset.pattern.permute.xlu0 0
  %4360 = vperm.xlu0 %4359, %v3650
  %v4361 = vpop.permute.xlu0 %4360
  %4364 = vset.pattern.permute.xlu0 0
  %4365 = vperm.xlu0 %4364, %v3651
  %v4366 = vpop.permute.xlu0 %4365
  %4369 = vset.pattern.permute.xlu0 0
  %4370 = vperm.xlu0 %4369, %v3652
  %v4371 = vpop.permute.xlu0 %4370
  %4374 = vset.pattern.permute.xlu0 0
  %4375 = vperm.xlu0 %4374, %v3653
  %v4376 = vpop.permute.xlu0 %4375
  %4379 = vset.pattern.permute.xlu0 0
  %4380 = vperm.xlu0 %4379, %v3654
  %v4381 = vpop.permute.xlu0 %4380
  %4384 = vset.pattern.permute.xlu0 0
  %4385 = vperm.xlu0 %4384, %v3655
  %v4386 = vpop.permute.xlu0 %4385
  %4389 = vset.pattern.permute.xlu0 0
  %4390 = vperm.xlu0 %4389, %v3656
  %v4391 = vpop.permute.xlu0 %4390
  %4394 = vset.pattern.permute.xlu0 0
  %4395 = vperm.xlu0 %4394, %v3657
  %v4396 = vpop.permute.xlu0 %4395
  %4399 = vset.pattern.permute.xlu0 0
  %4400 = vperm.xlu0 %4399, %v3658
  %v4401 = vpop.permute.xlu0 %4400
  %4404 = vset.pattern.permute.xlu0 0
  %4405 = vperm.xlu0 %4404, %v3659
  %v4406 = vpop.permute.xlu0 %4405
  %4409 = vset.pattern.permute.xlu0 0
  %4410 = vperm.xlu0 %4409, %v3660
  %v4411 = vpop.permute.xlu0 %4410
  %4414 = vset.pattern.permute.xlu0 0
  %4415 = vperm.xlu0 %4414, %v3661
  %v4416 = vpop.permute.xlu0 %4415
  %4419 = vset.pattern.permute.xlu0 0
  %4420 = vperm.xlu0 %4419, %v3662
  %v4421 = vpop.permute.xlu0 %4420
  %4424 = vset.pattern.permute.xlu0 0
  %4425 = vperm.xlu0 %4424, %v3663
  %v4426 = vpop.permute.xlu0 %4425
  %4429 = vset.pattern.permute.xlu0 0
  %4430 = vperm.xlu0 %4429, %v3664
  %v4431 = vpop.permute.xlu0 %4430
  %4434 = vset.pattern.permute.xlu0 0
  %4435 = vperm.xlu0 %4434, %v3665
  %v4436 = vpop.permute.xlu0 %4435
  %4439 = vset.pattern.permute.xlu0 0
  %4440 = vperm.xlu0 %4439, %v3666
  %v4441 = vpop.permute.xlu0 %4440
  %4444 = vset.pattern.permute.xlu0 0
  %4445 = vperm.xlu0 %4444, %v3667
  %v4446 = vpop.permute.xlu0 %4445
  %4449 = vset.pattern.permute.xlu0 0
  %4450 = vperm.xlu0 %4449, %v3668
  %v4451 = vpop.permute.xlu0 %4450
  %4454 = vset.pattern.permute.xlu0 0
  %4455 = vperm.xlu0 %4454, %v3669
  %v4456 = vpop.permute.xlu0 %4455
  %4459 = vset.pattern.permute.xlu0 0
  %4460 = vperm.xlu0 %4459, %v3670
  %v4461 = vpop.permute.xlu0 %4460
  %4464 = vset.pattern.permute.xlu0 0
  %4465 = vperm.xlu0 %4464, %v3671
  %v4466 = vpop.permute.xlu0 %4465
  %4469 = vset.pattern.permute.xlu0 0
  %4470 = vperm.xlu0 %4469, %v3672
  %v4471 = vpop.permute.xlu0 %4470
  %4474 = vset.pattern.permute.xlu0 0
  %4475 = vperm.xlu0 %4474, %v3673
  %v4476 = vpop.permute.xlu0 %4475
  %4479 = vset.pattern.permute.xlu0 0
  %4480 = vperm.xlu0 %4479, %v3674
  %v4481 = vpop.permute.xlu0 %4480
  %4484 = vset.pattern.permute.xlu0 0
  %4485 = vperm.xlu0 %4484, %v3675
  %v4486 = vpop.permute.xlu0 %4485
  %4489 = vset.pattern.permute.xlu0 0
  %4490 = vperm.xlu0 %4489, %v3676
  %v4491 = vpop.permute.xlu0 %4490
  %v4493 = vmul.f32 %v1231, %v3986
  %v4494 = vmul.f32 %v1233, %v3986
  %v4495 = vmul.f32 %v1237, %v3991
  %v4496 = vmul.f32 %v1239, %v3991
  %v4497 = vmul.f32 %v1243, %v3996
  %v4498 = vmul.f32 %v1245, %v3996
  %v4499 = vmul.f32 %v1249, %v4001
  %v4500 = vmul.f32 %v1251, %v4001
  %v4501 = vmul.f32 %v1255, %v4006
  %v4502 = vmul.f32 %v1257, %v4006
  %v4503 = vmul.f32 %v1261, %v4011
  %v4504 = vmul.f32 %v1263, %v4011
  %v4505 = vmul.f32 %v1267, %v4016
  %v4506 = vmul.f32 %v1269, %v4016
  %v4507 = vmul.f32 %v1273, %v4021
  %v4508 = vmul.f32 %v1275, %v4021
  %v4509 = vmul.f32 %v1279, %v4026
  %v4510 = vmul.f32 %v1281, %v4026
  %v4511 = vmul.f32 %v1285, %v4031
  %v4512 = vmul.f32 %v1287, %v4031
  %v4513 = vmul.f32 %v1291, %v4036
  %v4514 = vmul.f32 %v1293, %v4036
  %v4515 = vmul.f32 %v1297, %v4041
  %v4516 = vmul.f32 %v1299, %v4041
  %v4517 = vmul.f32 %v1303, %v4046
  %v4518 = vmul.f32 %v1305, %v4046
  %v4519 = vmul.f32 %v1309, %v4051
  %v4520 = vmul.f32 %v1311, %v4051
  %v4521 = vmul.f32 %v1315, %v4056
  %v4522 = vmul.f32 %v1317, %v4056
  %v4523 = vmul.f32 %v1321, %v4061
  %v4524 = vmul.f32 %v1323, %v4061
  %v4525 = vmul.f32 %v1327, %v4066
  %v4526 = vmul.f32 %v1329, %v4066
  %v4527 = vmul.f32 %v1333, %v4071
  %v4528 = vmul.f32 %v1335, %v4071
  %v4529 = vmul.f32 %v1339, %v4076
  %v4530 = vmul.f32 %v1341, %v4076
  %v4531 = vmul.f32 %v1345, %v4081
  %v4532 = vmul.f32 %v1347, %v4081
  %v4533 = vmul.f32 %v1351, %v4086
  %v4534 = vmul.f32 %v1353, %v4086
  %v4535 = vmul.f32 %v1357, %v4091
  %v4536 = vmul.f32 %v1359, %v4091
  %v4537 = vmul.f32 %v1363, %v4096
  %v4538 = vmul.f32 %v1365, %v4096
  %v4539 = vmul.f32 %v1369, %v4101
  %v4540 = vmul.f32 %v1371, %v4101
  %v4541 = vmul.f32 %v1375, %v4106
  %v4542 = vmul.f32 %v1377, %v4106
  %v4543 = vmul.f32 %v1381, %v4111
  %v4544 = vmul.f32 %v1383, %v4111
  %v4545 = vmul.f32 %v1387, %v4116
  %v4546 = vmul.f32 %v1389, %v4116
  %v4547 = vmul.f32 %v1393, %v4121
  %v4548 = vmul.f32 %v1395, %v4121
  %v4549 = vmul.f32 %v1399, %v4126
  %v4550 = vmul.f32 %v1401, %v4126
  %v4551 = vmul.f32 %v1405, %v4131
  %v4552 = vmul.f32 %v1407, %v4131
  %v4553 = vmul.f32 %v1411, %v4136
  %v4554 = vmul.f32 %v1413, %v4136
  %v4555 = vmul.f32 %v1417, %v4141
  %v4556 = vmul.f32 %v1419, %v4141
  %v4557 = vmul.f32 %v1423, %v4146
  %v4558 = vmul.f32 %v1425, %v4146
  %v4559 = vmul.f32 %v1429, %v4151
  %v4560 = vmul.f32 %v1431, %v4151
  %v4561 = vmul.f32 %v1435, %v4156
  %v4562 = vmul.f32 %v1437, %v4156
  %v4563 = vmul.f32 %v1441, %v4161
  %v4564 = vmul.f32 %v1443, %v4161
  %v4565 = vmul.f32 %v1447, %v4166
  %v4566 = vmul.f32 %v1449, %v4166
  %v4567 = vmul.f32 %v1453, %v4171
  %v4568 = vmul.f32 %v1455, %v4171
  %v4569 = vmul.f32 %v1459, %v4176
  %v4570 = vmul.f32 %v1461, %v4176
  %v4571 = vmul.f32 %v1465, %v4181
  %v4572 = vmul.f32 %v1467, %v4181
  %v4573 = vmul.f32 %v1471, %v4186
  %v4574 = vmul.f32 %v1473, %v4186
  %v4575 = vmul.f32 %v1477, %v4191
  %v4576 = vmul.f32 %v1479, %v4191
  %v4577 = vmul.f32 %v1483, %v4196
  %v4578 = vmul.f32 %v1485, %v4196
  %v4579 = vmul.f32 %v1489, %v4201
  %v4580 = vmul.f32 %v1491, %v4201
  %v4581 = vmul.f32 %v1495, %v4206
  %v4582 = vmul.f32 %v1497, %v4206
  %v4583 = vmul.f32 %v1501, %v4211
  %v4584 = vmul.f32 %v1503, %v4211
  %v4585 = vmul.f32 %v1507, %v4216
  %v4586 = vmul.f32 %v1509, %v4216
  %v4587 = vmul.f32 %v1513, %v4221
  %v4588 = vmul.f32 %v1515, %v4221
  %v4589 = vmul.f32 %v1519, %v4226
  %v4590 = vmul.f32 %v1521, %v4226
  %v4591 = vmul.f32 %v1525, %v4231
  %v4592 = vmul.f32 %v1527, %v4231
  %v4593 = vmul.f32 %v1531, %v4236
  %v4594 = vmul.f32 %v1533, %v4236
  %v4595 = vmul.f32 %v1537, %v4241
  %v4596 = vmul.f32 %v1539, %v4241
  %v4597 = vmul.f32 %v1543, %v4246
  %v4598 = vmul.f32 %v1545, %v4246
  %v4599 = vmul.f32 %v1549, %v4251
  %v4600 = vmul.f32 %v1551, %v4251
  %v4601 = vmul.f32 %v1555, %v4256
  %v4602 = vmul.f32 %v1557, %v4256
  %v4603 = vmul.f32 %v1561, %v4261
  %v4604 = vmul.f32 %v1563, %v4261
  %v4605 = vmul.f32 %v1567, %v4266
  %v4606 = vmul.f32 %v1569, %v4266
  %v4607 = vmul.f32 %v1573, %v4271
  %v4608 = vmul.f32 %v1575, %v4271
  %v4609 = vmul.f32 %v1579, %v4276
  %v4610 = vmul.f32 %v1581, %v4276
  %v4611 = vmul.f32 %v1585, %v4281
  %v4612 = vmul.f32 %v1587, %v4281
  %v4613 = vmul.f32 %v1591, %v4286
  %v4614 = vmul.f32 %v1593, %v4286
  %v4615 = vmul.f32 %v1597, %v4291
  %v4616 = vmul.f32 %v1599, %v4291
  %v4617 = vmul.f32 %v1603, %v4296
  %v4618 = vmul.f32 %v1605, %v4296
  %v4619 = vmul.f32 %v1609, %v4301
  %v4620 = vmul.f32 %v1611, %v4301
  %v4621 = vmul.f32 %v1615, %v4306
  %v4622 = vmul.f32 %v1617, %v4306
  %v4623 = vmul.f32 %v1621, %v4311
  %v4624 = vmul.f32 %v1623, %v4311
  %v4625 = vmul.f32 %v1627, %v4316
  %v4626 = vmul.f32 %v1629, %v4316
  %v4627 = vmul.f32 %v1633, %v4321
  %v4628 = vmul.f32 %v1635, %v4321
  %v4629 = vmul.f32 %v1639, %v4326
  %v4630 = vmul.f32 %v1641, %v4326
  %v4631 = vmul.f32 %v1645, %v4331
  %v4632 = vmul.f32 %v1647, %v4331
  %v4633 = vmul.f32 %v1651, %v4336
  %v4634 = vmul.f32 %v1653, %v4336
  %v4635 = vmul.f32 %v1657, %v4341
  %v4636 = vmul.f32 %v1659, %v4341
  %v4637 = vmul.f32 %v1663, %v4346
  %v4638 = vmul.f32 %v1665, %v4346
  %v4639 = vmul.f32 %v1669, %v4351
  %v4640 = vmul.f32 %v1671, %v4351
  %v4641 = vmul.f32 %v1675, %v4356
  %v4642 = vmul.f32 %v1677, %v4356
  %v4643 = vmul.f32 %v1681, %v4361
  %v4644 = vmul.f32 %v1683, %v4361
  %v4645 = vmul.f32 %v1687, %v4366
  %v4646 = vmul.f32 %v1689, %v4366
  %v4647 = vmul.f32 %v1693, %v4371
  %v4648 = vmul.f32 %v1695, %v4371
  %v4649 = vmul.f32 %v1699, %v4376
  %v4650 = vmul.f32 %v1701, %v4376
  %v4651 = vmul.f32 %v1705, %v4381
  %v4652 = vmul.f32 %v1707, %v4381
  %v4653 = vmul.f32 %v1711, %v4386
  %v4654 = vmul.f32 %v1713, %v4386
  %v4655 = vmul.f32 %v1717, %v4391
  %v4656 = vmul.f32 %v1719, %v4391
  %v4657 = vmul.f32 %v1723, %v4396
  %v4658 = vmul.f32 %v1725, %v4396
  %v4659 = vmul.f32 %v1729, %v4401
  %v4660 = vmul.f32 %v1731, %v4401
  %v4661 = vmul.f32 %v1735, %v4406
  %v4662 = vmul.f32 %v1737, %v4406
  %v4663 = vmul.f32 %v1741, %v4411
  %v4664 = vmul.f32 %v1743, %v4411
  %v4665 = vmul.f32 %v1747, %v4416
  %v4666 = vmul.f32 %v1749, %v4416
  %v4667 = vmul.f32 %v1753, %v4421
  %v4668 = vmul.f32 %v1755, %v4421
  %v4669 = vmul.f32 %v1759, %v4426
  %v4670 = vmul.f32 %v1761, %v4426
  %v4671 = vmul.f32 %v1765, %v4431
  %v4672 = vmul.f32 %v1767, %v4431
  %v4673 = vmul.f32 %v1771, %v4436
  %v4674 = vmul.f32 %v1773, %v4436
  %v4675 = vmul.f32 %v1777, %v4441
  %v4676 = vmul.f32 %v1779, %v4441
  %v4677 = vmul.f32 %v1783, %v4446
  %v4678 = vmul.f32 %v1785, %v4446
  %v4679 = vmul.f32 %v1789, %v4451
  %v4680 = vmul.f32 %v1791, %v4451
  %v4681 = vmul.f32 %v1795, %v4456
  %v4682 = vmul.f32 %v1797, %v4456
  %v4683 = vmul.f32 %v1801, %v4461
  %v4684 = vmul.f32 %v1803, %v4461
  %v4685 = vmul.f32 %v1807, %v4466
  %v4686 = vmul.f32 %v1809, %v4466
  %v4687 = vmul.f32 %v1813, %v4471
  %v4688 = vmul.f32 %v1815, %v4471
  %v4689 = vmul.f32 %v1819, %v4476
  %v4690 = vmul.f32 %v1821, %v4476
  %v4691 = vmul.f32 %v1825, %v4481
  %v4692 = vmul.f32 %v1827, %v4481
  %v4693 = vmul.f32 %v1831, %v4486
  %v4694 = vmul.f32 %v1833, %v4486
  %v4695 = vmul.f32 %v1837, %v4491
  %v4696 = vmul.f32 %v1839, %v4491
  %4698 = vset.pattern.permute.xlu0 0
  %4699 = vperm.xlu0 %4698, %v3881
  %v4700 = vpop.permute.xlu0 %4699
  %4703 = vset.pattern.permute.xlu0 0
  %4704 = vperm.xlu0 %4703, %v3882
  %v4705 = vpop.permute.xlu0 %4704
  %4708 = vset.pattern.permute.xlu0 0
  %4709 = vperm.xlu0 %4708, %v3883
  %v4710 = vpop.permute.xlu0 %4709
  %4713 = vset.pattern.permute.xlu0 0
  %4714 = vperm.xlu0 %4713, %v3884
  %v4715 = vpop.permute.xlu0 %4714
  %4718 = vset.pattern.permute.xlu0 0
  %4719 = vperm.xlu0 %4718, %v3885
  %v4720 = vpop.permute.xlu0 %4719
  %4723 = vset.pattern.permute.xlu0 0
  %4724 = vperm.xlu0 %4723, %v3886
  %v4725 = vpop.permute.xlu0 %4724
  %4728 = vset.pattern.permute.xlu0 0
  %4729 = vperm.xlu0 %4728, %v3887
  %v4730 = vpop.permute.xlu0 %4729
  %4733 = vset.pattern.permute.xlu0 0
  %4734 = vperm.xlu0 %4733, %v3888
  %v4735 = vpop.permute.xlu0 %4734
  %4738 = vset.pattern.permute.xlu0 0
  %4739 = vperm.xlu0 %4738, %v3889
  %v4740 = vpop.permute.xlu0 %4739
  %4743 = vset.pattern.permute.xlu0 0
  %4744 = vperm.xlu0 %4743, %v3890
  %v4745 = vpop.permute.xlu0 %4744
  %4748 = vset.pattern.permute.xlu0 0
  %4749 = vperm.xlu0 %4748, %v3891
  %v4750 = vpop.permute.xlu0 %4749
  %4753 = vset.pattern.permute.xlu0 0
  %4754 = vperm.xlu0 %4753, %v3892
  %v4755 = vpop.permute.xlu0 %4754
  %4758 = vset.pattern.permute.xlu0 0
  %4759 = vperm.xlu0 %4758, %v3893
  %v4760 = vpop.permute.xlu0 %4759
  %4763 = vset.pattern.permute.xlu0 0
  %4764 = vperm.xlu0 %4763, %v3894
  %v4765 = vpop.permute.xlu0 %4764
  %4768 = vset.pattern.permute.xlu0 0
  %4769 = vperm.xlu0 %4768, %v3895
  %v4770 = vpop.permute.xlu0 %4769
  %4773 = vset.pattern.permute.xlu0 0
  %4774 = vperm.xlu0 %4773, %v3896
  %v4775 = vpop.permute.xlu0 %4774
  %4778 = vset.pattern.permute.xlu0 0
  %4779 = vperm.xlu0 %4778, %v3897
  %v4780 = vpop.permute.xlu0 %4779
  %4783 = vset.pattern.permute.xlu0 0
  %4784 = vperm.xlu0 %4783, %v3898
  %v4785 = vpop.permute.xlu0 %4784
  %4788 = vset.pattern.permute.xlu0 0
  %4789 = vperm.xlu0 %4788, %v3899
  %v4790 = vpop.permute.xlu0 %4789
  %4793 = vset.pattern.permute.xlu0 0
  %4794 = vperm.xlu0 %4793, %v3900
  %v4795 = vpop.permute.xlu0 %4794
  %4798 = vset.pattern.permute.xlu0 0
  %4799 = vperm.xlu0 %4798, %v3901
  %v4800 = vpop.permute.xlu0 %4799
  %4803 = vset.pattern.permute.xlu0 0
  %4804 = vperm.xlu0 %4803, %v3902
  %v4805 = vpop.permute.xlu0 %4804
  %4808 = vset.pattern.permute.xlu0 0
  %4809 = vperm.xlu0 %4808, %v3903
  %v4810 = vpop.permute.xlu0 %4809
  %4813 = vset.pattern.permute.xlu0 0
  %4814 = vperm.xlu0 %4813, %v3904
  %v4815 = vpop.permute.xlu0 %4814
  %4818 = vset.pattern.permute.xlu0 0
  %4819 = vperm.xlu0 %4818, %v3905
  %v4820 = vpop.permute.xlu0 %4819
  %4823 = vset.pattern.permute.xlu0 0
  %4824 = vperm.xlu0 %4823, %v3906
  %v4825 = vpop.permute.xlu0 %4824
  %4828 = vset.pattern.permute.xlu0 0
  %4829 = vperm.xlu0 %4828, %v3907
  %v4830 = vpop.permute.xlu0 %4829
  %4833 = vset.pattern.permute.xlu0 0
  %4834 = vperm.xlu0 %4833, %v3908
  %v4835 = vpop.permute.xlu0 %4834
  %4838 = vset.pattern.permute.xlu0 0
  %4839 = vperm.xlu0 %4838, %v3909
  %v4840 = vpop.permute.xlu0 %4839
  %4843 = vset.pattern.permute.xlu0 0
  %4844 = vperm.xlu0 %4843, %v3910
  %v4845 = vpop.permute.xlu0 %4844
  %4848 = vset.pattern.permute.xlu0 0
  %4849 = vperm.xlu0 %4848, %v3911
  %v4850 = vpop.permute.xlu0 %4849
  %4853 = vset.pattern.permute.xlu0 0
  %4854 = vperm.xlu0 %4853, %v3912
  %v4855 = vpop.permute.xlu0 %4854
  %4858 = vset.pattern.permute.xlu0 0
  %4859 = vperm.xlu0 %4858, %v3913
  %v4860 = vpop.permute.xlu0 %4859
  %4863 = vset.pattern.permute.xlu0 0
  %4864 = vperm.xlu0 %4863, %v3914
  %v4865 = vpop.permute.xlu0 %4864
  %4868 = vset.pattern.permute.xlu0 0
  %4869 = vperm.xlu0 %4868, %v3915
  %v4870 = vpop.permute.xlu0 %4869
  %4873 = vset.pattern.permute.xlu0 0
  %4874 = vperm.xlu0 %4873, %v3916
  %v4875 = vpop.permute.xlu0 %4874
  %4878 = vset.pattern.permute.xlu0 0
  %4879 = vperm.xlu0 %4878, %v3917
  %v4880 = vpop.permute.xlu0 %4879
  %4883 = vset.pattern.permute.xlu0 0
  %4884 = vperm.xlu0 %4883, %v3918
  %v4885 = vpop.permute.xlu0 %4884
  %4888 = vset.pattern.permute.xlu0 0
  %4889 = vperm.xlu0 %4888, %v3919
  %v4890 = vpop.permute.xlu0 %4889
  %4893 = vset.pattern.permute.xlu0 0
  %4894 = vperm.xlu0 %4893, %v3920
  %v4895 = vpop.permute.xlu0 %4894
  %4898 = vset.pattern.permute.xlu0 0
  %4899 = vperm.xlu0 %4898, %v3921
  %v4900 = vpop.permute.xlu0 %4899
  %4903 = vset.pattern.permute.xlu0 0
  %4904 = vperm.xlu0 %4903, %v3922
  %v4905 = vpop.permute.xlu0 %4904
  %4908 = vset.pattern.permute.xlu0 0
  %4909 = vperm.xlu0 %4908, %v3923
  %v4910 = vpop.permute.xlu0 %4909
  %4913 = vset.pattern.permute.xlu0 0
  %4914 = vperm.xlu0 %4913, %v3924
  %v4915 = vpop.permute.xlu0 %4914
  %4918 = vset.pattern.permute.xlu0 0
  %4919 = vperm.xlu0 %4918, %v3925
  %v4920 = vpop.permute.xlu0 %4919
  %4923 = vset.pattern.permute.xlu0 0
  %4924 = vperm.xlu0 %4923, %v3926
  %v4925 = vpop.permute.xlu0 %4924
  %4928 = vset.pattern.permute.xlu0 0
  %4929 = vperm.xlu0 %4928, %v3927
  %v4930 = vpop.permute.xlu0 %4929
  %4933 = vset.pattern.permute.xlu0 0
  %4934 = vperm.xlu0 %4933, %v3928
  %v4935 = vpop.permute.xlu0 %4934
  %4938 = vset.pattern.permute.xlu0 0
  %4939 = vperm.xlu0 %4938, %v3929
  %v4940 = vpop.permute.xlu0 %4939
  %4943 = vset.pattern.permute.xlu0 0
  %4944 = vperm.xlu0 %4943, %v3930
  %v4945 = vpop.permute.xlu0 %4944
  %4948 = vset.pattern.permute.xlu0 0
  %4949 = vperm.xlu0 %4948, %v3931
  %v4950 = vpop.permute.xlu0 %4949
  %4953 = vset.pattern.permute.xlu0 0
  %4954 = vperm.xlu0 %4953, %v3932
  %v4955 = vpop.permute.xlu0 %4954
  %4958 = vset.pattern.permute.xlu0 0
  %4959 = vperm.xlu0 %4958, %v3933
  %v4960 = vpop.permute.xlu0 %4959
  %4963 = vset.pattern.permute.xlu0 0
  %4964 = vperm.xlu0 %4963, %v3934
  %v4965 = vpop.permute.xlu0 %4964
  %4968 = vset.pattern.permute.xlu0 0
  %4969 = vperm.xlu0 %4968, %v3935
  %v4970 = vpop.permute.xlu0 %4969
  %4973 = vset.pattern.permute.xlu0 0
  %4974 = vperm.xlu0 %4973, %v3936
  %v4975 = vpop.permute.xlu0 %4974
  %4978 = vset.pattern.permute.xlu0 0
  %4979 = vperm.xlu0 %4978, %v3937
  %v4980 = vpop.permute.xlu0 %4979
  %4983 = vset.pattern.permute.xlu0 0
  %4984 = vperm.xlu0 %4983, %v3938
  %v4985 = vpop.permute.xlu0 %4984
  %4988 = vset.pattern.permute.xlu0 0
  %4989 = vperm.xlu0 %4988, %v3939
  %v4990 = vpop.permute.xlu0 %4989
  %4993 = vset.pattern.permute.xlu0 0
  %4994 = vperm.xlu0 %4993, %v3940
  %v4995 = vpop.permute.xlu0 %4994
  %4998 = vset.pattern.permute.xlu0 0
  %4999 = vperm.xlu0 %4998, %v3941
  %v5000 = vpop.permute.xlu0 %4999
  %5003 = vset.pattern.permute.xlu0 0
  %5004 = vperm.xlu0 %5003, %v3942
  %v5005 = vpop.permute.xlu0 %5004
  %5008 = vset.pattern.permute.xlu0 0
  %5009 = vperm.xlu0 %5008, %v3943
  %v5010 = vpop.permute.xlu0 %5009
  %5013 = vset.pattern.permute.xlu0 0
  %5014 = vperm.xlu0 %5013, %v3944
  %v5015 = vpop.permute.xlu0 %5014
  %5018 = vset.pattern.permute.xlu0 0
  %5019 = vperm.xlu0 %5018, %v3945
  %v5020 = vpop.permute.xlu0 %5019
  %5023 = vset.pattern.permute.xlu0 0
  %5024 = vperm.xlu0 %5023, %v3946
  %v5025 = vpop.permute.xlu0 %5024
  %5028 = vset.pattern.permute.xlu0 0
  %5029 = vperm.xlu0 %5028, %v3947
  %v5030 = vpop.permute.xlu0 %5029
  %5033 = vset.pattern.permute.xlu0 0
  %5034 = vperm.xlu0 %5033, %v3948
  %v5035 = vpop.permute.xlu0 %5034
  %5038 = vset.pattern.permute.xlu0 0
  %5039 = vperm.xlu0 %5038, %v3949
  %v5040 = vpop.permute.xlu0 %5039
  %5043 = vset.pattern.permute.xlu0 0
  %5044 = vperm.xlu0 %5043, %v3950
  %v5045 = vpop.permute.xlu0 %5044
  %5048 = vset.pattern.permute.xlu0 0
  %5049 = vperm.xlu0 %5048, %v3951
  %v5050 = vpop.permute.xlu0 %5049
  %5053 = vset.pattern.permute.xlu0 0
  %5054 = vperm.xlu0 %5053, %v3952
  %v5055 = vpop.permute.xlu0 %5054
  %5058 = vset.pattern.permute.xlu0 0
  %5059 = vperm.xlu0 %5058, %v3953
  %v5060 = vpop.permute.xlu0 %5059
  %5063 = vset.pattern.permute.xlu0 0
  %5064 = vperm.xlu0 %5063, %v3954
  %v5065 = vpop.permute.xlu0 %5064
  %5068 = vset.pattern.permute.xlu0 0
  %5069 = vperm.xlu0 %5068, %v3955
  %v5070 = vpop.permute.xlu0 %5069
  %5073 = vset.pattern.permute.xlu0 0
  %5074 = vperm.xlu0 %5073, %v3956
  %v5075 = vpop.permute.xlu0 %5074
  %5078 = vset.pattern.permute.xlu0 0
  %5079 = vperm.xlu0 %5078, %v3957
  %v5080 = vpop.permute.xlu0 %5079
  %5083 = vset.pattern.permute.xlu0 0
  %5084 = vperm.xlu0 %5083, %v3958
  %v5085 = vpop.permute.xlu0 %5084
  %5088 = vset.pattern.permute.xlu0 0
  %5089 = vperm.xlu0 %5088, %v3959
  %v5090 = vpop.permute.xlu0 %5089
  %5093 = vset.pattern.permute.xlu0 0
  %5094 = vperm.xlu0 %5093, %v3960
  %v5095 = vpop.permute.xlu0 %5094
  %5098 = vset.pattern.permute.xlu0 0
  %5099 = vperm.xlu0 %5098, %v3961
  %v5100 = vpop.permute.xlu0 %5099
  %5103 = vset.pattern.permute.xlu0 0
  %5104 = vperm.xlu0 %5103, %v3962
  %v5105 = vpop.permute.xlu0 %5104
  %5108 = vset.pattern.permute.xlu0 0
  %5109 = vperm.xlu0 %5108, %v3963
  %v5110 = vpop.permute.xlu0 %5109
  %5113 = vset.pattern.permute.xlu0 0
  %5114 = vperm.xlu0 %5113, %v3964
  %v5115 = vpop.permute.xlu0 %5114
  %5118 = vset.pattern.permute.xlu0 0
  %5119 = vperm.xlu0 %5118, %v3965
  %v5120 = vpop.permute.xlu0 %5119
  %5123 = vset.pattern.permute.xlu0 0
  %5124 = vperm.xlu0 %5123, %v3966
  %v5125 = vpop.permute.xlu0 %5124
  %5128 = vset.pattern.permute.xlu0 0
  %5129 = vperm.xlu0 %5128, %v3967
  %v5130 = vpop.permute.xlu0 %5129
  %5133 = vset.pattern.permute.xlu0 0
  %5134 = vperm.xlu0 %5133, %v3968
  %v5135 = vpop.permute.xlu0 %5134
  %5138 = vset.pattern.permute.xlu0 0
  %5139 = vperm.xlu0 %5138, %v3969
  %v5140 = vpop.permute.xlu0 %5139
  %5143 = vset.pattern.permute.xlu0 0
  %5144 = vperm.xlu0 %5143, %v3970
  %v5145 = vpop.permute.xlu0 %5144
  %5148 = vset.pattern.permute.xlu0 0
  %5149 = vperm.xlu0 %5148, %v3971
  %v5150 = vpop.permute.xlu0 %5149
  %5153 = vset.pattern.permute.xlu0 0
  %5154 = vperm.xlu0 %5153, %v3972
  %v5155 = vpop.permute.xlu0 %5154
  %5158 = vset.pattern.permute.xlu0 0
  %5159 = vperm.xlu0 %5158, %v3973
  %v5160 = vpop.permute.xlu0 %5159
  %5163 = vset.pattern.permute.xlu0 0
  %5164 = vperm.xlu0 %5163, %v3974
  %v5165 = vpop.permute.xlu0 %5164
  %5168 = vset.pattern.permute.xlu0 0
  %5169 = vperm.xlu0 %5168, %v3975
  %v5170 = vpop.permute.xlu0 %5169
  %5173 = vset.pattern.permute.xlu0 0
  %5174 = vperm.xlu0 %5173, %v3976
  %v5175 = vpop.permute.xlu0 %5174
  %5178 = vset.pattern.permute.xlu0 0
  %5179 = vperm.xlu0 %5178, %v3977
  %v5180 = vpop.permute.xlu0 %5179
  %5183 = vset.pattern.permute.xlu0 0
  %5184 = vperm.xlu0 %5183, %v3978
  %v5185 = vpop.permute.xlu0 %5184
  %5188 = vset.pattern.permute.xlu0 0
  %5189 = vperm.xlu0 %5188, %v3979
  %v5190 = vpop.permute.xlu0 %5189
  %5193 = vset.pattern.permute.xlu0 0
  %5194 = vperm.xlu0 %5193, %v3980
  %v5195 = vpop.permute.xlu0 %5194
  %5198 = vset.pattern.permute.xlu0 0
  %5199 = vperm.xlu0 %5198, %v3981
  %v5200 = vpop.permute.xlu0 %5199
  %5203 = vset.pattern.permute.xlu0 0
  %5204 = vperm.xlu0 %5203, %v3982
  %v5205 = vpop.permute.xlu0 %5204
  %v5207 = vadd.f32 %v4493, %v4700
  %v5208 = vadd.f32 %v4494, %v4700
  %v5209 = vadd.f32 %v4495, %v4705
  %v5210 = vadd.f32 %v4496, %v4705
  %v5211 = vadd.f32 %v4497, %v4710
  %v5212 = vadd.f32 %v4498, %v4710
  %v5213 = vadd.f32 %v4499, %v4715
  %v5214 = vadd.f32 %v4500, %v4715
  %v5215 = vadd.f32 %v4501, %v4720
  %v5216 = vadd.f32 %v4502, %v4720
  %v5217 = vadd.f32 %v4503, %v4725
  %v5218 = vadd.f32 %v4504, %v4725
  %v5219 = vadd.f32 %v4505, %v4730
  %v5220 = vadd.f32 %v4506, %v4730
  %v5221 = vadd.f32 %v4507, %v4735
  %v5222 = vadd.f32 %v4508, %v4735
  %v5223 = vadd.f32 %v4509, %v4740
  %v5224 = vadd.f32 %v4510, %v4740
  %v5225 = vadd.f32 %v4511, %v4745
  %v5226 = vadd.f32 %v4512, %v4745
  %v5227 = vadd.f32 %v4513, %v4750
  %v5228 = vadd.f32 %v4514, %v4750
  %v5229 = vadd.f32 %v4515, %v4755
  %v5230 = vadd.f32 %v4516, %v4755
  %v5231 = vadd.f32 %v4517, %v4760
  %v5232 = vadd.f32 %v4518, %v4760
  %v5233 = vadd.f32 %v4519, %v4765
  %v5234 = vadd.f32 %v4520, %v4765
  %v5235 = vadd.f32 %v4521, %v4770
  %v5236 = vadd.f32 %v4522, %v4770
  %v5237 = vadd.f32 %v4523, %v4775
  %v5238 = vadd.f32 %v4524, %v4775
  %v5239 = vadd.f32 %v4525, %v4780
  %v5240 = vadd.f32 %v4526, %v4780
  %v5241 = vadd.f32 %v4527, %v4785
  %v5242 = vadd.f32 %v4528, %v4785
  %v5243 = vadd.f32 %v4529, %v4790
  %v5244 = vadd.f32 %v4530, %v4790
  %v5245 = vadd.f32 %v4531, %v4795
  %v5246 = vadd.f32 %v4532, %v4795
  %v5247 = vadd.f32 %v4533, %v4800
  %v5248 = vadd.f32 %v4534, %v4800
  %v5249 = vadd.f32 %v4535, %v4805
  %v5250 = vadd.f32 %v4536, %v4805
  %v5251 = vadd.f32 %v4537, %v4810
  %v5252 = vadd.f32 %v4538, %v4810
  %v5253 = vadd.f32 %v4539, %v4815
  %v5254 = vadd.f32 %v4540, %v4815
  %v5255 = vadd.f32 %v4541, %v4820
  %v5256 = vadd.f32 %v4542, %v4820
  %v5257 = vadd.f32 %v4543, %v4825
  %v5258 = vadd.f32 %v4544, %v4825
  %v5259 = vadd.f32 %v4545, %v4830
  %v5260 = vadd.f32 %v4546, %v4830
  %v5261 = vadd.f32 %v4547, %v4835
  %v5262 = vadd.f32 %v4548, %v4835
  %v5263 = vadd.f32 %v4549, %v4840
  %v5264 = vadd.f32 %v4550, %v4840
  %v5265 = vadd.f32 %v4551, %v4845
  %v5266 = vadd.f32 %v4552, %v4845
  %v5267 = vadd.f32 %v4553, %v4850
  %v5268 = vadd.f32 %v4554, %v4850
  %v5269 = vadd.f32 %v4555, %v4855
  %v5270 = vadd.f32 %v4556, %v4855
  %v5271 = vadd.f32 %v4557, %v4860
  %v5272 = vadd.f32 %v4558, %v4860
  %v5273 = vadd.f32 %v4559, %v4865
  %v5274 = vadd.f32 %v4560, %v4865
  %v5275 = vadd.f32 %v4561, %v4870
  %v5276 = vadd.f32 %v4562, %v4870
  %v5277 = vadd.f32 %v4563, %v4875
  %v5278 = vadd.f32 %v4564, %v4875
  %v5279 = vadd.f32 %v4565, %v4880
  %v5280 = vadd.f32 %v4566, %v4880
  %v5281 = vadd.f32 %v4567, %v4885
  %v5282 = vadd.f32 %v4568, %v4885
  %v5283 = vadd.f32 %v4569, %v4890
  %v5284 = vadd.f32 %v4570, %v4890
  %v5285 = vadd.f32 %v4571, %v4895
  %v5286 = vadd.f32 %v4572, %v4895
  %v5287 = vadd.f32 %v4573, %v4900
  %v5288 = vadd.f32 %v4574, %v4900
  %v5289 = vadd.f32 %v4575, %v4905
  %v5290 = vadd.f32 %v4576, %v4905
  %v5291 = vadd.f32 %v4577, %v4910
  %v5292 = vadd.f32 %v4578, %v4910
  %v5293 = vadd.f32 %v4579, %v4915
  %v5294 = vadd.f32 %v4580, %v4915
  %v5295 = vadd.f32 %v4581, %v4920
  %v5296 = vadd.f32 %v4582, %v4920
  %v5297 = vadd.f32 %v4583, %v4925
  %v5298 = vadd.f32 %v4584, %v4925
  %v5299 = vadd.f32 %v4585, %v4930
  %v5300 = vadd.f32 %v4586, %v4930
  %v5301 = vadd.f32 %v4587, %v4935
  %v5302 = vadd.f32 %v4588, %v4935
  %v5303 = vadd.f32 %v4589, %v4940
  %v5304 = vadd.f32 %v4590, %v4940
  %v5305 = vadd.f32 %v4591, %v4945
  %v5306 = vadd.f32 %v4592, %v4945
  %v5307 = vadd.f32 %v4593, %v4950
  %v5308 = vadd.f32 %v4594, %v4950
  %v5309 = vadd.f32 %v4595, %v4955
  %v5310 = vadd.f32 %v4596, %v4955
  %v5311 = vadd.f32 %v4597, %v4960
  %v5312 = vadd.f32 %v4598, %v4960
  %v5313 = vadd.f32 %v4599, %v4965
  %v5314 = vadd.f32 %v4600, %v4965
  %v5315 = vadd.f32 %v4601, %v4970
  %v5316 = vadd.f32 %v4602, %v4970
  %v5317 = vadd.f32 %v4603, %v4975
  %v5318 = vadd.f32 %v4604, %v4975
  %v5319 = vadd.f32 %v4605, %v4980
  %v5320 = vadd.f32 %v4606, %v4980
  %v5321 = vadd.f32 %v4607, %v4985
  %v5322 = vadd.f32 %v4608, %v4985
  %v5323 = vadd.f32 %v4609, %v4990
  %v5324 = vadd.f32 %v4610, %v4990
  %v5325 = vadd.f32 %v4611, %v4995
  %v5326 = vadd.f32 %v4612, %v4995
  %v5327 = vadd.f32 %v4613, %v5000
  %v5328 = vadd.f32 %v4614, %v5000
  %v5329 = vadd.f32 %v4615, %v5005
  %v5330 = vadd.f32 %v4616, %v5005
  %v5331 = vadd.f32 %v4617, %v5010
  %v5332 = vadd.f32 %v4618, %v5010
  %v5333 = vadd.f32 %v4619, %v5015
  %v5334 = vadd.f32 %v4620, %v5015
  %v5335 = vadd.f32 %v4621, %v5020
  %v5336 = vadd.f32 %v4622, %v5020
  %v5337 = vadd.f32 %v4623, %v5025
  %v5338 = vadd.f32 %v4624, %v5025
  %v5339 = vadd.f32 %v4625, %v5030
  %v5340 = vadd.f32 %v4626, %v5030
  %v5341 = vadd.f32 %v4627, %v5035
  %v5342 = vadd.f32 %v4628, %v5035
  %v5343 = vadd.f32 %v4629, %v5040
  %v5344 = vadd.f32 %v4630, %v5040
  %v5345 = vadd.f32 %v4631, %v5045
  %v5346 = vadd.f32 %v4632, %v5045
  %v5347 = vadd.f32 %v4633, %v5050
  %v5348 = vadd.f32 %v4634, %v5050
  %v5349 = vadd.f32 %v4635, %v5055
  %v5350 = vadd.f32 %v4636, %v5055
  %v5351 = vadd.f32 %v4637, %v5060
  %v5352 = vadd.f32 %v4638, %v5060
  %v5353 = vadd.f32 %v4639, %v5065
  %v5354 = vadd.f32 %v4640, %v5065
  %v5355 = vadd.f32 %v4641, %v5070
  %v5356 = vadd.f32 %v4642, %v5070
  %v5357 = vadd.f32 %v4643, %v5075
  %v5358 = vadd.f32 %v4644, %v5075
  %v5359 = vadd.f32 %v4645, %v5080
  %v5360 = vadd.f32 %v4646, %v5080
  %v5361 = vadd.f32 %v4647, %v5085
  %v5362 = vadd.f32 %v4648, %v5085
  %v5363 = vadd.f32 %v4649, %v5090
  %v5364 = vadd.f32 %v4650, %v5090
  %v5365 = vadd.f32 %v4651, %v5095
  %v5366 = vadd.f32 %v4652, %v5095
  %v5367 = vadd.f32 %v4653, %v5100
  %v5368 = vadd.f32 %v4654, %v5100
  %v5369 = vadd.f32 %v4655, %v5105
  %v5370 = vadd.f32 %v4656, %v5105
  %v5371 = vadd.f32 %v4657, %v5110
  %v5372 = vadd.f32 %v4658, %v5110
  %v5373 = vadd.f32 %v4659, %v5115
  %v5374 = vadd.f32 %v4660, %v5115
  %v5375 = vadd.f32 %v4661, %v5120
  %v5376 = vadd.f32 %v4662, %v5120
  %v5377 = vadd.f32 %v4663, %v5125
  %v5378 = vadd.f32 %v4664, %v5125
  %v5379 = vadd.f32 %v4665, %v5130
  %v5380 = vadd.f32 %v4666, %v5130
  %v5381 = vadd.f32 %v4667, %v5135
  %v5382 = vadd.f32 %v4668, %v5135
  %v5383 = vadd.f32 %v4669, %v5140
  %v5384 = vadd.f32 %v4670, %v5140
  %v5385 = vadd.f32 %v4671, %v5145
  %v5386 = vadd.f32 %v4672, %v5145
  %v5387 = vadd.f32 %v4673, %v5150
  %v5388 = vadd.f32 %v4674, %v5150
  %v5389 = vadd.f32 %v4675, %v5155
  %v5390 = vadd.f32 %v4676, %v5155
  %v5391 = vadd.f32 %v4677, %v5160
  %v5392 = vadd.f32 %v4678, %v5160
  %v5393 = vadd.f32 %v4679, %v5165
  %v5394 = vadd.f32 %v4680, %v5165
  %v5395 = vadd.f32 %v4681, %v5170
  %v5396 = vadd.f32 %v4682, %v5170
  %v5397 = vadd.f32 %v4683, %v5175
  %v5398 = vadd.f32 %v4684, %v5175
  %v5399 = vadd.f32 %v4685, %v5180
  %v5400 = vadd.f32 %v4686, %v5180
  %v5401 = vadd.f32 %v4687, %v5185
  %v5402 = vadd.f32 %v4688, %v5185
  %v5403 = vadd.f32 %v4689, %v5190
  %v5404 = vadd.f32 %v4690, %v5190
  %v5405 = vadd.f32 %v4691, %v5195
  %v5406 = vadd.f32 %v4692, %v5195
  %v5407 = vadd.f32 %v4693, %v5200
  %v5408 = vadd.f32 %v4694, %v5200
  %v5409 = vadd.f32 %v4695, %v5205
  %v5410 = vadd.f32 %v4696, %v5205
  %5411 = vst [vmem:[%s6] sm:$0xff] %v5207
  %5412 = vst.msk [vmem:[%s6 + $0x8] sm:$0xff] %vm57, %v5208
  %5413 = vst [vmem:[%s6 + $0x10] sm:$0xff] %v5209
  %5414 = vst.msk [vmem:[%s6 + $0x18] sm:$0xff] %vm57, %v5210
  %5415 = vst [vmem:[%s6 + $0x20] sm:$0xff] %v5211
  %5416 = vst.msk [vmem:[%s6 + $0x28] sm:$0xff] %vm57, %v5212
  %5417 = vst [vmem:[%s6 + $0x30] sm:$0xff] %v5213
  %5418 = vst.msk [vmem:[%s6 + $0x38] sm:$0xff] %vm57, %v5214
  %5419 = vst [vmem:[%s6 + $0x40] sm:$0xff] %v5215
  %5420 = vst.msk [vmem:[%s6 + $0x48] sm:$0xff] %vm57, %v5216
  %5421 = vst [vmem:[%s6 + $0x50] sm:$0xff] %v5217
  %5422 = vst.msk [vmem:[%s6 + $0x58] sm:$0xff] %vm57, %v5218
  %5423 = vst [vmem:[%s6 + $0x60] sm:$0xff] %v5219
  %5424 = vst.msk [vmem:[%s6 + $0x68] sm:$0xff] %vm57, %v5220
  %5425 = vst [vmem:[%s6 + $0x70] sm:$0xff] %v5221
  %5426 = vst.msk [vmem:[%s6 + $0x78] sm:$0xff] %vm57, %v5222
  %5427 = vst [vmem:[%s6 + $0x80] sm:$0xff] %v5223
  %5428 = vst.msk [vmem:[%s6 + $0x88] sm:$0xff] %vm57, %v5224
  %5429 = vst [vmem:[%s6 + $0x90] sm:$0xff] %v5225
  %5430 = vst.msk [vmem:[%s6 + $0x98] sm:$0xff] %vm57, %v5226
  %5431 = vst [vmem:[%s6 + $0xa0] sm:$0xff] %v5227
  %5432 = vst.msk [vmem:[%s6 + $0xa8] sm:$0xff] %vm57, %v5228
  %5433 = vst [vmem:[%s6 + $0xb0] sm:$0xff] %v5229
  %5434 = vst.msk [vmem:[%s6 + $0xb8] sm:$0xff] %vm57, %v5230
  %5435 = vst [vmem:[%s6 + $0xc0] sm:$0xff] %v5231
  %5436 = vst.msk [vmem:[%s6 + $0xc8] sm:$0xff] %vm57, %v5232
  %5437 = vst [vmem:[%s6 + $0xd0] sm:$0xff] %v5233
  %5438 = vst.msk [vmem:[%s6 + $0xd8] sm:$0xff] %vm57, %v5234
  %5439 = vst [vmem:[%s6 + $0xe0] sm:$0xff] %v5235
  %5440 = vst.msk [vmem:[%s6 + $0xe8] sm:$0xff] %vm57, %v5236
  %5441 = vst [vmem:[%s6 + $0xf0] sm:$0xff] %v5237
  %5442 = vst.msk [vmem:[%s6 + $0xf8] sm:$0xff] %vm57, %v5238
  %5443 = vst [vmem:[%s6 + $0x100] sm:$0xff] %v5239
  %5444 = vst.msk [vmem:[%s6 + $0x108] sm:$0xff] %vm57, %v5240
  %5445 = vst [vmem:[%s6 + $0x110] sm:$0xff] %v5241
  %5446 = vst.msk [vmem:[%s6 + $0x118] sm:$0xff] %vm57, %v5242
  %5447 = vst [vmem:[%s6 + $0x120] sm:$0xff] %v5243
  %5448 = vst.msk [vmem:[%s6 + $0x128] sm:$0xff] %vm57, %v5244
  %5449 = vst [vmem:[%s6 + $0x130] sm:$0xff] %v5245
  %5450 = vst.msk [vmem:[%s6 + $0x138] sm:$0xff] %vm57, %v5246
  %5451 = vst [vmem:[%s6 + $0x140] sm:$0xff] %v5247
  %5452 = vst.msk [vmem:[%s6 + $0x148] sm:$0xff] %vm57, %v5248
  %5453 = vst [vmem:[%s6 + $0x150] sm:$0xff] %v5249
  %5454 = vst.msk [vmem:[%s6 + $0x158] sm:$0xff] %vm57, %v5250
  %5455 = vst [vmem:[%s6 + $0x160] sm:$0xff] %v5251
  %5456 = vst.msk [vmem:[%s6 + $0x168] sm:$0xff] %vm57, %v5252
  %5457 = vst [vmem:[%s6 + $0x170] sm:$0xff] %v5253
  %5458 = vst.msk [vmem:[%s6 + $0x178] sm:$0xff] %vm57, %v5254
  %5459 = vst [vmem:[%s6 + $0x180] sm:$0xff] %v5255
  %5460 = vst.msk [vmem:[%s6 + $0x188] sm:$0xff] %vm57, %v5256
  %5461 = vst [vmem:[%s6 + $0x190] sm:$0xff] %v5257
  %5462 = vst.msk [vmem:[%s6 + $0x198] sm:$0xff] %vm57, %v5258
  %5463 = vst [vmem:[%s6 + $0x1a0] sm:$0xff] %v5259
  %5464 = vst.msk [vmem:[%s6 + $0x1a8] sm:$0xff] %vm57, %v5260
  %5465 = vst [vmem:[%s6 + $0x1b0] sm:$0xff] %v5261
  %5466 = vst.msk [vmem:[%s6 + $0x1b8] sm:$0xff] %vm57, %v5262
  %5467 = vst [vmem:[%s6 + $0x1c0] sm:$0xff] %v5263
  %5468 = vst.msk [vmem:[%s6 + $0x1c8] sm:$0xff] %vm57, %v5264
  %5469 = vst [vmem:[%s6 + $0x1d0] sm:$0xff] %v5265
  %5470 = vst.msk [vmem:[%s6 + $0x1d8] sm:$0xff] %vm57, %v5266
  %5471 = vst [vmem:[%s6 + $0x1e0] sm:$0xff] %v5267
  %5472 = vst.msk [vmem:[%s6 + $0x1e8] sm:$0xff] %vm57, %v5268
  %5473 = vst [vmem:[%s6 + $0x1f0] sm:$0xff] %v5269
  %5474 = vst.msk [vmem:[%s6 + $0x1f8] sm:$0xff] %vm57, %v5270
  %5475 = vst [vmem:[%s6 + $0x200] sm:$0xff] %v5271
  %5476 = vst.msk [vmem:[%s6 + $0x208] sm:$0xff] %vm57, %v5272
  %5477 = vst [vmem:[%s6 + $0x210] sm:$0xff] %v5273
  %5478 = vst.msk [vmem:[%s6 + $0x218] sm:$0xff] %vm57, %v5274
  %5479 = vst [vmem:[%s6 + $0x220] sm:$0xff] %v5275
  %5480 = vst.msk [vmem:[%s6 + $0x228] sm:$0xff] %vm57, %v5276
  %5481 = vst [vmem:[%s6 + $0x230] sm:$0xff] %v5277
  %5482 = vst.msk [vmem:[%s6 + $0x238] sm:$0xff] %vm57, %v5278
  %5483 = vst [vmem:[%s6 + $0x240] sm:$0xff] %v5279
  %5484 = vst.msk [vmem:[%s6 + $0x248] sm:$0xff] %vm57, %v5280
  %5485 = vst [vmem:[%s6 + $0x250] sm:$0xff] %v5281
  %5486 = vst.msk [vmem:[%s6 + $0x258] sm:$0xff] %vm57, %v5282
  %5487 = vst [vmem:[%s6 + $0x260] sm:$0xff] %v5283
  %5488 = vst.msk [vmem:[%s6 + $0x268] sm:$0xff] %vm57, %v5284
  %5489 = vst [vmem:[%s6 + $0x270] sm:$0xff] %v5285
  %5490 = vst.msk [vmem:[%s6 + $0x278] sm:$0xff] %vm57, %v5286
  %5491 = vst [vmem:[%s6 + $0x280] sm:$0xff] %v5287
  %5492 = vst.msk [vmem:[%s6 + $0x288] sm:$0xff] %vm57, %v5288
  %5493 = vst [vmem:[%s6 + $0x290] sm:$0xff] %v5289
  %5494 = vst.msk [vmem:[%s6 + $0x298] sm:$0xff] %vm57, %v5290
  %5495 = vst [vmem:[%s6 + $0x2a0] sm:$0xff] %v5291
  %5496 = vst.msk [vmem:[%s6 + $0x2a8] sm:$0xff] %vm57, %v5292
  %5497 = vst [vmem:[%s6 + $0x2b0] sm:$0xff] %v5293
  %5498 = vst.msk [vmem:[%s6 + $0x2b8] sm:$0xff] %vm57, %v5294
  %5499 = vst [vmem:[%s6 + $0x2c0] sm:$0xff] %v5295
  %5500 = vst.msk [vmem:[%s6 + $0x2c8] sm:$0xff] %vm57, %v5296
  %5501 = vst [vmem:[%s6 + $0x2d0] sm:$0xff] %v5297
  %5502 = vst.msk [vmem:[%s6 + $0x2d8] sm:$0xff] %vm57, %v5298
  %5503 = vst [vmem:[%s6 + $0x2e0] sm:$0xff] %v5299
  %5504 = vst.msk [vmem:[%s6 + $0x2e8] sm:$0xff] %vm57, %v5300
  %5505 = vst [vmem:[%s6 + $0x2f0] sm:$0xff] %v5301
  %5506 = vst.msk [vmem:[%s6 + $0x2f8] sm:$0xff] %vm57, %v5302
  %5507 = vst [vmem:[%s6 + $0x300] sm:$0xff] %v5303
  %5508 = vst.msk [vmem:[%s6 + $0x308] sm:$0xff] %vm57, %v5304
  %5509 = vst [vmem:[%s6 + $0x310] sm:$0xff] %v5305
  %5510 = vst.msk [vmem:[%s6 + $0x318] sm:$0xff] %vm57, %v5306
  %5511 = vst [vmem:[%s6 + $0x320] sm:$0xff] %v5307
  %5512 = vst.msk [vmem:[%s6 + $0x328] sm:$0xff] %vm57, %v5308
  %5513 = vst [vmem:[%s6 + $0x330] sm:$0xff] %v5309
  %5514 = vst.msk [vmem:[%s6 + $0x338] sm:$0xff] %vm57, %v5310
  %5515 = vst [vmem:[%s6 + $0x340] sm:$0xff] %v5311
  %5516 = vst.msk [vmem:[%s6 + $0x348] sm:$0xff] %vm57, %v5312
  %5517 = vst [vmem:[%s6 + $0x350] sm:$0xff] %v5313
  %5518 = vst.msk [vmem:[%s6 + $0x358] sm:$0xff] %vm57, %v5314
  %5519 = vst [vmem:[%s6 + $0x360] sm:$0xff] %v5315
  %5520 = vst.msk [vmem:[%s6 + $0x368] sm:$0xff] %vm57, %v5316
  %5521 = vst [vmem:[%s6 + $0x370] sm:$0xff] %v5317
  %5522 = vst.msk [vmem:[%s6 + $0x378] sm:$0xff] %vm57, %v5318
  %5523 = vst [vmem:[%s6 + $0x380] sm:$0xff] %v5319
  %5524 = vst.msk [vmem:[%s6 + $0x388] sm:$0xff] %vm57, %v5320
  %5525 = vst [vmem:[%s6 + $0x390] sm:$0xff] %v5321
  %5526 = vst.msk [vmem:[%s6 + $0x398] sm:$0xff] %vm57, %v5322
  %5527 = vst [vmem:[%s6 + $0x3a0] sm:$0xff] %v5323
  %5528 = vst.msk [vmem:[%s6 + $0x3a8] sm:$0xff] %vm57, %v5324
  %5529 = vst [vmem:[%s6 + $0x3b0] sm:$0xff] %v5325
  %5530 = vst.msk [vmem:[%s6 + $0x3b8] sm:$0xff] %vm57, %v5326
  %5531 = vst [vmem:[%s6 + $0x3c0] sm:$0xff] %v5327
  %5532 = vst.msk [vmem:[%s6 + $0x3c8] sm:$0xff] %vm57, %v5328
  %5533 = vst [vmem:[%s6 + $0x3d0] sm:$0xff] %v5329
  %5534 = vst.msk [vmem:[%s6 + $0x3d8] sm:$0xff] %vm57, %v5330
  %5535 = vst [vmem:[%s6 + $0x3e0] sm:$0xff] %v5331
  %5536 = vst.msk [vmem:[%s6 + $0x3e8] sm:$0xff] %vm57, %v5332
  %5537 = vst [vmem:[%s6 + $0x3f0] sm:$0xff] %v5333
  %5538 = vst.msk [vmem:[%s6 + $0x3f8] sm:$0xff] %vm57, %v5334
  %5539 = vst [vmem:[%s6 + $0x400] sm:$0xff] %v5335
  %5540 = vst.msk [vmem:[%s6 + $0x408] sm:$0xff] %vm57, %v5336
  %5541 = vst [vmem:[%s6 + $0x410] sm:$0xff] %v5337
  %5542 = vst.msk [vmem:[%s6 + $0x418] sm:$0xff] %vm57, %v5338
  %5543 = vst [vmem:[%s6 + $0x420] sm:$0xff] %v5339
  %5544 = vst.msk [vmem:[%s6 + $0x428] sm:$0xff] %vm57, %v5340
  %5545 = vst [vmem:[%s6 + $0x430] sm:$0xff] %v5341
  %5546 = vst.msk [vmem:[%s6 + $0x438] sm:$0xff] %vm57, %v5342
  %5547 = vst [vmem:[%s6 + $0x440] sm:$0xff] %v5343
  %5548 = vst.msk [vmem:[%s6 + $0x448] sm:$0xff] %vm57, %v5344
  %5549 = vst [vmem:[%s6 + $0x450] sm:$0xff] %v5345
  %5550 = vst.msk [vmem:[%s6 + $0x458] sm:$0xff] %vm57, %v5346
  %5551 = vst [vmem:[%s6 + $0x460] sm:$0xff] %v5347
  %5552 = vst.msk [vmem:[%s6 + $0x468] sm:$0xff] %vm57, %v5348
  %5553 = vst [vmem:[%s6 + $0x470] sm:$0xff] %v5349
  %5554 = vst.msk [vmem:[%s6 + $0x478] sm:$0xff] %vm57, %v5350
  %5555 = vst [vmem:[%s6 + $0x480] sm:$0xff] %v5351
  %5556 = vst.msk [vmem:[%s6 + $0x488] sm:$0xff] %vm57, %v5352
  %5557 = vst [vmem:[%s6 + $0x490] sm:$0xff] %v5353
  %5558 = vst.msk [vmem:[%s6 + $0x498] sm:$0xff] %vm57, %v5354
  %5559 = vst [vmem:[%s6 + $0x4a0] sm:$0xff] %v5355
  %5560 = vst.msk [vmem:[%s6 + $0x4a8] sm:$0xff] %vm57, %v5356
  %5561 = vst [vmem:[%s6 + $0x4b0] sm:$0xff] %v5357
  %5562 = vst.msk [vmem:[%s6 + $0x4b8] sm:$0xff] %vm57, %v5358
  %5563 = vst [vmem:[%s6 + $0x4c0] sm:$0xff] %v5359
  %5564 = vst.msk [vmem:[%s6 + $0x4c8] sm:$0xff] %vm57, %v5360
  %5565 = vst [vmem:[%s6 + $0x4d0] sm:$0xff] %v5361
  %5566 = vst.msk [vmem:[%s6 + $0x4d8] sm:$0xff] %vm57, %v5362
  %5567 = vst [vmem:[%s6 + $0x4e0] sm:$0xff] %v5363
  %5568 = vst.msk [vmem:[%s6 + $0x4e8] sm:$0xff] %vm57, %v5364
  %5569 = vst [vmem:[%s6 + $0x4f0] sm:$0xff] %v5365
  %5570 = vst.msk [vmem:[%s6 + $0x4f8] sm:$0xff] %vm57, %v5366
  %5571 = vst [vmem:[%s6 + $0x500] sm:$0xff] %v5367
  %5572 = vst.msk [vmem:[%s6 + $0x508] sm:$0xff] %vm57, %v5368
  %5573 = vst [vmem:[%s6 + $0x510] sm:$0xff] %v5369
  %5574 = vst.msk [vmem:[%s6 + $0x518] sm:$0xff] %vm57, %v5370
  %5575 = vst [vmem:[%s6 + $0x520] sm:$0xff] %v5371
  %5576 = vst.msk [vmem:[%s6 + $0x528] sm:$0xff] %vm57, %v5372
  %5577 = vst [vmem:[%s6 + $0x530] sm:$0xff] %v5373
  %5578 = vst.msk [vmem:[%s6 + $0x538] sm:$0xff] %vm57, %v5374
  %5579 = vst [vmem:[%s6 + $0x540] sm:$0xff] %v5375
  %5580 = vst.msk [vmem:[%s6 + $0x548] sm:$0xff] %vm57, %v5376
  %5581 = vst [vmem:[%s6 + $0x550] sm:$0xff] %v5377
  %5582 = vst.msk [vmem:[%s6 + $0x558] sm:$0xff] %vm57, %v5378
  %5583 = vst [vmem:[%s6 + $0x560] sm:$0xff] %v5379
  %5584 = vst.msk [vmem:[%s6 + $0x568] sm:$0xff] %vm57, %v5380
  %5585 = vst [vmem:[%s6 + $0x570] sm:$0xff] %v5381
  %5586 = vst.msk [vmem:[%s6 + $0x578] sm:$0xff] %vm57, %v5382
  %5587 = vst [vmem:[%s6 + $0x580] sm:$0xff] %v5383
  %5588 = vst.msk [vmem:[%s6 + $0x588] sm:$0xff] %vm57, %v5384
  %5589 = vst [vmem:[%s6 + $0x590] sm:$0xff] %v5385
  %5590 = vst.msk [vmem:[%s6 + $0x598] sm:$0xff] %vm57, %v5386
  %5591 = vst [vmem:[%s6 + $0x5a0] sm:$0xff] %v5387
  %5592 = vst.msk [vmem:[%s6 + $0x5a8] sm:$0xff] %vm57, %v5388
  %5593 = vst [vmem:[%s6 + $0x5b0] sm:$0xff] %v5389
  %5594 = vst.msk [vmem:[%s6 + $0x5b8] sm:$0xff] %vm57, %v5390
  %5595 = vst [vmem:[%s6 + $0x5c0] sm:$0xff] %v5391
  %5596 = vst.msk [vmem:[%s6 + $0x5c8] sm:$0xff] %vm57, %v5392
  %5597 = vst [vmem:[%s6 + $0x5d0] sm:$0xff] %v5393
  %5598 = vst.msk [vmem:[%s6 + $0x5d8] sm:$0xff] %vm57, %v5394
  %5599 = vst [vmem:[%s6 + $0x5e0] sm:$0xff] %v5395
  %5600 = vst.msk [vmem:[%s6 + $0x5e8] sm:$0xff] %vm57, %v5396
  %5601 = vst [vmem:[%s6 + $0x5f0] sm:$0xff] %v5397
  %5602 = vst.msk [vmem:[%s6 + $0x5f8] sm:$0xff] %vm57, %v5398
  %5603 = vst [vmem:[%s6 + $0x600] sm:$0xff] %v5399
  %5604 = vst.msk [vmem:[%s6 + $0x608] sm:$0xff] %vm57, %v5400
  %5605 = vst [vmem:[%s6 + $0x610] sm:$0xff] %v5401
  %5606 = vst.msk [vmem:[%s6 + $0x618] sm:$0xff] %vm57, %v5402
  %5607 = vst [vmem:[%s6 + $0x620] sm:$0xff] %v5403
  %5608 = vst.msk [vmem:[%s6 + $0x628] sm:$0xff] %vm57, %v5404
  %5609 = vst [vmem:[%s6 + $0x630] sm:$0xff] %v5405
  %5610 = vst.msk [vmem:[%s6 + $0x638] sm:$0xff] %vm57, %v5406
  %5611 = vst [vmem:[%s6 + $0x640] sm:$0xff] %v5407
  %5612 = vst.msk [vmem:[%s6 + $0x648] sm:$0xff] %vm57, %v5408
  %5613 = vst [vmem:[%s6 + $0x650] sm:$0xff] %v5409
  %5614 = vst.msk [vmem:[%s6 + $0x658] sm:$0xff] %vm57, %v5410
  // Predicated region
  $region26: #{tpu_custom_call.1} parent=0 // pred_check
    _
  $region27: #{tpu_custom_call.1} parent=0 // pred_check_branch
    %5616 = sbr.rel (0) target = $region29
  $region28: #{tpu_custom_call.1} parent=0 // pred_region
    _
  $region29: #{tpu_custom_call.1} parent=0 // pred_fallthru
    _
  // Predicated region
  $region30: #{tpu_custom_call.1} parent=0 // pred_check
    _
  $region31: #{tpu_custom_call.1} parent=0 // pred_check_branch
    %5618 = sbr.rel (0) target = $region33
  $region32: #{tpu_custom_call.1} parent=0 // pred_region
    _
  $region33: #{tpu_custom_call.1} parent=0 // pred_fallthru
    _

</llo_original>
